<compile_context>
chip_gen: v6e
topology: v6e:2x2x1
jax: 0.10.0
libtpu: 0.0.40
codegen_flags: <defaults>
</compile_context>

<pallas_src>
import functools

import jax
import jax.numpy as jnp
from jax.experimental import pallas as pl
from jax.experimental.pallas import tpu as pltpu


# ----------------------------------------------------------------------------
# Pallas kernel: one grid step = one batch element; stride-1 "same" conv with
# BN scale folded into the weights; bias / residual / ReLU fused in epilogue.
#   x_ref : (H, W, Cin)        un-padded NHWC activation block (bf16)
#   w_ref : (K, K*Cin, Cout)   block-diagonal, kw-concatenated weights (bf16)
#   b_ref : (1, Cout)          folded BN bias (f32)
#   r_ref : (H*W, Cout)        optional residual (bf16)
#   o_ref : (H*W, Cout)        flat-NHWC, lane-dense output
#   xpad  : (H+2p, W+2p, Cin)  VMEM halo scratch (only when K > 1)
# ----------------------------------------------------------------------------
def _conv_bn_kernel(x_ref, w_ref, b_ref, *rest, k, pad, relu, has_residual):
    rest = list(rest)
    xpad_ref = rest.pop() if k > 1 else None
    o_ref = rest.pop()
    r_ref = rest.pop() if has_residual else None

    h, w, cin = x_ref.shape
    m, cout = o_ref.shape

    if k == 1:
        acc = jnp.dot(x_ref[...].reshape(m, cin), w_ref[0],
                      preferred_element_type=jnp.float32)
    else:
        # In-kernel halo: zero the padded scratch, copy the block interior.
        # (Re-zeroed every step -> megacore-safe; a tiny VMEM fill.)
        xpad_ref[...] = jnp.zeros_like(xpad_ref)
        xpad_ref[pad:pad + h, pad:pad + w, :] = x_ref[...]
        xp = xpad_ref[...]
        # Stage the K kw-shifted copies once, concatenate along the contraction
        # (lane) axis: K accumulating dots instead of K*K, and the remaining
        # kh tap slices are free outer-(H)-axis slices.
        xc = jnp.concatenate([xp[:, kw:kw + w, :] for kw in range(k)], axis=-1)
        kc = k * cin
        acc = jnp.dot(xc[0:h].reshape(m, kc), w_ref[0],
                      preferred_element_type=jnp.float32)
        for kh in range(1, k):        # static unroll; dots back-to-back (MRB)
            acc = acc + jnp.dot(xc[kh:kh + h].reshape(m, kc), w_ref[kh],
                                preferred_element_type=jnp.float32)

    out = acc + b_ref[...]                       # folded BN bias
    if has_residual:
        out = out + r_ref[...].astype(jnp.float32)
    if relu:
        out = jnp.maximum(out, 0.0)
    o_ref[...] = out.astype(o_ref.dtype)


# ----------------------------------------------------------------------------
# One fused stride-1 packed conv + folded BN (+ residual) (+ ReLU) pallas_call.
# ----------------------------------------------------------------------------
def _conv_bn(x_nhwc, w_cat, bias, *, relu, residual=None,
             out_dtype=jnp.bfloat16):
    """x_nhwc: (N,H,W,Cin) bf16 (Cin lane-padded). w_cat: (K, K*Cin, Cout) bf16.
    bias: (1,Cout) f32. residual (optional): (N, H*W, Cout) bf16.
    Returns flat-NHWC (N, H*W, Cout)."""
    n, h, w, cin = x_nhwc.shape
    k = w_cat.shape[0]
    cout = w_cat.shape[2]
    assert w_cat.shape[1] == k * cin
    pad = (k - 1) // 2
    m = h * w

    has_residual = residual is not None
    inputs = [x_nhwc, w_cat, bias]
    in_specs = [
        pl.BlockSpec((None, h, w, cin), lambda b: (b, 0, 0, 0)),
        pl.BlockSpec((k, k * cin, cout), lambda b: (0, 0, 0)),
        pl.BlockSpec((1, cout), lambda b: (0, 0)),
    ]
    if has_residual:
        inputs.append(residual)
        in_specs.append(pl.BlockSpec((None, m, cout), lambda b: (b, 0, 0)))

    scratch_shapes = []
    if k > 1:
        scratch_shapes.append(
            pltpu.VMEM((h + 2 * pad, w + 2 * pad, cin), jnp.bfloat16))

    # Footprint-derived VMEM limit (double-buffered blocks + scratch + temps).
    hp, wp = h + 2 * pad, w + 2 * pad
    fp = 2 * (h * w * cin * 2 + k * k * cin * cout * 2 + cout * 4
              + (m * cout * 2 if has_residual else 0)
              + m * cout * jnp.dtype(out_dtype).itemsize)
    fp += hp * wp * cin * 2                                       # halo scratch
    fp += hp * w * k * cin * 2 + m * k * cin * 2 + m * cout * 4   # temps + acc
    vmem_limit = int(min(64 * 1024 * 1024, max(32 * 1024 * 1024, 2 * fp)))

    kernel = functools.partial(_conv_bn_kernel, k=k, pad=pad, relu=relu,
                               has_residual=has_residual)
    return pl.pallas_call(
        kernel,
        out_shape=jax.ShapeDtypeStruct((n, m, cout), out_dtype),
        grid_spec=pltpu.PrefetchScalarGridSpec(
            num_scalar_prefetch=0,
            grid=(n,),
            in_specs=in_specs,
            out_specs=pl.BlockSpec((None, m, cout), lambda b: (b, 0, 0)),
            scratch_shapes=tuple(scratch_shapes),
        ),
        compiler_params=pltpu.CompilerParams(
            dimension_semantics=("parallel",),
            vmem_limit_bytes=vmem_limit),
    )(*inputs)


# ----------------------------------------------------------------------------
# One-time (model load) parameter preparation -- OUTSIDE the jitted forward.
# ----------------------------------------------------------------------------
def _round_up(x, mult):
    return ((x + mult - 1) // mult) * mult


def _fold_bn(bn, eps):
    gamma, beta, mean, var = bn
    scale = gamma / jnp.sqrt(var + eps)
    return scale, beta - mean * scale


def _prepare_conv(weight, bn, groups, cin_pad, cout_pad, eps=1e-5):
    """PyTorch grouped OIHW weight + BN params -> prepared kernel operands.
      w_cat : (K, K*cin_pad, cout_pad) bf16, block-diagonal over groups with
              the folded BN scale, kw-concatenated along the contraction dim.
      bias  : (1, cout_pad) f32 folded BN bias (zero on padded channels)."""
    cout, cin_g, k, _ = weight.shape
    g = groups
    cout_g = cout // g
    scale, bias = _fold_bn(bn, eps)
    wf = weight.astype(jnp.float32) * scale[:, None, None, None]
    wf = wf.reshape(g, cout_g, cin_g, k, k)
    wf = jnp.transpose(wf, (3, 4, 0, 2, 1))          # (k, k, g, cin_g, cout_g)
    full = jnp.zeros((k, k, cin_pad, cout_pad), jnp.float32)
    for gi in range(g):                               # groups are small
        full = full.at[:, :, gi * cin_g:(gi + 1) * cin_g,
                       gi * cout_g:(gi + 1) * cout_g].set(wf[:, :, gi])
    w_cat = full.reshape(k, k * cin_pad, cout_pad).astype(jnp.bfloat16)
    b = jnp.zeros((1, cout_pad), jnp.float32).at[0, :cout].set(bias)
    return w_cat, b


def prepare_block_params(raw, *, groups_conv1, groups_conv2, lane=128,
                         eps=1e-5):
    cin_ext = raw["conv1_w"].shape[1] * groups_conv1
    cout_ext = raw["conv1_w"].shape[0]
    cin_pad = _round_up(cin_ext, lane)
    cout_pad = _round_up(cout_ext, lane)
    p = {}
    p["conv1_w"], p["conv1_b"] = _prepare_conv(
        raw["conv1_w"], raw["bn1"], groups_conv1, cin_pad, cout_pad, eps)
    p["conv2_w"], p["conv2_b"] = _prepare_conv(
        raw["conv2_w"], raw["bn2"], groups_conv2, cout_pad, cout_pad, eps)
    if "conv_s_w" in raw:
        p["convs_w"], p["convs_b"] = _prepare_conv(
            raw["conv_s_w"], raw["bn_s"], groups_conv2, cin_pad, cout_pad, eps)
    return p


# ----------------------------------------------------------------------------
# _BasicBlock forward (inference semantics).
# ----------------------------------------------------------------------------
@functools.partial(jax.jit, static_argnames=("stride", "out_channels"))
def packed_basic_block_forward(x_nchw, params, *, stride, out_channels):
    n, cin_ext, h, w = x_nchw.shape
    k1, kc1, cout_pad = params["conv1_w"].shape
    cin_pad = kc1 // k1

    # Block boundary: NCHW -> NHWC, bf16, lane-pad channels to a x128 multiple.
    x = jnp.transpose(x_nchw, (0, 2, 3, 1)).astype(jnp.bfloat16)
    if cin_pad > cin_ext:
        x = jnp.pad(x, ((0, 0), (0, 0), (0, 0), (0, cin_pad - cin_ext)))

    h1 = (h - 1) // stride + 1
    w1 = (w - 1) // stride + 1

    # conv1 + bn1 + relu   (Dropout2d with p=0 / eval -> identity)
    out1 = _conv_bn(x, params["conv1_w"], params["conv1_b"], relu=True)
    out1 = out1.reshape(n, h, w, cout_pad)
    if stride > 1:
        # stride-s conv (k=3,p=1) == stride-1 conv subsampled at [::s, ::s].
        # TODO(synk): a space-to-depth phase split would avoid the wasted taps.
        out1 = out1[:, ::stride, ::stride, :]

    # shortcut: identity or 1x1 packed conv + bn (expansion == 1)
    if "convs_w" in params:
        xs = x if stride == 1 else x[:, ::stride, ::stride, :]
        sc = _conv_bn(xs, params["convs_w"], params["convs_b"], relu=False)
    else:
        sc = x.reshape(n, h1 * w1, cout_pad)

    # conv2 + bn2 + residual + relu fused into one kernel epilogue (bf16 out).
    out = _conv_bn(out1, params["conv2_w"], params["conv2_b"], relu=True,
                   residual=sc, out_dtype=jnp.bfloat16)
    out = out.reshape(n, h1, w1, cout_pad)[..., :out_channels]
    return jnp.transpose(out, (0, 3, 1, 2)).astype(jnp.float32)


# ----------------------------------------------------------------------------
# References.
#  * matched_ref_block: same prepared bf16 weights / quantization points as the
#    kernels -> validates kernel structure tightly.
#  * ref_basic_block: true f32 module semantics (lax grouped conv + BN).
# ----------------------------------------------------------------------------
def matched_ref_block(x_nchw, params, *, stride, out_channels):
    n, cin_ext, h, w = x_nchw.shape
    k1, kc1, cout_pad = params["conv1_w"].shape
    cin_pad = kc1 // k1
    x = jnp.transpose(x_nchw, (0, 2, 3, 1)).astype(jnp.bfloat16)
    x = jnp.pad(x, ((0, 0), (0, 0), (0, 0), (0, cin_pad - cin_ext)))

    def conv(xa, w_cat, bias, relu, res=None):
        k = w_cat.shape[0]
        cin = w_cat.shape[1] // k
        cout = w_cat.shape[2]
        p = (k - 1) // 2
        w_hwio = w_cat.astype(jnp.float32).reshape(k, k, cin, cout)
        y = jax.lax.conv_general_dilated(
            xa.astype(jnp.float32), w_hwio, (1, 1), [(p, p), (p, p)],
            dimension_numbers=("NHWC", "HWIO", "NHWC"))
        y = y + bias[0]
        if res is not None:
            y = y + res.astype(jnp.float32)
        return jnp.maximum(y, 0.0) if relu else y

    out1 = conv(x, params["conv1_w"], params["conv1_b"],
                True).astype(jnp.bfloat16)
    if stride > 1:
        out1 = out1[:, ::stride, ::stride, :]
    if "convs_w" in params:
        xs = x if stride == 1 else x[:, ::stride, ::stride, :]
        sc = conv(xs, params["convs_w"], params["convs_b"],
                  False).astype(jnp.bfloat16)
    else:
        sc = x
    out = conv(out1, params["conv2_w"], params["conv2_b"], True, res=sc)
    out = out.astype(jnp.bfloat16)[..., :out_channels]
    return jnp.transpose(out, (0, 3, 1, 2)).astype(jnp.float32)


def ref_basic_block(x_nchw, raw, *, stride, has_projection, groups_conv1,
                    groups_conv2, eps=1e-5):
    x = jnp.transpose(x_nchw, (0, 2, 3, 1))

    def conv(xa, wt, s, p, g):
        w_hwio = jnp.transpose(wt, (2, 3, 1, 0))              # OIHW -> HWIO
        return jax.lax.conv_general_dilated(
            xa, w_hwio, (s, s), [(p, p), (p, p)],
            dimension_numbers=("NHWC", "HWIO", "NHWC"), feature_group_count=g)

    def bn(y, b):
        gamma, beta, mean, var = b
        return (y - mean) / jnp.sqrt(var + eps) * gamma + beta

    out = jax.nn.relu(bn(conv(x, raw["conv1_w"], stride, 1, groups_conv1),
                         raw["bn1"]))
    out = bn(conv(out, raw["conv2_w"], 1, 1, groups_conv2), raw["bn2"])
    if has_projection:
        sc = bn(conv(x, raw["conv_s_w"], stride, 0, groups_conv2), raw["bn_s"])
    else:
        sc = x
    return jnp.transpose(jax.nn.relu(out + sc), (0, 3, 1, 2))


# ----------------------------------------------------------------------------
if __name__ == "__main__":
    def run_case(seed, in_planes, planes, stride, batch=2, hw=16,
                 alpha=2, num_estimators=2, gamma=1, groups=1):
        cin_ext = in_planes * alpha
        cout_ext = planes * alpha
        g1 = groups * num_estimators            # conv1 PackedConv2d (gamma=1)
        g2 = gamma * groups * num_estimators    # conv2 / shortcut
        key = jax.random.PRNGKey(seed)
        ks = jax.random.split(key, 8)

        def make_bn(k, c):
            k0, k1, k2, k3 = jax.random.split(k, 4)
            return (1.0 + 0.1 * jax.random.normal(k0, (c,), jnp.float32),
                    0.1 * jax.random.normal(k1, (c,), jnp.float32),
                    0.1 * jax.random.normal(k2, (c,), jnp.float32),
                    0.5 + jnp.abs(jax.random.normal(k3, (c,), jnp.float32)))

        has_projection = stride != 1 or in_planes != planes
        raw = {
            "conv1_w": 0.1 * jax.random.normal(
                ks[0], (cout_ext, cin_ext // g1, 3, 3), jnp.float32),
            "bn1": make_bn(ks[1], cout_ext),
            "conv2_w": 0.1 * jax.random.normal(
                ks[2], (cout_ext, cout_ext // g2, 3, 3), jnp.float32),
            "bn2": make_bn(ks[3], cout_ext),
        }
        if has_projection:
            raw["conv_s_w"] = 0.1 * jax.random.normal(
                ks[4], (cout_ext, cin_ext // g2, 1, 1), jnp.float32)
            raw["bn_s"] = make_bn(ks[5], cout_ext)

        # One-time weight preparation (outside the jitted forward).
        params = prepare_block_params(raw, groups_conv1=g1, groups_conv2=g2)

        x = jax.random.normal(ks[6], (batch, cin_ext, hw, hw), jnp.float32)

        out = packed_basic_block_forward(x, params, stride=stride,
                                         out_channels=cout_ext)
        out = jax.block_until_ready(out)
        hout = (hw - 1) // stride + 1
        assert out.shape == (batch, cout_ext, hout, hout), out.shape

        tight = matched_ref_block(x, params, stride=stride,
                                  out_channels=cout_ext)
        loose = ref_basic_block(x, raw, stride=stride,
                                has_projection=has_projection,
                                groups_conv1=g1, groups_conv2=g2)
        # tight: identical bf16 quantization points -> validates structure.
        assert jnp.allclose(out, tight, atol=2e-2, rtol=2e-2), (
            float(jnp.max(jnp.abs(out - tight))))
        # loose: true f32 module semantics; slack covers bf16 operand rounding.
        assert jnp.allclose(out, loose, atol=1e-1, rtol=1e-1), (
            float(jnp.max(jnp.abs(out - loose))))

    run_case(0, in_planes=4, planes=8, stride=1)   # projection (1x1) shortcut
    run_case(1, in_planes=8, planes=8, stride=1)   # identity shortcut
    run_case(2, in_planes=4, planes=8, stride=2)   # downsample + projection
    print("KERNEL_OK")
</pallas_src>

<mosaic_0001>
module attributes {stable_mosaic.version = 11 : i64} {
  func.func @_conv_bn_kernel(%arg0: i32, %arg1: memref<1x16x16x128xbf16, #tpu.memory_space<vmem>>, %arg2: memref<1x128x128xbf16, #tpu.memory_space<vmem>>, %arg3: memref<1x128xf32, #tpu.memory_space<vmem>>, %arg4: memref<1x256x128xbf16, #tpu.memory_space<vmem>>) attributes {dimension_semantics = [#tpu.dimension_semantics<parallel>], iteration_bounds = array<i64: 2>, scalar_prefetch = 0 : i64, scratch_operands = 0 : i64, tpu.core_type = #tpu.core_type<tc>, window_params = [{transform_indices = @transform_0, window_bounds = array<i64: 1, 16, 16, 128>}, {pipeline_mode = #tpu.pipeline_mode<synchronous>, transform_indices = @transform_1, window_bounds = array<i64: 1, 128, 128>}, {pipeline_mode = #tpu.pipeline_mode<synchronous>, transform_indices = @transform_2, window_bounds = array<i64: 1, 128>}, {transform_indices = @transform_3, window_bounds = array<i64: 1, 256, 128>}]} {
    %c0 = arith.constant 0 : index
    %c0_0 = arith.constant 0 : index
    %c0_1 = arith.constant 0 : index
    %c0_2 = arith.constant 0 : index
    %0 = vector.load %arg1[%c0, %c0_0, %c0_1, %c0_2] : memref<1x16x16x128xbf16, #tpu.memory_space<vmem>>, vector<1x16x16x128xbf16>
    %1 = vector.shape_cast %0 : vector<1x16x16x128xbf16> to vector<16x16x128xbf16>
    %2 = vector.shape_cast %1 : vector<16x16x128xbf16> to vector<256x128xbf16>
    %c0_3 = arith.constant 0 : index
    %c0_4 = arith.constant 0 : index
    %c0_5 = arith.constant 0 : index
    %3 = vector.load %arg2[%c0_3, %c0_4, %c0_5] : memref<1x128x128xbf16, #tpu.memory_space<vmem>>, vector<1x128x128xbf16>
    %4 = vector.shape_cast %3 : vector<1x128x128xbf16> to vector<128x128xbf16>
    %cst = arith.constant dense<0.000000e+00> : vector<256x128xf32>
    %5 = tpu.matmul %2, %4, %cst {dimension_numbers = #tpu.dot_dimension_numbers<[1], [0], [0], [1], [0, 0, 1, 1], [], []>} : vector<256x128xbf16>, vector<128x128xbf16>, vector<256x128xf32> -> vector<256x128xf32>
    %c0_6 = arith.constant 0 : index
    %c0_7 = arith.constant 0 : index
    %6 = vector.load %arg3[%c0_6, %c0_7] : memref<1x128xf32, #tpu.memory_space<vmem>>, vector<1x128xf32>
    %7 = vector.broadcast %6 : vector<1x128xf32> to vector<256x128xf32>
    %8 = arith.addf %5, %7 : vector<256x128xf32>
    %9 = arith.truncf %8 : vector<256x128xf32> to vector<256x128xbf16>
    %c0_8 = arith.constant 0 : index
    %c0_9 = arith.constant 0 : index
    %c0_10 = arith.constant 0 : index
    %10 = vector.load %arg4[%c0_8, %c0_9, %c0_10] : memref<1x256x128xbf16, #tpu.memory_space<vmem>>, vector<1x256x128xbf16>
    %11 = vector.shape_cast %10 : vector<1x256x128xbf16> to vector<256x128xbf16>
    %12 = vector.shape_cast %9 : vector<256x128xbf16> to vector<1x256x128xbf16>
    tpu.vector_store %arg4[%c0_8, %c0_9, %c0_10], %12 {strides = array<i32>} : memref<1x256x128xbf16, #tpu.memory_space<vmem>>, vector<1x256x128xbf16>,
    return
  }
  func.func @transform_0(%arg0: i32) -> (i32, i32, i32, i32) {
    %c0_i32 = arith.constant 0 : i32
    %c0_i32_0 = arith.constant 0 : i32
    %c0_i32_1 = arith.constant 0 : i32
    %c0_i32_2 = arith.constant 0 : i32
    return %arg0, %c0_i32, %c0_i32_0, %c0_i32_1 : i32, i32, i32, i32
  }
  func.func @transform_1(%arg0: i32) -> (i32, i32, i32) {
    %c0_i32 = arith.constant 0 : i32
    %c0_i32_0 = arith.constant 0 : i32
    %c0_i32_1 = arith.constant 0 : i32
    %c0_i32_2 = arith.constant 0 : i32
    return %c0_i32, %c0_i32_0, %c0_i32_1 : i32, i32, i32
  }
  func.func @transform_2(%arg0: i32) -> (i32, i32) {
    %c0_i32 = arith.constant 0 : i32
    %c0_i32_0 = arith.constant 0 : i32
    %c0_i32_1 = arith.constant 0 : i32
    return %c0_i32, %c0_i32_0 : i32, i32
  }
  func.func @transform_3(%arg0: i32) -> (i32, i32, i32) {
    %c0_i32 = arith.constant 0 : i32
    %c0_i32_0 = arith.constant 0 : i32
    %c0_i32_1 = arith.constant 0 : i32
    return %arg0, %c0_i32, %c0_i32_0 : i32, i32, i32
  }
}

module attributes {stable_mosaic.version = 11 : i64} {
  func.func @_conv_bn_kernel(%arg0: i32, %arg1: memref<1x16x16x128xbf16, #tpu.memory_space<vmem>>, %arg2: memref<3x384x128xbf16, #tpu.memory_space<vmem>>, %arg3: memref<1x128xf32, #tpu.memory_space<vmem>>, %arg4: memref<1x256x128xbf16, #tpu.memory_space<vmem>>, %arg5: memref<1x256x128xbf16, #tpu.memory_space<vmem>>, %arg6: memref<18x18x128xbf16, #tpu.memory_space<vmem>>) attributes {dimension_semantics = [#tpu.dimension_semantics<parallel>], iteration_bounds = array<i64: 2>, scalar_prefetch = 0 : i64, scratch_operands = 1 : i64, tpu.core_type = #tpu.core_type<tc>, window_params = [{transform_indices = @transform_0, window_bounds = array<i64: 1, 16, 16, 128>}, {pipeline_mode = #tpu.pipeline_mode<synchronous>, transform_indices = @transform_1, window_bounds = array<i64: 3, 384, 128>}, {pipeline_mode = #tpu.pipeline_mode<synchronous>, transform_indices = @transform_2, window_bounds = array<i64: 1, 128>}, {transform_indices = @transform_3, window_bounds = array<i64: 1, 256, 128>}, {transform_indices = @transform_4, window_bounds = array<i64: 1, 256, 128>}]} {
    %cst = arith.constant 0.000000e+00 : bf16
    %0 = vector.broadcast %cst : bf16 to vector<18x18x128xbf16>
    %c0 = arith.constant 0 : index
    %c0_0 = arith.constant 0 : index
    %c0_1 = arith.constant 0 : index
    %1 = vector.load %arg6[%c0, %c0_0, %c0_1] : memref<18x18x128xbf16, #tpu.memory_space<vmem>>, vector<18x18x128xbf16>
    tpu.vector_store %arg6[%c0, %c0_0, %c0_1], %0 {strides = array<i32>} : memref<18x18x128xbf16, #tpu.memory_space<vmem>>, vector<18x18x128xbf16>,
    %c0_2 = arith.constant 0 : index
    %c0_3 = arith.constant 0 : index
    %c0_4 = arith.constant 0 : index
    %c0_5 = arith.constant 0 : index
    %2 = vector.load %arg1[%c0_2, %c0_3, %c0_4, %c0_5] : memref<1x16x16x128xbf16, #tpu.memory_space<vmem>>, vector<1x16x16x128xbf16>
    %3 = vector.shape_cast %2 : vector<1x16x16x128xbf16> to vector<16x16x128xbf16>
    %c1 = arith.constant 1 : index
    %c1_6 = arith.constant 1 : index
    %c0_7 = arith.constant 0 : index
    %4 = vector.load %arg6[%c1, %c1_6, %c0_7] : memref<18x18x128xbf16, #tpu.memory_space<vmem>>, vector<16x16x128xbf16>
    tpu.vector_store %arg6[%c1, %c1_6, %c0_7], %3 {strides = array<i32>} : memref<18x18x128xbf16, #tpu.memory_space<vmem>>, vector<16x16x128xbf16>,
    %c0_8 = arith.constant 0 : index
    %c0_9 = arith.constant 0 : index
    %c0_10 = arith.constant 0 : index
    %5 = vector.load %arg6[%c0_8, %c0_9, %c0_10] : memref<18x18x128xbf16, #tpu.memory_space<vmem>>, vector<18x18x128xbf16>
    %6 = vector.extract_strided_slice %5 {offsets = [0, 0, 0], sizes = [18, 16, 128], strides = [1, 1, 1]} : vector<18x18x128xbf16> to vector<18x16x128xbf16>
    %7 = vector.extract_strided_slice %5 {offsets = [0, 1, 0], sizes = [18, 16, 128], strides = [1, 1, 1]} : vector<18x18x128xbf16> to vector<18x16x128xbf16>
    %8 = vector.extract_strided_slice %5 {offsets = [0, 2, 0], sizes = [18, 16, 128], strides = [1, 1, 1]} : vector<18x18x128xbf16> to vector<18x16x128xbf16>
    %9 = tpu.concatenate %6, %7, %8 in 2 : vector<18x16x128xbf16>, vector<18x16x128xbf16>, vector<18x16x128xbf16> -> vector<18x16x384xbf16>
    %10 = vector.extract_strided_slice %9 {offsets = [0, 0, 0], sizes = [16, 16, 384], strides = [1, 1, 1]} : vector<18x16x384xbf16> to vector<16x16x384xbf16>
    %11 = vector.shape_cast %10 : vector<16x16x384xbf16> to vector<256x384xbf16>
    %c0_11 = arith.constant 0 : index
    %c0_12 = arith.constant 0 : index
    %c0_13 = arith.constant 0 : index
    %12 = vector.load %arg2[%c0_11, %c0_12, %c0_13] : memref<3x384x128xbf16, #tpu.memory_space<vmem>>, vector<1x384x128xbf16>
    %13 = vector.shape_cast %12 : vector<1x384x128xbf16> to vector<384x128xbf16>
    %cst_14 = arith.constant dense<0.000000e+00> : vector<256x128xf32>
    %14 = tpu.matmul %11, %13, %cst_14 {dimension_numbers = #tpu.dot_dimension_numbers<[1], [0], [0], [1], [0, 0, 1, 1], [], []>} : vector<256x384xbf16>, vector<384x128xbf16>, vector<256x128xf32> -> vector<256x128xf32>
    %15 = vector.extract_strided_slice %9 {offsets = [1, 0, 0], sizes = [16, 16, 384], strides = [1, 1, 1]} : vector<18x16x384xbf16> to vector<16x16x384xbf16>
    %16 = vector.shape_cast %15 : vector<16x16x384xbf16> to vector<256x384xbf16>
    %c1_15 = arith.constant 1 : index
    %c0_16 = arith.constant 0 : index
    %c0_17 = arith.constant 0 : index
    %17 = vector.load %arg2[%c1_15, %c0_16, %c0_17] : memref<3x384x128xbf16, #tpu.memory_space<vmem>>, vector<1x384x128xbf16>
    %18 = vector.shape_cast %17 : vector<1x384x128xbf16> to vector<384x128xbf16>
    %cst_18 = arith.constant dense<0.000000e+00> : vector<256x128xf32>
    %19 = tpu.matmul %16, %18, %cst_18 {dimension_numbers = #tpu.dot_dimension_numbers<[1], [0], [0], [1], [0, 0, 1, 1], [], []>} : vector<256x384xbf16>, vector<384x128xbf16>, vector<256x128xf32> -> vector<256x128xf32>
    %20 = arith.addf %14, %19 : vector<256x128xf32>
    %21 = vector.extract_strided_slice %9 {offsets = [2, 0, 0], sizes = [16, 16, 384], strides = [1, 1, 1]} : vector<18x16x384xbf16> to vector<16x16x384xbf16>
    %22 = vector.shape_cast %21 : vector<16x16x384xbf16> to vector<256x384xbf16>
    %c2 = arith.constant 2 : index
    %c0_19 = arith.constant 0 : index
    %c0_20 = arith.constant 0 : index
    %23 = vector.load %arg2[%c2, %c0_19, %c0_20] : memref<3x384x128xbf16, #tpu.memory_space<vmem>>, vector<1x384x128xbf16>
    %24 = vector.shape_cast %23 : vector<1x384x128xbf16> to vector<384x128xbf16>
    %cst_21 = arith.constant dense<0.000000e+00> : vector<256x128xf32>
    %25 = tpu.matmul %22, %24, %cst_21 {dimension_numbers = #tpu.dot_dimension_numbers<[1], [0], [0], [1], [0, 0, 1, 1], [], []>} : vector<256x384xbf16>, vector<384x128xbf16>, vector<256x128xf32> -> vector<256x128xf32>
    %26 = arith.addf %20, %25 : vector<256x128xf32>
    %c0_22 = arith.constant 0 : index
    %c0_23 = arith.constant 0 : index
    %27 = vector.load %arg3[%c0_22, %c0_23] : memref<1x128xf32, #tpu.memory_space<vmem>>, vector<1x128xf32>
    %28 = vector.broadcast %27 : vector<1x128xf32> to vector<256x128xf32>
    %29 = arith.addf %26, %28 : vector<256x128xf32>
    %c0_24 = arith.constant 0 : index
    %c0_25 = arith.constant 0 : index
    %c0_26 = arith.constant 0 : index
    %30 = vector.load %arg4[%c0_24, %c0_25, %c0_26] : memref<1x256x128xbf16, #tpu.memory_space<vmem>>, vector<1x256x128xbf16>
    %31 = vector.shape_cast %30 : vector<1x256x128xbf16> to vector<256x128xbf16>
    %32 = arith.extf %31 : vector<256x128xbf16> to vector<256x128xf32>
    %33 = arith.addf %29, %32 : vector<256x128xf32>
    %cst_27 = arith.constant 0.000000e+00 : f32
    %34 = vector.broadcast %cst_27 : f32 to vector<256x128xf32>
    %35 = arith.maximumf %33, %34 : vector<256x128xf32>
    %36 = arith.truncf %35 : vector<256x128xf32> to vector<256x128xbf16>
    %c0_28 = arith.constant 0 : index
    %c0_29 = arith.constant 0 : index
    %c0_30 = arith.constant 0 : index
    %37 = vector.load %arg5[%c0_28, %c0_29, %c0_30] : memref<1x256x128xbf16, #tpu.memory_space<vmem>>, vector<1x256x128xbf16>
    %38 = vector.shape_cast %37 : vector<1x256x128xbf16> to vector<256x128xbf16>
    %39 = vector.shape_cast %36 : vector<256x128xbf16> to vector<1x256x128xbf16>
    tpu.vector_store %arg5[%c0_28, %c0_29, %c0_30], %39 {strides = array<i32>} : memref<1x256x128xbf16, #tpu.memory_space<vmem>>, vector<1x256x128xbf16>,
    return
  }
  func.func @transform_0(%arg0: i32) -> (i32, i32, i32, i32) {
    %c0_i32 = arith.constant 0 : i32
    %c0_i32_0 = arith.constant 0 : i32
    %c0_i32_1 = arith.constant 0 : i32
    %c0_i32_2 = arith.constant 0 : i32
    return %arg0, %c0_i32, %c0_i32_0, %c0_i32_1 : i32, i32, i32, i32
  }
  func.func @transform_1(%arg0: i32) -> (i32, i32, i32) {
    %c0_i32 = arith.constant 0 : i32
    %c0_i32_0 = arith.constant 0 : i32
    %c0_i32_1 = arith.constant 0 : i32
    %c0_i32_2 = arith.constant 0 : i32
    return %c0_i32, %c0_i32_0, %c0_i32_1 : i32, i32, i32
  }
  func.func @transform_2(%arg0: i32) -> (i32, i32) {
    %c0_i32 = arith.constant 0 : i32
    %c0_i32_0 = arith.constant 0 : i32
    %c0_i32_1 = arith.constant 0 : i32
    return %c0_i32, %c0_i32_0 : i32, i32
  }
  func.func @transform_3(%arg0: i32) -> (i32, i32, i32) {
    %c0_i32 = arith.constant 0 : i32
    %c0_i32_0 = arith.constant 0 : i32
    %c0_i32_1 = arith.constant 0 : i32
    return %arg0, %c0_i32, %c0_i32_0 : i32, i32, i32
  }
  func.func @transform_4(%arg0: i32) -> (i32, i32, i32) {
    %c0_i32 = arith.constant 0 : i32
    %c0_i32_0 = arith.constant 0 : i32
    %c0_i32_1 = arith.constant 0 : i32
    return %arg0, %c0_i32, %c0_i32_0 : i32, i32, i32
  }
}

module attributes {stable_mosaic.version = 11 : i64} {
  func.func @_conv_bn_kernel(%arg0: i32, %arg1: memref<1x16x16x128xbf16, #tpu.memory_space<vmem>>, %arg2: memref<3x384x128xbf16, #tpu.memory_space<vmem>>, %arg3: memref<1x128xf32, #tpu.memory_space<vmem>>, %arg4: memref<1x256x128xbf16, #tpu.memory_space<vmem>>, %arg5: memref<18x18x128xbf16, #tpu.memory_space<vmem>>) attributes {dimension_semantics = [#tpu.dimension_semantics<parallel>], iteration_bounds = array<i64: 2>, scalar_prefetch = 0 : i64, scratch_operands = 1 : i64, tpu.core_type = #tpu.core_type<tc>, window_params = [{transform_indices = @transform_0, window_bounds = array<i64: 1, 16, 16, 128>}, {pipeline_mode = #tpu.pipeline_mode<synchronous>, transform_indices = @transform_1, window_bounds = array<i64: 3, 384, 128>}, {pipeline_mode = #tpu.pipeline_mode<synchronous>, transform_indices = @transform_2, window_bounds = array<i64: 1, 128>}, {transform_indices = @transform_3, window_bounds = array<i64: 1, 256, 128>}]} {
    %cst = arith.constant 0.000000e+00 : bf16
    %0 = vector.broadcast %cst : bf16 to vector<18x18x128xbf16>
    %c0 = arith.constant 0 : index
    %c0_0 = arith.constant 0 : index
    %c0_1 = arith.constant 0 : index
    %1 = vector.load %arg5[%c0, %c0_0, %c0_1] : memref<18x18x128xbf16, #tpu.memory_space<vmem>>, vector<18x18x128xbf16>
    tpu.vector_store %arg5[%c0, %c0_0, %c0_1], %0 {strides = array<i32>} : memref<18x18x128xbf16, #tpu.memory_space<vmem>>, vector<18x18x128xbf16>,
    %c0_2 = arith.constant 0 : index
    %c0_3 = arith.constant 0 : index
    %c0_4 = arith.constant 0 : index
    %c0_5 = arith.constant 0 : index
    %2 = vector.load %arg1[%c0_2, %c0_3, %c0_4, %c0_5] : memref<1x16x16x128xbf16, #tpu.memory_space<vmem>>, vector<1x16x16x128xbf16>
    %3 = vector.shape_cast %2 : vector<1x16x16x128xbf16> to vector<16x16x128xbf16>
    %c1 = arith.constant 1 : index
    %c1_6 = arith.constant 1 : index
    %c0_7 = arith.constant 0 : index
    %4 = vector.load %arg5[%c1, %c1_6, %c0_7] : memref<18x18x128xbf16, #tpu.memory_space<vmem>>, vector<16x16x128xbf16>
    tpu.vector_store %arg5[%c1, %c1_6, %c0_7], %3 {strides = array<i32>} : memref<18x18x128xbf16, #tpu.memory_space<vmem>>, vector<16x16x128xbf16>,
    %c0_8 = arith.constant 0 : index
    %c0_9 = arith.constant 0 : index
    %c0_10 = arith.constant 0 : index
    %5 = vector.load %arg5[%c0_8, %c0_9, %c0_10] : memref<18x18x128xbf16, #tpu.memory_space<vmem>>, vector<18x18x128xbf16>
    %6 = vector.extract_strided_slice %5 {offsets = [0, 0, 0], sizes = [18, 16, 128], strides = [1, 1, 1]} : vector<18x18x128xbf16> to vector<18x16x128xbf16>
    %7 = vector.extract_strided_slice %5 {offsets = [0, 1, 0], sizes = [18, 16, 128], strides = [1, 1, 1]} : vector<18x18x128xbf16> to vector<18x16x128xbf16>
    %8 = vector.extract_strided_slice %5 {offsets = [0, 2, 0], sizes = [18, 16, 128], strides = [1, 1, 1]} : vector<18x18x128xbf16> to vector<18x16x128xbf16>
    %9 = tpu.concatenate %6, %7, %8 in 2 : vector<18x16x128xbf16>, vector<18x16x128xbf16>, vector<18x16x128xbf16> -> vector<18x16x384xbf16>
    %10 = vector.extract_strided_slice %9 {offsets = [0, 0, 0], sizes = [16, 16, 384], strides = [1, 1, 1]} : vector<18x16x384xbf16> to vector<16x16x384xbf16>
    %11 = vector.shape_cast %10 : vector<16x16x384xbf16> to vector<256x384xbf16>
    %c0_11 = arith.constant 0 : index
    %c0_12 = arith.constant 0 : index
    %c0_13 = arith.constant 0 : index
    %12 = vector.load %arg2[%c0_11, %c0_12, %c0_13] : memref<3x384x128xbf16, #tpu.memory_space<vmem>>, vector<1x384x128xbf16>
    %13 = vector.shape_cast %12 : vector<1x384x128xbf16> to vector<384x128xbf16>
    %cst_14 = arith.constant dense<0.000000e+00> : vector<256x128xf32>
    %14 = tpu.matmul %11, %13, %cst_14 {dimension_numbers = #tpu.dot_dimension_numbers<[1], [0], [0], [1], [0, 0, 1, 1], [], []>} : vector<256x384xbf16>, vector<384x128xbf16>, vector<256x128xf32> -> vector<256x128xf32>
    %15 = vector.extract_strided_slice %9 {offsets = [1, 0, 0], sizes = [16, 16, 384], strides = [1, 1, 1]} : vector<18x16x384xbf16> to vector<16x16x384xbf16>
    %16 = vector.shape_cast %15 : vector<16x16x384xbf16> to vector<256x384xbf16>
    %c1_15 = arith.constant 1 : index
    %c0_16 = arith.constant 0 : index
    %c0_17 = arith.constant 0 : index
    %17 = vector.load %arg2[%c1_15, %c0_16, %c0_17] : memref<3x384x128xbf16, #tpu.memory_space<vmem>>, vector<1x384x128xbf16>
    %18 = vector.shape_cast %17 : vector<1x384x128xbf16> to vector<384x128xbf16>
    %cst_18 = arith.constant dense<0.000000e+00> : vector<256x128xf32>
    %19 = tpu.matmul %16, %18, %cst_18 {dimension_numbers = #tpu.dot_dimension_numbers<[1], [0], [0], [1], [0, 0, 1, 1], [], []>} : vector<256x384xbf16>, vector<384x128xbf16>, vector<256x128xf32> -> vector<256x128xf32>
    %20 = arith.addf %14, %19 : vector<256x128xf32>
    %21 = vector.extract_strided_slice %9 {offsets = [2, 0, 0], sizes = [16, 16, 384], strides = [1, 1, 1]} : vector<18x16x384xbf16> to vector<16x16x384xbf16>
    %22 = vector.shape_cast %21 : vector<16x16x384xbf16> to vector<256x384xbf16>
    %c2 = arith.constant 2 : index
    %c0_19 = arith.constant 0 : index
    %c0_20 = arith.constant 0 : index
    %23 = vector.load %arg2[%c2, %c0_19, %c0_20] : memref<3x384x128xbf16, #tpu.memory_space<vmem>>, vector<1x384x128xbf16>
    %24 = vector.shape_cast %23 : vector<1x384x128xbf16> to vector<384x128xbf16>
    %cst_21 = arith.constant dense<0.000000e+00> : vector<256x128xf32>
    %25 = tpu.matmul %22, %24, %cst_21 {dimension_numbers = #tpu.dot_dimension_numbers<[1], [0], [0], [1], [0, 0, 1, 1], [], []>} : vector<256x384xbf16>, vector<384x128xbf16>, vector<256x128xf32> -> vector<256x128xf32>
    %26 = arith.addf %20, %25 : vector<256x128xf32>
    %c0_22 = arith.constant 0 : index
    %c0_23 = arith.constant 0 : index
    %27 = vector.load %arg3[%c0_22, %c0_23] : memref<1x128xf32, #tpu.memory_space<vmem>>, vector<1x128xf32>
    %28 = vector.broadcast %27 : vector<1x128xf32> to vector<256x128xf32>
    %29 = arith.addf %26, %28 : vector<256x128xf32>
    %cst_24 = arith.constant 0.000000e+00 : f32
    %30 = vector.broadcast %cst_24 : f32 to vector<256x128xf32>
    %31 = arith.maximumf %29, %30 : vector<256x128xf32>
    %32 = arith.truncf %31 : vector<256x128xf32> to vector<256x128xbf16>
    %c0_25 = arith.constant 0 : index
    %c0_26 = arith.constant 0 : index
    %c0_27 = arith.constant 0 : index
    %33 = vector.load %arg4[%c0_25, %c0_26, %c0_27] : memref<1x256x128xbf16, #tpu.memory_space<vmem>>, vector<1x256x128xbf16>
    %34 = vector.shape_cast %33 : vector<1x256x128xbf16> to vector<256x128xbf16>
    %35 = vector.shape_cast %32 : vector<256x128xbf16> to vector<1x256x128xbf16>
    tpu.vector_store %arg4[%c0_25, %c0_26, %c0_27], %35 {strides = array<i32>} : memref<1x256x128xbf16, #tpu.memory_space<vmem>>, vector<1x256x128xbf16>,
    return
  }
  func.func @transform_0(%arg0: i32) -> (i32, i32, i32, i32) {
    %c0_i32 = arith.constant 0 : i32
    %c0_i32_0 = arith.constant 0 : i32
    %c0_i32_1 = arith.constant 0 : i32
    %c0_i32_2 = arith.constant 0 : i32
    return %arg0, %c0_i32, %c0_i32_0, %c0_i32_1 : i32, i32, i32, i32
  }
  func.func @transform_1(%arg0: i32) -> (i32, i32, i32) {
    %c0_i32 = arith.constant 0 : i32
    %c0_i32_0 = arith.constant 0 : i32
    %c0_i32_1 = arith.constant 0 : i32
    %c0_i32_2 = arith.constant 0 : i32
    return %c0_i32, %c0_i32_0, %c0_i32_1 : i32, i32, i32
  }
  func.func @transform_2(%arg0: i32) -> (i32, i32) {
    %c0_i32 = arith.constant 0 : i32
    %c0_i32_0 = arith.constant 0 : i32
    %c0_i32_1 = arith.constant 0 : i32
    return %c0_i32, %c0_i32_0 : i32, i32
  }
  func.func @transform_3(%arg0: i32) -> (i32, i32, i32) {
    %c0_i32 = arith.constant 0 : i32
    %c0_i32_0 = arith.constant 0 : i32
    %c0_i32_1 = arith.constant 0 : i32
    return %arg0, %c0_i32, %c0_i32_0 : i32, i32, i32
  }
}

</mosaic_0001>

<llo_original>
// kernel: packed_basic_block_forward.4
$region0: #{packed_basic_block_forward.4}
  #allocation0 [shape = 'u32[]', space=smem, size = 0x4, offset = 0x4, fixed_abs, tag = 'smem constant byte address 0x4 - core index']
  #allocation1 [shape = 'u32[144,128]{1,0:T(1,128)}', space=vmem, size = 0x12000, scoped, tag = 'internal scratch']
  %s0 = inlined_call_operand.vmem [shape: bf16[2,16,16,128], index: 0, kind: input, shape index: {}]
  %s1 = inlined_call_operand.vmem [shape: bf16[1,128,128], index: 1, kind: input, shape index: {}]
  %s2 = inlined_call_operand.vmem [shape: f32[1,128], index: 2, kind: input, shape index: {}]
  %s3 = inlined_call_operand.vmem [shape: bf16[2,256,128], index: 3, kind: output, shape index: {}]
  %s4 = sld [smem:[#allocation0]]
  $region45: #{packed_basic_block_forward.4} parent=0
    _
  %s6 = ssub.s32 1, %s4
  %s7 = scalar_select 0, %s6, %s4
  loop: start=0, step=1, limit=4
  $region2: #{packed_basic_block_forward.4} parent=0 // loop_pre_header
    _
  $region3: #{packed_basic_block_forward.4} parent=0 // loop_header
    %s9 = sphi 0, %s13
    %p10 = scmp.ge.s32.totalorder %s9, 4
    %s19 = sphi 0, %s21
    %s22 = sphi 0, %s19
    %s23 = sphi 0, %s22
    %s39 = sphi 0, %s23
    %s43 = sphi 0, %s43
    %s45 = sphi 0, %s43
    %s46 = sphi 0, %s45
    %s60 = sphi 0, %s46
    %s64 = sphi 0, %s64
    %s66 = sphi 0, %s64
    %s67 = sphi 0, %s66
    %s81 = sphi 0, %s67
    %s87 = sphi 0, %s89
    %s90 = sphi 0, %s87
    %s91 = sphi 0, %s90
    %s107 = sphi 0, %s91
  $region4: #{packed_basic_block_forward.4} parent=0 // loop_header_branch
    %12 = sbr.rel (%p10) target = $region8
  $region5: #{packed_basic_block_forward.4} parent=0 // loop_body
    %s14 = ssub.s32 %s9, 1
    %s15 = ssub.s32 %s9, 2
    %s16 = sadd.s32 %s9, 1
    %s17 = ssub.s32 %s9, %s16
    %p18 = scmp.eq.s32.totalorder %s17, 0
    %s20 = sadd.s32 %s19, 1
    %s21 = scalar_select %p18, %s19, %s20
    %p24 = pneg %p18
    %p25 = scmp.eq.s32.totalorder %s9, 1
    %p26 = por %p24, %p25
    %p27 = scmp.ne.s32.totalorder %s19, %s22
    %p28 = scmp.eq.s32.totalorder %s9, 0
    %p29 = por %p27, %p28
    %p30 = scmp.ne.s32.totalorder %s19, %s22
    %p31 = scmp.eq.s32.totalorder %s14, 1
    %p32 = por %p30, %p31
    %p33 = scmp.ne.s32.totalorder %s22, %s23
    %p34 = scmp.eq.s32.totalorder %s14, 0
    %p35 = por %p33, %p34
    %p36 = scmp.ne.s32.totalorder %s22, %s23
    %p37 = scmp.eq.s32.totalorder %s15, 1
    %p38 = por %p36, %p37
    %p40 = scmp.ne.s32.totalorder %s23, %s39
    %p41 = scmp.eq.s32.totalorder %s15, 0
    %p42 = por %p40, %p41
    %s44 = sadd.s32 %s43, 1
    %p47 = scmp.eq.s32.totalorder %s9, 1
    %p48 = scmp.ne.s32.totalorder %s43, %s45
    %p49 = scmp.eq.s32.totalorder %s9, 0
    %p50 = por %p48, %p49
    %p51 = scmp.ne.s32.totalorder %s43, %s45
    %p52 = scmp.eq.s32.totalorder %s14, 1
    %p53 = por %p51, %p52
    %p54 = scmp.ne.s32.totalorder %s45, %s46
    %p55 = scmp.eq.s32.totalorder %s14, 0
    %p56 = por %p54, %p55
    %p57 = scmp.ne.s32.totalorder %s45, %s46
    %p58 = scmp.eq.s32.totalorder %s15, 1
    %p59 = por %p57, %p58
    %p61 = scmp.ne.s32.totalorder %s46, %s60
    %p62 = scmp.eq.s32.totalorder %s15, 0
    %p63 = por %p61, %p62
    %s65 = sadd.s32 %s64, 1
    %p68 = scmp.eq.s32.totalorder %s9, 1
    %p69 = scmp.ne.s32.totalorder %s64, %s66
    %p70 = scmp.eq.s32.totalorder %s9, 0
    %p71 = por %p69, %p70
    %p72 = scmp.ne.s32.totalorder %s64, %s66
    %p73 = scmp.eq.s32.totalorder %s14, 1
    %p74 = por %p72, %p73
    %p75 = scmp.ne.s32.totalorder %s66, %s67
    %p76 = scmp.eq.s32.totalorder %s14, 0
    %p77 = por %p75, %p76
    %p78 = scmp.ne.s32.totalorder %s66, %s67
    %p79 = scmp.eq.s32.totalorder %s15, 1
    %p80 = por %p78, %p79
    %p82 = scmp.ne.s32.totalorder %s67, %s81
    %p83 = scmp.eq.s32.totalorder %s15, 0
    %p84 = por %p82, %p83
    %s85 = ssub.s32 %s9, %s16
    %p86 = scmp.eq.s32.totalorder %s85, 0
    %s88 = sadd.s32 %s87, 1
    %s89 = scalar_select %p86, %s87, %s88
    %p92 = pneg %p86
    %p93 = scmp.eq.s32.totalorder %s9, 1
    %p94 = por %p92, %p93
    %p95 = scmp.ne.s32.totalorder %s87, %s90
    %p96 = scmp.eq.s32.totalorder %s9, 0
    %p97 = por %p95, %p96
    %p98 = scmp.ne.s32.totalorder %s87, %s90
    %p99 = scmp.eq.s32.totalorder %s14, 1
    %p100 = por %p98, %p99
    %p101 = scmp.ne.s32.totalorder %s90, %s91
    %p102 = scmp.eq.s32.totalorder %s14, 0
    %p103 = por %p101, %p102
    %p104 = scmp.ne.s32.totalorder %s90, %s91
    %p105 = scmp.eq.s32.totalorder %s15, 1
    %p106 = por %p104, %p105
    %p108 = scmp.ne.s32.totalorder %s91, %s107
    %p109 = scmp.eq.s32.totalorder %s15, 0
    %p110 = por %p108, %p109
    %p111 = scmp.le.s32.totalorder 1, %s9
    %p112 = scmp.lt.s32.totalorder %s9, 3
    %p113 = pnand %p111, %p112
    %p114 = pneg %p113
    // Predicated region
    $region9: #{packed_basic_block_forward.4} parent=5 // pred_check
      _
    $region10: #{packed_basic_block_forward.4} parent=5 // pred_check_branch
      %116 = sbr.rel (%p113) target = $region12
    $region11: #{packed_basic_block_forward.4} parent=5 // pred_region
      %s117 = ssub.s32 %s9, 1
      // Predicated region
      $region13: #{packed_basic_block_forward.4} parent=11 // pred_check
        %p118 = pneg %p56
      $region14: #{packed_basic_block_forward.4} parent=11 // pred_check_branch
        %120 = sbr.rel (%p118) target = $region16
      $region15: #{packed_basic_block_forward.4} parent=11 // pred_region
        _
      $region16: #{packed_basic_block_forward.4} parent=11 // pred_fallthru
        _
      // Predicated region
      $region17: #{packed_basic_block_forward.4} parent=11 // pred_check
        %p121 = pneg %p77
      $region18: #{packed_basic_block_forward.4} parent=11 // pred_check_branch
        %123 = sbr.rel (%p121) target = $region20
      $region19: #{packed_basic_block_forward.4} parent=11 // pred_region
        _
      $region20: #{packed_basic_block_forward.4} parent=11 // pred_fallthru
        _
    $region12: #{packed_basic_block_forward.4} parent=5 // pred_fallthru
      _
    %p124 = scmp.lt.s32.totalorder %s9, 2
    // Predicated region
    $region21: #{packed_basic_block_forward.4} parent=5 // pred_check
      %p125 = pneg %p124
    $region22: #{packed_basic_block_forward.4} parent=5 // pred_check_branch
      %127 = sbr.rel (%p125) target = $region24
    $region23: #{packed_basic_block_forward.4} parent=5 // pred_region
      // Predicated region
      $region25: #{packed_basic_block_forward.4} parent=23 // pred_check
        %p128 = pneg %p29
      $region26: #{packed_basic_block_forward.4} parent=23 // pred_check_branch
        %130 = sbr.rel (%p128) target = $region28
      $region27: #{packed_basic_block_forward.4} parent=23 // pred_region
        %p131 = scmp.lt.s32.totalorder %s9, 1
        %s132 = scalar_select %p131, %s9, 1
        %s133 = smul.addr %s132, 32
        %s134 = smul.addr %s133, 4
        %s135 = scalar_lea.vmem %s0, %s134
      $region28: #{packed_basic_block_forward.4} parent=23 // pred_fallthru
        _
    $region24: #{packed_basic_block_forward.4} parent=5 // pred_fallthru
      _
    %p136 = scmp.le.s32.totalorder 1, %s9
    %p137 = scmp.lt.s32.totalorder %s9, 3
    %p138 = pnand %p136, %p137
    %p139 = pneg %p138
    // Predicated region
    $region29: #{packed_basic_block_forward.4} parent=5 // pred_check
      _
    $region30: #{packed_basic_block_forward.4} parent=5 // pred_check_branch
      %141 = sbr.rel (%p138) target = $region32
    $region31: #{packed_basic_block_forward.4} parent=5 // pred_region
      %s142 = ssub.s32 %s9, 1
      %p143 = scmp.lt.s32.totalorder %s14, 1
      %s144 = scalar_select %p143, %s14, 1
      %s145 = smul.addr %s144, 32
      %s146 = smul.addr %s145, 4
      %s147 = scalar_lea.vmem %s0, %s146
      %p148 = pneg %p35
      %p149 = pneg %p32
      %p150 = pneg %p56
      %p151 = pneg %p53
      %p152 = pneg %p77
      %p153 = pneg %p74
      %p154 = pneg %p103
      %p155 = pneg %p100
      %p156 = scmp.lt.s32.totalorder %s14, 1
      %s157 = scalar_select %p156, %s14, 1
      %s158 = smul.addr %s157, 32
      %s159 = smul.addr %s158, 4
      %s160 = scalar_lea.vmem %s3, %s159
      %p161 = scmp.lt.s32.totalorder %s14, 1
      %s162 = scalar_select %p161, %s14, 1
      %s163 = smul.addr %s162, 32
      %s164 = smul.addr %s163, 4
      %s165 = scalar_lea.vmem %s0, %s164
      %p166 = scmp.lt.s32.totalorder %s14, 1
      %s167 = scalar_select %p166, %s14, 1
      %s168 = smul.addr %s167, 32
      %s169 = smul.addr %s168, 4
      %s170 = scalar_lea.vmem %s3, %s169
      %v172 = vld [vmem:[%s165] sm:$0xf]
      %v173 = vld [vmem:[%s165 + $0x4] sm:$0xf]
      %v174 = vld [vmem:[%s165 + $0x8] sm:$0xf]
      %v175 = vld [vmem:[%s165 + $0xc] sm:$0xf]
      %v176 = vld [vmem:[%s165 + $0x10] sm:$0xf]
      %v177 = vld [vmem:[%s165 + $0x14] sm:$0xf]
      %v178 = vld [vmem:[%s165 + $0x18] sm:$0xf]
      %v179 = vld [vmem:[%s165 + $0x1c] sm:$0xf]
      %v180 = vld [vmem:[%s165 + $0x20] sm:$0xf]
      %v181 = vld [vmem:[%s165 + $0x24] sm:$0xf]
      %v182 = vld [vmem:[%s165 + $0x28] sm:$0xf]
      %v183 = vld [vmem:[%s165 + $0x2c] sm:$0xf]
      %v184 = vld [vmem:[%s165 + $0x30] sm:$0xf]
      %v185 = vld [vmem:[%s165 + $0x34] sm:$0xf]
      %v186 = vld [vmem:[%s165 + $0x38] sm:$0xf]
      %v187 = vld [vmem:[%s165 + $0x3c] sm:$0xf]
      %v188 = vld [vmem:[%s165 + $0x40] sm:$0xf]
      %v189 = vld [vmem:[%s165 + $0x44] sm:$0xf]
      %v190 = vld [vmem:[%s165 + $0x48] sm:$0xf]
      %v191 = vld [vmem:[%s165 + $0x4c] sm:$0xf]
      %v192 = vld [vmem:[%s165 + $0x50] sm:$0xf]
      %v193 = vld [vmem:[%s165 + $0x54] sm:$0xf]
      %v194 = vld [vmem:[%s165 + $0x58] sm:$0xf]
      %v195 = vld [vmem:[%s165 + $0x5c] sm:$0xf]
      %v196 = vld [vmem:[%s165 + $0x60] sm:$0xf]
      %v197 = vld [vmem:[%s165 + $0x64] sm:$0xf]
      %v198 = vld [vmem:[%s165 + $0x68] sm:$0xf]
      %v199 = vld [vmem:[%s165 + $0x6c] sm:$0xf]
      %v200 = vld [vmem:[%s165 + $0x70] sm:$0xf]
      %v201 = vld [vmem:[%s165 + $0x74] sm:$0xf]
      %v202 = vld [vmem:[%s165 + $0x78] sm:$0xf]
      %v203 = vld [vmem:[%s165 + $0x7c] sm:$0xf]
      %v204 = vld [vmem:[%s1] sm:$0xf]
      %v205 = vld [vmem:[%s1 + $0x4] sm:$0xf]
      %v206 = vld [vmem:[%s1 + $0x8] sm:$0xf]
      %v207 = vld [vmem:[%s1 + $0xc] sm:$0xf]
      %v208 = vld [vmem:[%s1 + $0x10] sm:$0xf]
      %v209 = vld [vmem:[%s1 + $0x14] sm:$0xf]
      %v210 = vld [vmem:[%s1 + $0x18] sm:$0xf]
      %v211 = vld [vmem:[%s1 + $0x1c] sm:$0xf]
      %v212 = vld [vmem:[%s1 + $0x20] sm:$0xf]
      %v213 = vld [vmem:[%s1 + $0x24] sm:$0xf]
      %v214 = vld [vmem:[%s1 + $0x28] sm:$0xf]
      %v215 = vld [vmem:[%s1 + $0x2c] sm:$0xf]
      %v216 = vld [vmem:[%s1 + $0x30] sm:$0xf]
      %v217 = vld [vmem:[%s1 + $0x34] sm:$0xf]
      %v218 = vld [vmem:[%s1 + $0x38] sm:$0xf]
      %v219 = vld [vmem:[%s1 + $0x3c] sm:$0xf]
      %v220 = vld [vmem:[%s2] sm:$0x1]
      %v222 = vlaneseq
      %v223 = vshrl.u32 %v222, 7
      %v224 = vsub.s32 0, %v223
      %v225 = vrot.slane %v220, %v224
      %v259 = vunpack.c.l.b16 %v172
      %v260 = vunpack.c.l.b16 %v173
      %v261 = vunpack.c.l.b16 %v174
      %v262 = vunpack.c.l.b16 %v175
      %v263 = vunpack.c.l.b16 %v176
      %v264 = vunpack.c.l.b16 %v177
      %v265 = vunpack.c.l.b16 %v178
      %v266 = vunpack.c.l.b16 %v179
      %v267 = vunpack.c.l.b16 %v180
      %v268 = vunpack.c.l.b16 %v181
      %v269 = vunpack.c.l.b16 %v182
      %v270 = vunpack.c.l.b16 %v183
      %v271 = vunpack.c.l.b16 %v184
      %v272 = vunpack.c.l.b16 %v185
      %v273 = vunpack.c.l.b16 %v186
      %v274 = vunpack.c.l.b16 %v187
      %v275 = vunpack.c.l.b16 %v188
      %v276 = vunpack.c.l.b16 %v189
      %v277 = vunpack.c.l.b16 %v190
      %v278 = vunpack.c.l.b16 %v191
      %v279 = vunpack.c.l.b16 %v192
      %v280 = vunpack.c.l.b16 %v193
      %v281 = vunpack.c.l.b16 %v194
      %v282 = vunpack.c.l.b16 %v195
      %v283 = vunpack.c.l.b16 %v196
      %v284 = vunpack.c.l.b16 %v197
      %v285 = vunpack.c.l.b16 %v198
      %v286 = vunpack.c.l.b16 %v199
      %v287 = vunpack.c.l.b16 %v200
      %v288 = vunpack.c.l.b16 %v201
      %v289 = vunpack.c.l.b16 %v202
      %v290 = vunpack.c.l.b16 %v203
      %v291 = vpack.c.b16 %v260, %v259
      %v292 = vpack.c.b16 %v262, %v261
      %v293 = vpack.c.b16 %v264, %v263
      %v294 = vpack.c.b16 %v266, %v265
      %v295 = vpack.c.b16 %v268, %v267
      %v296 = vpack.c.b16 %v270, %v269
      %v297 = vpack.c.b16 %v272, %v271
      %v298 = vpack.c.b16 %v274, %v273
      %v299 = vpack.c.b16 %v276, %v275
      %v300 = vpack.c.b16 %v278, %v277
      %v301 = vpack.c.b16 %v280, %v279
      %v302 = vpack.c.b16 %v282, %v281
      %v303 = vpack.c.b16 %v284, %v283
      %v304 = vpack.c.b16 %v286, %v285
      %v305 = vpack.c.b16 %v288, %v287
      %v306 = vpack.c.b16 %v290, %v289
      %v339 = vunpack.c.l.b16 %v204
      %v340 = vunpack.c.l.b16 %v205
      %v341 = vunpack.c.l.b16 %v206
      %v342 = vunpack.c.l.b16 %v207
      %v343 = vunpack.c.l.b16 %v208
      %v344 = vunpack.c.l.b16 %v209
      %v345 = vunpack.c.l.b16 %v210
      %v346 = vunpack.c.l.b16 %v211
      %v347 = vunpack.c.l.b16 %v212
      %v348 = vunpack.c.l.b16 %v213
      %v349 = vunpack.c.l.b16 %v214
      %v350 = vunpack.c.l.b16 %v215
      %v351 = vunpack.c.l.b16 %v216
      %v352 = vunpack.c.l.b16 %v217
      %v353 = vunpack.c.l.b16 %v218
      %v354 = vunpack.c.l.b16 %v219
      %v355 = vpack.c.b16 %v340, %v339
      %v356 = vpack.c.b16 %v342, %v341
      %v357 = vpack.c.b16 %v344, %v343
      %v358 = vpack.c.b16 %v346, %v345
      %v359 = vpack.c.b16 %v348, %v347
      %v360 = vpack.c.b16 %v350, %v349
      %v361 = vpack.c.b16 %v352, %v351
      %v362 = vpack.c.b16 %v354, %v353
      %371 = vmatprep.subr.bf16.mxu0 0
      %372 = vmatpush1.bf16.msra.mxu0 %v362
      %373 = vmatprep.subr.bf16.mxu0 0
      %374 = vmatpush1.bf16.msra.mxu0 %v361
      %375 = vmatprep.subr.bf16.mxu0 0
      %376 = vmatpush1.bf16.msra.mxu0 %v360
      %377 = vmatprep.subr.bf16.mxu0 0
      %378 = vmatpush1.bf16.msra.mxu0 %v359
      %379 = vmatprep.subr.bf16.mxu0 0
      %380 = vmatpush1.bf16.msra.mxu0 %v358
      %381 = vmatprep.subr.bf16.mxu0 0
      %382 = vmatpush1.bf16.msra.mxu0 %v357
      %383 = vmatprep.subr.bf16.mxu0 0
      %384 = vmatpush1.bf16.msra.mxu0 %v356
      %385 = vmatprep.subr.bf16.mxu0 0
      %386 = vmatpush1.bf16.msra.mxu0 %v355
      %387 = vmatprep.subr.bf16.mxu0 0
      %388 = vmatpush2.bf16.msra.mxu0 0
      %389 = vmatprep.subr.bf16.mxu0 0
      %390 = vmatpush2.bf16.msra.mxu0 0
      %391 = vmatprep.subr.bf16.mxu0 0
      %392 = vmatpush2.bf16.msra.mxu0 0
      %393 = vmatprep.subr.bf16.mxu0 0
      %394 = vmatpush2.bf16.msra.mxu0 0
      %395 = vmatprep.subr.bf16.mxu0 0
      %396 = vmatpush2.bf16.msra.mxu0 0
      %397 = vmatprep.subr.bf16.mxu0 0
      %398 = vmatpush2.bf16.msra.mxu0 0
      %399 = vmatprep.subr.bf16.mxu0 0
      %400 = vmatpush2.bf16.msra.mxu0 0
      %401 = vmatprep.subr.bf16.mxu0 0
      %402 = vmatpush2.bf16.msra.mxu0 0
      %403 = vmatprep.mubr.bf16.mxu0 0
      %404 = vmatmul.mubr.bf16.gmra.mxu0 %v291
      %v405 = vpop.f32.mrf.mxu0
      %v406 = vadd.f32 %v225, %v405
      %v407 = vpop.f32.mrf.mxu0
      %v408 = vpop.f32.mrf.mxu0
      %v409 = vadd.f32 %v225, %v408
      %v410 = vpop.f32.mrf.mxu0
      %411 = vmatprep.mubr.bf16.mxu0 0
      %412 = vmatmul.mubr.bf16.gmra.mxu0 %v292
      %v413 = vpop.f32.mrf.mxu0
      %v414 = vadd.f32 %v225, %v413
      %v415 = vpop.f32.mrf.mxu0
      %v416 = vpop.f32.mrf.mxu0
      %v417 = vadd.f32 %v225, %v416
      %v418 = vpop.f32.mrf.mxu0
      %419 = vmatprep.mubr.bf16.mxu0 0
      %420 = vmatmul.mubr.bf16.gmra.mxu0 %v293
      %v421 = vpop.f32.mrf.mxu0
      %v422 = vadd.f32 %v225, %v421
      %v423 = vpop.f32.mrf.mxu0
      %v424 = vpop.f32.mrf.mxu0
      %v425 = vadd.f32 %v225, %v424
      %v426 = vpop.f32.mrf.mxu0
      %427 = vmatprep.mubr.bf16.mxu0 0
      %428 = vmatmul.mubr.bf16.gmra.mxu0 %v294
      %v429 = vpop.f32.mrf.mxu0
      %v430 = vadd.f32 %v225, %v429
      %v431 = vpop.f32.mrf.mxu0
      %v432 = vpop.f32.mrf.mxu0
      %v433 = vadd.f32 %v225, %v432
      %v434 = vpop.f32.mrf.mxu0
      %435 = vmatprep.mubr.bf16.mxu0 0
      %436 = vmatmul.mubr.bf16.gmra.mxu0 %v295
      %v437 = vpop.f32.mrf.mxu0
      %v438 = vadd.f32 %v225, %v437
      %v439 = vpop.f32.mrf.mxu0
      %v440 = vpop.f32.mrf.mxu0
      %v441 = vadd.f32 %v225, %v440
      %v442 = vpop.f32.mrf.mxu0
      %443 = vmatprep.mubr.bf16.mxu0 0
      %444 = vmatmul.mubr.bf16.gmra.mxu0 %v296
      %v445 = vpop.f32.mrf.mxu0
      %v446 = vadd.f32 %v225, %v445
      %v447 = vpop.f32.mrf.mxu0
      %v448 = vpop.f32.mrf.mxu0
      %v449 = vadd.f32 %v225, %v448
      %v450 = vpop.f32.mrf.mxu0
      %451 = vmatprep.mubr.bf16.mxu0 0
      %452 = vmatmul.mubr.bf16.gmra.mxu0 %v297
      %v453 = vpop.f32.mrf.mxu0
      %v454 = vadd.f32 %v225, %v453
      %v455 = vpop.f32.mrf.mxu0
      %v456 = vpop.f32.mrf.mxu0
      %v457 = vadd.f32 %v225, %v456
      %v458 = vpop.f32.mrf.mxu0
      %459 = vmatprep.mubr.bf16.mxu0 0
      %460 = vmatmul.mubr.bf16.gmra.mxu0 %v298
      %v461 = vpop.f32.mrf.mxu0
      %v462 = vadd.f32 %v225, %v461
      %v463 = vpop.f32.mrf.mxu0
      %v464 = vpop.f32.mrf.mxu0
      %v465 = vadd.f32 %v225, %v464
      %v466 = vpop.f32.mrf.mxu0
      %467 = vmatprep.mubr.bf16.mxu0 0
      %468 = vmatmul.mubr.bf16.gmra.mxu0 %v299
      %v469 = vpop.f32.mrf.mxu0
      %v470 = vadd.f32 %v225, %v469
      %v471 = vpop.f32.mrf.mxu0
      %v472 = vpop.f32.mrf.mxu0
      %v473 = vadd.f32 %v225, %v472
      %v474 = vpop.f32.mrf.mxu0
      %475 = vmatprep.mubr.bf16.mxu0 0
      %476 = vmatmul.mubr.bf16.gmra.mxu0 %v300
      %v477 = vpop.f32.mrf.mxu0
      %v478 = vadd.f32 %v225, %v477
      %v479 = vpop.f32.mrf.mxu0
      %v480 = vpop.f32.mrf.mxu0
      %v481 = vadd.f32 %v225, %v480
      %v482 = vpop.f32.mrf.mxu0
      %483 = vmatprep.mubr.bf16.mxu0 0
      %484 = vmatmul.mubr.bf16.gmra.mxu0 %v301
      %v485 = vpop.f32.mrf.mxu0
      %v486 = vadd.f32 %v225, %v485
      %v487 = vpop.f32.mrf.mxu0
      %v488 = vpop.f32.mrf.mxu0
      %v489 = vadd.f32 %v225, %v488
      %v490 = vpop.f32.mrf.mxu0
      %491 = vmatprep.mubr.bf16.mxu0 0
      %492 = vmatmul.mubr.bf16.gmra.mxu0 %v302
      %v493 = vpop.f32.mrf.mxu0
      %v494 = vadd.f32 %v225, %v493
      %v495 = vpop.f32.mrf.mxu0
      %v496 = vpop.f32.mrf.mxu0
      %v497 = vadd.f32 %v225, %v496
      %v498 = vpop.f32.mrf.mxu0
      %499 = vmatprep.mubr.bf16.mxu0 0
      %500 = vmatmul.mubr.bf16.gmra.mxu0 %v303
      %v501 = vpop.f32.mrf.mxu0
      %v502 = vadd.f32 %v225, %v501
      %v503 = vpop.f32.mrf.mxu0
      %v504 = vpop.f32.mrf.mxu0
      %v505 = vadd.f32 %v225, %v504
      %v506 = vpop.f32.mrf.mxu0
      %507 = vmatprep.mubr.bf16.mxu0 0
      %508 = vmatmul.mubr.bf16.gmra.mxu0 %v304
      %v509 = vpop.f32.mrf.mxu0
      %v510 = vadd.f32 %v225, %v509
      %v511 = vpop.f32.mrf.mxu0
      %v512 = vpop.f32.mrf.mxu0
      %v513 = vadd.f32 %v225, %v512
      %v514 = vpop.f32.mrf.mxu0
      %515 = vmatprep.mubr.bf16.mxu0 0
      %516 = vmatmul.mubr.bf16.gmra.mxu0 %v305
      %v517 = vpop.f32.mrf.mxu0
      %v518 = vadd.f32 %v225, %v517
      %v519 = vpop.f32.mrf.mxu0
      %v520 = vpop.f32.mrf.mxu0
      %v521 = vadd.f32 %v225, %v520
      %v522 = vpop.f32.mrf.mxu0
      %523 = vmatprep.mubr.bf16.mxu0 0
      %524 = vmatmul.mubr.bf16.gmra.mxu0 %v306
      %v525 = vpop.f32.mrf.mxu0
      %v526 = vadd.f32 %v225, %v525
      %v527 = vpop.f32.mrf.mxu0
      %v528 = vpop.f32.mrf.mxu0
      %v529 = vadd.f32 %v225, %v528
      %v530 = vpop.f32.mrf.mxu0
      %531 = vdwg.mxu0
      %v532 = vpack.c.bf16 %v409, %v406
      %v533 = vpack.c.bf16 %v417, %v414
      %v534 = vpack.c.bf16 %v425, %v422
      %v535 = vpack.c.bf16 %v433, %v430
      %v536 = vpack.c.bf16 %v441, %v438
      %v537 = vpack.c.bf16 %v449, %v446
      %v538 = vpack.c.bf16 %v457, %v454
      %v539 = vpack.c.bf16 %v465, %v462
      %v540 = vpack.c.bf16 %v473, %v470
      %v541 = vpack.c.bf16 %v481, %v478
      %v542 = vpack.c.bf16 %v489, %v486
      %v543 = vpack.c.bf16 %v497, %v494
      %v544 = vpack.c.bf16 %v505, %v502
      %v545 = vpack.c.bf16 %v513, %v510
      %v546 = vpack.c.bf16 %v521, %v518
      %v547 = vpack.c.bf16 %v529, %v526
      %v564 = vunpack.c.l.b16 %v532
      %v565 = vunpack.c.h.b16 %v532
      %v566 = vunpack.c.l.b16 %v533
      %v567 = vunpack.c.h.b16 %v533
      %v568 = vunpack.c.l.b16 %v534
      %v569 = vunpack.c.h.b16 %v534
      %v570 = vunpack.c.l.b16 %v535
      %v571 = vunpack.c.h.b16 %v535
      %v572 = vunpack.c.l.b16 %v536
      %v573 = vunpack.c.h.b16 %v536
      %v574 = vunpack.c.l.b16 %v537
      %v575 = vunpack.c.h.b16 %v537
      %v576 = vunpack.c.l.b16 %v538
      %v577 = vunpack.c.h.b16 %v538
      %v578 = vunpack.c.l.b16 %v539
      %v579 = vunpack.c.h.b16 %v539
      %v580 = vunpack.c.l.b16 %v540
      %v581 = vunpack.c.h.b16 %v540
      %v582 = vunpack.c.l.b16 %v541
      %v583 = vunpack.c.h.b16 %v541
      %v584 = vunpack.c.l.b16 %v542
      %v585 = vunpack.c.h.b16 %v542
      %v586 = vunpack.c.l.b16 %v543
      %v587 = vunpack.c.h.b16 %v543
      %v588 = vunpack.c.l.b16 %v544
      %v589 = vunpack.c.h.b16 %v544
      %v590 = vunpack.c.l.b16 %v545
      %v591 = vunpack.c.h.b16 %v545
      %v592 = vunpack.c.l.b16 %v546
      %v593 = vunpack.c.h.b16 %v546
      %v594 = vunpack.c.l.b16 %v547
      %v595 = vunpack.c.h.b16 %v547
      %v596 = vpack.c.b16 %v564, %v564
      %v597 = vpack.c.b16 %v565, %v565
      %v598 = vpack.c.b16 %v566, %v566
      %v599 = vpack.c.b16 %v567, %v567
      %v600 = vpack.c.b16 %v568, %v568
      %v601 = vpack.c.b16 %v569, %v569
      %v602 = vpack.c.b16 %v570, %v570
      %v603 = vpack.c.b16 %v571, %v571
      %v604 = vpack.c.b16 %v572, %v572
      %v605 = vpack.c.b16 %v573, %v573
      %v606 = vpack.c.b16 %v574, %v574
      %v607 = vpack.c.b16 %v575, %v575
      %v608 = vpack.c.b16 %v576, %v576
      %v609 = vpack.c.b16 %v577, %v577
      %v610 = vpack.c.b16 %v578, %v578
      %v611 = vpack.c.b16 %v579, %v579
      %v612 = vpack.c.b16 %v580, %v580
      %v613 = vpack.c.b16 %v581, %v581
      %v614 = vpack.c.b16 %v582, %v582
      %v615 = vpack.c.b16 %v583, %v583
      %v616 = vpack.c.b16 %v584, %v584
      %v617 = vpack.c.b16 %v585, %v585
      %v618 = vpack.c.b16 %v586, %v586
      %v619 = vpack.c.b16 %v587, %v587
      %v620 = vpack.c.b16 %v588, %v588
      %v621 = vpack.c.b16 %v589, %v589
      %v622 = vpack.c.b16 %v590, %v590
      %v623 = vpack.c.b16 %v591, %v591
      %v624 = vpack.c.b16 %v592, %v592
      %v625 = vpack.c.b16 %v593, %v593
      %v626 = vpack.c.b16 %v594, %v594
      %v627 = vpack.c.b16 %v595, %v595
      %660 = vst [vmem:[%s170] sm:$0xf] %v596
      %661 = vst [vmem:[%s170 + $0x4] sm:$0xf] %v597
      %662 = vst [vmem:[%s170 + $0x8] sm:$0xf] %v598
      %663 = vst [vmem:[%s170 + $0xc] sm:$0xf] %v599
      %664 = vst [vmem:[%s170 + $0x10] sm:$0xf] %v600
      %665 = vst [vmem:[%s170 + $0x14] sm:$0xf] %v601
      %666 = vst [vmem:[%s170 + $0x18] sm:$0xf] %v602
      %667 = vst [vmem:[%s170 + $0x1c] sm:$0xf] %v603
      %668 = vst [vmem:[%s170 + $0x20] sm:$0xf] %v604
      %669 = vst [vmem:[%s170 + $0x24] sm:$0xf] %v605
      %670 = vst [vmem:[%s170 + $0x28] sm:$0xf] %v606
      %671 = vst [vmem:[%s170 + $0x2c] sm:$0xf] %v607
      %672 = vst [vmem:[%s170 + $0x30] sm:$0xf] %v608
      %673 = vst [vmem:[%s170 + $0x34] sm:$0xf] %v609
      %674 = vst [vmem:[%s170 + $0x38] sm:$0xf] %v610
      %675 = vst [vmem:[%s170 + $0x3c] sm:$0xf] %v611
      %676 = vst [vmem:[%s170 + $0x40] sm:$0xf] %v612
      %677 = vst [vmem:[%s170 + $0x44] sm:$0xf] %v613
      %678 = vst [vmem:[%s170 + $0x48] sm:$0xf] %v614
      %679 = vst [vmem:[%s170 + $0x4c] sm:$0xf] %v615
      %680 = vst [vmem:[%s170 + $0x50] sm:$0xf] %v616
      %681 = vst [vmem:[%s170 + $0x54] sm:$0xf] %v617
      %682 = vst [vmem:[%s170 + $0x58] sm:$0xf] %v618
      %683 = vst [vmem:[%s170 + $0x5c] sm:$0xf] %v619
      %684 = vst [vmem:[%s170 + $0x60] sm:$0xf] %v620
      %685 = vst [vmem:[%s170 + $0x64] sm:$0xf] %v621
      %686 = vst [vmem:[%s170 + $0x68] sm:$0xf] %v622
      %687 = vst [vmem:[%s170 + $0x6c] sm:$0xf] %v623
      %688 = vst [vmem:[%s170 + $0x70] sm:$0xf] %v624
      %689 = vst [vmem:[%s170 + $0x74] sm:$0xf] %v625
      %690 = vst [vmem:[%s170 + $0x78] sm:$0xf] %v626
      %691 = vst [vmem:[%s170 + $0x7c] sm:$0xf] %v627
      %p692 = scmp.lt.s32.totalorder %s14, 1
      %s693 = scalar_select %p692, %s14, 1
      %s694 = smul.addr %s693, 32
      %s695 = smul.addr %s694, 4
      %s696 = scalar_lea.vmem %s3, %s695
      // Predicated region
      $region33: #{packed_basic_block_forward.4} parent=31 // pred_check
        %p697 = pneg %p100
      $region34: #{packed_basic_block_forward.4} parent=31 // pred_check_branch
        %699 = sbr.rel (%p697) target = $region36
      $region35: #{packed_basic_block_forward.4} parent=31 // pred_region
        _
      $region36: #{packed_basic_block_forward.4} parent=31 // pred_fallthru
        _
    $region32: #{packed_basic_block_forward.4} parent=5 // pred_fallthru
      _
    %p700 = scmp.le.s32.totalorder 2, %s9
    // Predicated region
    $region37: #{packed_basic_block_forward.4} parent=5 // pred_check
      %p701 = pneg %p700
    $region38: #{packed_basic_block_forward.4} parent=5 // pred_check_branch
      %703 = sbr.rel (%p701) target = $region40
    $region39: #{packed_basic_block_forward.4} parent=5 // pred_region
      %s704 = ssub.s32 %s9, 2
      // Predicated region
      $region41: #{packed_basic_block_forward.4} parent=39 // pred_check
        %p705 = pneg %p106
      $region42: #{packed_basic_block_forward.4} parent=39 // pred_check_branch
        %707 = sbr.rel (%p705) target = $region44
      $region43: #{packed_basic_block_forward.4} parent=39 // pred_region
        %p708 = scmp.lt.s32.totalorder %s15, 1
        %s709 = scalar_select %p708, %s15, 1
        %s710 = smul.addr %s709, 32
        %s711 = smul.addr %s710, 4
        %s712 = scalar_lea.vmem %s3, %s711
      $region44: #{packed_basic_block_forward.4} parent=39 // pred_fallthru
        _
    $region40: #{packed_basic_block_forward.4} parent=5 // pred_fallthru
      _
  $region6: #{packed_basic_block_forward.4} parent=0 // loop_footer
    %s13 = sadd.s32 1, %s9
  $region7: #{packed_basic_block_forward.4} parent=0 // loop_footer_branch
    %8 = sbr.rel target = $region3
  $region8: #{packed_basic_block_forward.4} parent=0 // loop_exit
    _

// kernel: packed_basic_block_forward.3
$region0: #{packed_basic_block_forward.3}
  #allocation0 [shape = 'u32[]', space=smem, size = 0x4, offset = 0x4, fixed_abs, tag = 'smem constant byte address 0x4 - core index']
  #allocation1 [shape = 'u32[144,128]{1,0:T(1,128)}', space=vmem, size = 0x12000, scoped, tag = 'internal scratch']
  #allocation2 [shape = 'bf16[18,18,128]{2,1,0:T(8,128)(2,1)}', space=vmem, size = 0x1b000, scoped, tag = 'scratch operand']
  %s0 = inlined_call_operand.vmem [shape: bf16[2,16,16,128], index: 0, kind: input, shape index: {}]
  %s1 = inlined_call_operand.vmem [shape: bf16[3,384,128], index: 1, kind: input, shape index: {}]
  %s2 = inlined_call_operand.vmem [shape: f32[1,128], index: 2, kind: input, shape index: {}]
  %s3 = inlined_call_operand.vmem [shape: bf16[2,256,128], index: 3, kind: output, shape index: {}]
  %s4 = sld [smem:[#allocation0]]
  $region45: #{packed_basic_block_forward.3} parent=0
    _
  %s6 = ssub.s32 1, %s4
  %s7 = scalar_select 0, %s6, %s4
  loop: start=0, step=1, limit=4
  $region2: #{packed_basic_block_forward.3} parent=0 // loop_pre_header
    _
  $region3: #{packed_basic_block_forward.3} parent=0 // loop_header
    %s9 = sphi 0, %s13
    %p10 = scmp.ge.s32.totalorder %s9, 4
    %s19 = sphi 0, %s21
    %s22 = sphi 0, %s19
    %s23 = sphi 0, %s22
    %s39 = sphi 0, %s23
    %s43 = sphi 0, %s43
    %s45 = sphi 0, %s43
    %s46 = sphi 0, %s45
    %s60 = sphi 0, %s46
    %s64 = sphi 0, %s64
    %s66 = sphi 0, %s64
    %s67 = sphi 0, %s66
    %s81 = sphi 0, %s67
    %s87 = sphi 0, %s89
    %s90 = sphi 0, %s87
    %s91 = sphi 0, %s90
    %s107 = sphi 0, %s91
  $region4: #{packed_basic_block_forward.3} parent=0 // loop_header_branch
    %12 = sbr.rel (%p10) target = $region8
  $region5: #{packed_basic_block_forward.3} parent=0 // loop_body
    %s14 = ssub.s32 %s9, 1
    %s15 = ssub.s32 %s9, 2
    %s16 = sadd.s32 %s9, 1
    %s17 = ssub.s32 %s9, %s16
    %p18 = scmp.eq.s32.totalorder %s17, 0
    %s20 = sadd.s32 %s19, 1
    %s21 = scalar_select %p18, %s19, %s20
    %p24 = pneg %p18
    %p25 = scmp.eq.s32.totalorder %s9, 1
    %p26 = por %p24, %p25
    %p27 = scmp.ne.s32.totalorder %s19, %s22
    %p28 = scmp.eq.s32.totalorder %s9, 0
    %p29 = por %p27, %p28
    %p30 = scmp.ne.s32.totalorder %s19, %s22
    %p31 = scmp.eq.s32.totalorder %s14, 1
    %p32 = por %p30, %p31
    %p33 = scmp.ne.s32.totalorder %s22, %s23
    %p34 = scmp.eq.s32.totalorder %s14, 0
    %p35 = por %p33, %p34
    %p36 = scmp.ne.s32.totalorder %s22, %s23
    %p37 = scmp.eq.s32.totalorder %s15, 1
    %p38 = por %p36, %p37
    %p40 = scmp.ne.s32.totalorder %s23, %s39
    %p41 = scmp.eq.s32.totalorder %s15, 0
    %p42 = por %p40, %p41
    %s44 = sadd.s32 %s43, 1
    %p47 = scmp.eq.s32.totalorder %s9, 1
    %p48 = scmp.ne.s32.totalorder %s43, %s45
    %p49 = scmp.eq.s32.totalorder %s9, 0
    %p50 = por %p48, %p49
    %p51 = scmp.ne.s32.totalorder %s43, %s45
    %p52 = scmp.eq.s32.totalorder %s14, 1
    %p53 = por %p51, %p52
    %p54 = scmp.ne.s32.totalorder %s45, %s46
    %p55 = scmp.eq.s32.totalorder %s14, 0
    %p56 = por %p54, %p55
    %p57 = scmp.ne.s32.totalorder %s45, %s46
    %p58 = scmp.eq.s32.totalorder %s15, 1
    %p59 = por %p57, %p58
    %p61 = scmp.ne.s32.totalorder %s46, %s60
    %p62 = scmp.eq.s32.totalorder %s15, 0
    %p63 = por %p61, %p62
    %s65 = sadd.s32 %s64, 1
    %p68 = scmp.eq.s32.totalorder %s9, 1
    %p69 = scmp.ne.s32.totalorder %s64, %s66
    %p70 = scmp.eq.s32.totalorder %s9, 0
    %p71 = por %p69, %p70
    %p72 = scmp.ne.s32.totalorder %s64, %s66
    %p73 = scmp.eq.s32.totalorder %s14, 1
    %p74 = por %p72, %p73
    %p75 = scmp.ne.s32.totalorder %s66, %s67
    %p76 = scmp.eq.s32.totalorder %s14, 0
    %p77 = por %p75, %p76
    %p78 = scmp.ne.s32.totalorder %s66, %s67
    %p79 = scmp.eq.s32.totalorder %s15, 1
    %p80 = por %p78, %p79
    %p82 = scmp.ne.s32.totalorder %s67, %s81
    %p83 = scmp.eq.s32.totalorder %s15, 0
    %p84 = por %p82, %p83
    %s85 = ssub.s32 %s9, %s16
    %p86 = scmp.eq.s32.totalorder %s85, 0
    %s88 = sadd.s32 %s87, 1
    %s89 = scalar_select %p86, %s87, %s88
    %p92 = pneg %p86
    %p93 = scmp.eq.s32.totalorder %s9, 1
    %p94 = por %p92, %p93
    %p95 = scmp.ne.s32.totalorder %s87, %s90
    %p96 = scmp.eq.s32.totalorder %s9, 0
    %p97 = por %p95, %p96
    %p98 = scmp.ne.s32.totalorder %s87, %s90
    %p99 = scmp.eq.s32.totalorder %s14, 1
    %p100 = por %p98, %p99
    %p101 = scmp.ne.s32.totalorder %s90, %s91
    %p102 = scmp.eq.s32.totalorder %s14, 0
    %p103 = por %p101, %p102
    %p104 = scmp.ne.s32.totalorder %s90, %s91
    %p105 = scmp.eq.s32.totalorder %s15, 1
    %p106 = por %p104, %p105
    %p108 = scmp.ne.s32.totalorder %s91, %s107
    %p109 = scmp.eq.s32.totalorder %s15, 0
    %p110 = por %p108, %p109
    %p111 = scmp.le.s32.totalorder 1, %s9
    %p112 = scmp.lt.s32.totalorder %s9, 3
    %p113 = pnand %p111, %p112
    %p114 = pneg %p113
    // Predicated region
    $region9: #{packed_basic_block_forward.3} parent=5 // pred_check
      _
    $region10: #{packed_basic_block_forward.3} parent=5 // pred_check_branch
      %116 = sbr.rel (%p113) target = $region12
    $region11: #{packed_basic_block_forward.3} parent=5 // pred_region
      %s117 = ssub.s32 %s9, 1
      // Predicated region
      $region13: #{packed_basic_block_forward.3} parent=11 // pred_check
        %p118 = pneg %p56
      $region14: #{packed_basic_block_forward.3} parent=11 // pred_check_branch
        %120 = sbr.rel (%p118) target = $region16
      $region15: #{packed_basic_block_forward.3} parent=11 // pred_region
        _
      $region16: #{packed_basic_block_forward.3} parent=11 // pred_fallthru
        _
      // Predicated region
      $region17: #{packed_basic_block_forward.3} parent=11 // pred_check
        %p121 = pneg %p77
      $region18: #{packed_basic_block_forward.3} parent=11 // pred_check_branch
        %123 = sbr.rel (%p121) target = $region20
      $region19: #{packed_basic_block_forward.3} parent=11 // pred_region
        _
      $region20: #{packed_basic_block_forward.3} parent=11 // pred_fallthru
        _
    $region12: #{packed_basic_block_forward.3} parent=5 // pred_fallthru
      _
    %p124 = scmp.lt.s32.totalorder %s9, 2
    // Predicated region
    $region21: #{packed_basic_block_forward.3} parent=5 // pred_check
      %p125 = pneg %p124
    $region22: #{packed_basic_block_forward.3} parent=5 // pred_check_branch
      %127 = sbr.rel (%p125) target = $region24
    $region23: #{packed_basic_block_forward.3} parent=5 // pred_region
      // Predicated region
      $region25: #{packed_basic_block_forward.3} parent=23 // pred_check
        %p128 = pneg %p29
      $region26: #{packed_basic_block_forward.3} parent=23 // pred_check_branch
        %130 = sbr.rel (%p128) target = $region28
      $region27: #{packed_basic_block_forward.3} parent=23 // pred_region
        %p131 = scmp.lt.s32.totalorder %s9, 1
        %s132 = scalar_select %p131, %s9, 1
        %s133 = smul.addr %s132, 32
        %s134 = smul.addr %s133, 4
        %s135 = scalar_lea.vmem %s0, %s134
      $region28: #{packed_basic_block_forward.3} parent=23 // pred_fallthru
        _
    $region24: #{packed_basic_block_forward.3} parent=5 // pred_fallthru
      _
    %p136 = scmp.le.s32.totalorder 1, %s9
    %p137 = scmp.lt.s32.totalorder %s9, 3
    %p138 = pnand %p136, %p137
    %p139 = pneg %p138
    // Predicated region
    $region29: #{packed_basic_block_forward.3} parent=5 // pred_check
      _
    $region30: #{packed_basic_block_forward.3} parent=5 // pred_check_branch
      %141 = sbr.rel (%p138) target = $region32
    $region31: #{packed_basic_block_forward.3} parent=5 // pred_region
      %s142 = ssub.s32 %s9, 1
      %p143 = scmp.lt.s32.totalorder %s14, 1
      %s144 = scalar_select %p143, %s14, 1
      %s145 = smul.addr %s144, 32
      %s146 = smul.addr %s145, 4
      %s147 = scalar_lea.vmem %s0, %s146
      %p148 = pneg %p35
      %p149 = pneg %p32
      %p150 = pneg %p56
      %p151 = pneg %p53
      %p152 = pneg %p77
      %p153 = pneg %p74
      %p154 = pneg %p103
      %p155 = pneg %p100
      %p156 = scmp.lt.s32.totalorder %s14, 1
      %s157 = scalar_select %p156, %s14, 1
      %s158 = smul.addr %s157, 32
      %s159 = smul.addr %s158, 4
      %s160 = scalar_lea.vmem %s3, %s159
      %p161 = scmp.lt.s32.totalorder %s14, 1
      %s162 = scalar_select %p161, %s14, 1
      %s163 = smul.addr %s162, 32
      %s164 = smul.addr %s163, 4
      %s165 = scalar_lea.vmem %s0, %s164
      %p166 = scmp.lt.s32.totalorder %s14, 1
      %s167 = scalar_select %p166, %s14, 1
      %s168 = smul.addr %s167, 32
      %s169 = smul.addr %s168, 4
      %s170 = scalar_lea.vmem %s3, %s169
      %172 = vst [vmem:[#allocation2] sm:$0xf] 0
      %173 = vst [vmem:[#allocation2 + $0x4] sm:$0xf] 0
      %174 = vst [vmem:[#allocation2 + $0x8] sm:$0x1] 0
      %175 = vst [vmem:[#allocation2 + $0xc] sm:$0xf] 0
      %176 = vst [vmem:[#allocation2 + $0x10] sm:$0xf] 0
      %177 = vst [vmem:[#allocation2 + $0x14] sm:$0x1] 0
      %178 = vst [vmem:[#allocation2 + $0x18] sm:$0xf] 0
      %179 = vst [vmem:[#allocation2 + $0x1c] sm:$0xf] 0
      %180 = vst [vmem:[#allocation2 + $0x20] sm:$0x1] 0
      %181 = vst [vmem:[#allocation2 + $0x24] sm:$0xf] 0
      %182 = vst [vmem:[#allocation2 + $0x28] sm:$0xf] 0
      %183 = vst [vmem:[#allocation2 + $0x2c] sm:$0x1] 0
      %184 = vst [vmem:[#allocation2 + $0x30] sm:$0xf] 0
      %185 = vst [vmem:[#allocation2 + $0x34] sm:$0xf] 0
      %186 = vst [vmem:[#allocation2 + $0x38] sm:$0x1] 0
      %187 = vst [vmem:[#allocation2 + $0x3c] sm:$0xf] 0
      %188 = vst [vmem:[#allocation2 + $0x40] sm:$0xf] 0
      %189 = vst [vmem:[#allocation2 + $0x44] sm:$0x1] 0
      %190 = vst [vmem:[#allocation2 + $0x48] sm:$0xf] 0
      %191 = vst [vmem:[#allocation2 + $0x4c] sm:$0xf] 0
      %192 = vst [vmem:[#allocation2 + $0x50] sm:$0x1] 0
      %193 = vst [vmem:[#allocation2 + $0x54] sm:$0xf] 0
      %194 = vst [vmem:[#allocation2 + $0x58] sm:$0xf] 0
      %195 = vst [vmem:[#allocation2 + $0x5c] sm:$0x1] 0
      %196 = vst [vmem:[#allocation2 + $0x60] sm:$0xf] 0
      %197 = vst [vmem:[#allocation2 + $0x64] sm:$0xf] 0
      %198 = vst [vmem:[#allocation2 + $0x68] sm:$0x1] 0
      %199 = vst [vmem:[#allocation2 + $0x6c] sm:$0xf] 0
      %200 = vst [vmem:[#allocation2 + $0x70] sm:$0xf] 0
      %201 = vst [vmem:[#allocation2 + $0x74] sm:$0x1] 0
      %202 = vst [vmem:[#allocation2 + $0x78] sm:$0xf] 0
      %203 = vst [vmem:[#allocation2 + $0x7c] sm:$0xf] 0
      %204 = vst [vmem:[#allocation2 + $0x80] sm:$0x1] 0
      %205 = vst [vmem:[#allocation2 + $0x84] sm:$0xf] 0
      %206 = vst [vmem:[#allocation2 + $0x88] sm:$0xf] 0
      %207 = vst [vmem:[#allocation2 + $0x8c] sm:$0x1] 0
      %208 = vst [vmem:[#allocation2 + $0x90] sm:$0xf] 0
      %209 = vst [vmem:[#allocation2 + $0x94] sm:$0xf] 0
      %210 = vst [vmem:[#allocation2 + $0x98] sm:$0x1] 0
      %211 = vst [vmem:[#allocation2 + $0x9c] sm:$0xf] 0
      %212 = vst [vmem:[#allocation2 + $0xa0] sm:$0xf] 0
      %213 = vst [vmem:[#allocation2 + $0xa4] sm:$0x1] 0
      %214 = vst [vmem:[#allocation2 + $0xa8] sm:$0xf] 0
      %215 = vst [vmem:[#allocation2 + $0xac] sm:$0xf] 0
      %216 = vst [vmem:[#allocation2 + $0xb0] sm:$0x1] 0
      %217 = vst [vmem:[#allocation2 + $0xb4] sm:$0xf] 0
      %218 = vst [vmem:[#allocation2 + $0xb8] sm:$0xf] 0
      %219 = vst [vmem:[#allocation2 + $0xbc] sm:$0x1] 0
      %220 = vst [vmem:[#allocation2 + $0xc0] sm:$0xf] 0
      %221 = vst [vmem:[#allocation2 + $0xc4] sm:$0xf] 0
      %222 = vst [vmem:[#allocation2 + $0xc8] sm:$0x1] 0
      %223 = vst [vmem:[#allocation2 + $0xcc] sm:$0xf] 0
      %224 = vst [vmem:[#allocation2 + $0xd0] sm:$0xf] 0
      %225 = vst [vmem:[#allocation2 + $0xd4] sm:$0x1] 0
      %v226 = vld [vmem:[%s165] sm:$0xf]
      %v227 = vld [vmem:[%s165 + $0x4] sm:$0xf]
      %v228 = vld [vmem:[%s165 + $0x8] sm:$0xf]
      %v229 = vld [vmem:[%s165 + $0xc] sm:$0xf]
      %v230 = vld [vmem:[%s165 + $0x10] sm:$0xf]
      %v231 = vld [vmem:[%s165 + $0x14] sm:$0xf]
      %v232 = vld [vmem:[%s165 + $0x18] sm:$0xf]
      %v233 = vld [vmem:[%s165 + $0x1c] sm:$0xf]
      %v234 = vld [vmem:[%s165 + $0x20] sm:$0xf]
      %v235 = vld [vmem:[%s165 + $0x24] sm:$0xf]
      %v236 = vld [vmem:[%s165 + $0x28] sm:$0xf]
      %v237 = vld [vmem:[%s165 + $0x2c] sm:$0xf]
      %v238 = vld [vmem:[%s165 + $0x30] sm:$0xf]
      %v239 = vld [vmem:[%s165 + $0x34] sm:$0xf]
      %v240 = vld [vmem:[%s165 + $0x38] sm:$0xf]
      %v241 = vld [vmem:[%s165 + $0x3c] sm:$0xf]
      %v242 = vld [vmem:[%s165 + $0x40] sm:$0xf]
      %v243 = vld [vmem:[%s165 + $0x44] sm:$0xf]
      %v244 = vld [vmem:[%s165 + $0x48] sm:$0xf]
      %v245 = vld [vmem:[%s165 + $0x4c] sm:$0xf]
      %v246 = vld [vmem:[%s165 + $0x50] sm:$0xf]
      %v247 = vld [vmem:[%s165 + $0x54] sm:$0xf]
      %v248 = vld [vmem:[%s165 + $0x58] sm:$0xf]
      %v249 = vld [vmem:[%s165 + $0x5c] sm:$0xf]
      %v250 = vld [vmem:[%s165 + $0x60] sm:$0xf]
      %v251 = vld [vmem:[%s165 + $0x64] sm:$0xf]
      %v252 = vld [vmem:[%s165 + $0x68] sm:$0xf]
      %v253 = vld [vmem:[%s165 + $0x6c] sm:$0xf]
      %v254 = vld [vmem:[%s165 + $0x70] sm:$0xf]
      %v255 = vld [vmem:[%s165 + $0x74] sm:$0xf]
      %v256 = vld [vmem:[%s165 + $0x78] sm:$0xf]
      %v257 = vld [vmem:[%s165 + $0x7c] sm:$0xf]
      %vm258 = vsmask.f32 256
      %vm259 = vsmask.f32 4368
      %vm260 = vmor %vm258, %vm259
      %v262 = vshrl.u32 %v226, 16
      %v264 = vrot.slane %v262, 7
      %v265 = vshll.u32 %v226, 16
      %v267 = vor.u32 %v264, %v265
      %v268 = vrot.slane %v264, 4
      %v270 = vshrl.u32 %v227, 16
      %v272 = vrot.slane %v270, 7
      %v273 = vshll.u32 %v227, 16
      %v275 = vor.u32 %v272, %v273
      %v276 = vsel %vm260, %v268, %v275
      %v277 = vrot.slane %v272, 4
      %v279 = vshrl.u32 %v228, 16
      %v281 = vrot.slane %v279, 7
      %v282 = vshll.u32 %v228, 16
      %v284 = vor.u32 %v281, %v282
      %v285 = vrot.slane %v281, 4
      %v287 = vshrl.u32 %v229, 16
      %v289 = vrot.slane %v287, 7
      %v290 = vshll.u32 %v229, 16
      %v292 = vor.u32 %v289, %v290
      %v293 = vsel %vm260, %v285, %v292
      %v294 = vrot.slane %v289, 4
      %v296 = vshrl.u32 %v230, 16
      %v298 = vrot.slane %v296, 7
      %v299 = vshll.u32 %v230, 16
      %v301 = vor.u32 %v298, %v299
      %v302 = vrot.slane %v298, 4
      %v304 = vshrl.u32 %v231, 16
      %v306 = vrot.slane %v304, 7
      %v307 = vshll.u32 %v231, 16
      %v309 = vor.u32 %v306, %v307
      %v310 = vsel %vm260, %v302, %v309
      %v311 = vrot.slane %v306, 4
      %v313 = vshrl.u32 %v232, 16
      %v315 = vrot.slane %v313, 7
      %v316 = vshll.u32 %v232, 16
      %v318 = vor.u32 %v315, %v316
      %v319 = vrot.slane %v315, 4
      %v321 = vshrl.u32 %v233, 16
      %v323 = vrot.slane %v321, 7
      %v324 = vshll.u32 %v233, 16
      %v326 = vor.u32 %v323, %v324
      %v327 = vsel %vm260, %v319, %v326
      %v328 = vrot.slane %v323, 4
      %v330 = vshrl.u32 %v234, 16
      %v332 = vrot.slane %v330, 7
      %v333 = vshll.u32 %v234, 16
      %v335 = vor.u32 %v332, %v333
      %v336 = vrot.slane %v332, 4
      %v338 = vshrl.u32 %v235, 16
      %v340 = vrot.slane %v338, 7
      %v341 = vshll.u32 %v235, 16
      %v343 = vor.u32 %v340, %v341
      %v344 = vsel %vm260, %v336, %v343
      %v345 = vrot.slane %v340, 4
      %v347 = vshrl.u32 %v236, 16
      %v349 = vrot.slane %v347, 7
      %v350 = vshll.u32 %v236, 16
      %v352 = vor.u32 %v349, %v350
      %v353 = vrot.slane %v349, 4
      %v355 = vshrl.u32 %v237, 16
      %v357 = vrot.slane %v355, 7
      %v358 = vshll.u32 %v237, 16
      %v360 = vor.u32 %v357, %v358
      %v361 = vsel %vm260, %v353, %v360
      %v362 = vrot.slane %v357, 4
      %v364 = vshrl.u32 %v238, 16
      %v366 = vrot.slane %v364, 7
      %v367 = vshll.u32 %v238, 16
      %v369 = vor.u32 %v366, %v367
      %v370 = vrot.slane %v366, 4
      %v372 = vshrl.u32 %v239, 16
      %v374 = vrot.slane %v372, 7
      %v375 = vshll.u32 %v239, 16
      %v377 = vor.u32 %v374, %v375
      %v378 = vsel %vm260, %v370, %v377
      %v379 = vrot.slane %v374, 4
      %v381 = vshrl.u32 %v240, 16
      %v383 = vrot.slane %v381, 7
      %v384 = vshll.u32 %v240, 16
      %v386 = vor.u32 %v383, %v384
      %v387 = vrot.slane %v383, 4
      %v389 = vshrl.u32 %v241, 16
      %v391 = vrot.slane %v389, 7
      %v392 = vshll.u32 %v241, 16
      %v394 = vor.u32 %v391, %v392
      %v395 = vsel %vm260, %v387, %v394
      %v396 = vrot.slane %v391, 4
      %v398 = vshrl.u32 %v242, 16
      %v400 = vrot.slane %v398, 7
      %v401 = vshll.u32 %v242, 16
      %v403 = vor.u32 %v400, %v401
      %v404 = vrot.slane %v400, 4
      %v406 = vshrl.u32 %v243, 16
      %v408 = vrot.slane %v406, 7
      %v409 = vshll.u32 %v243, 16
      %v411 = vor.u32 %v408, %v409
      %v412 = vsel %vm260, %v404, %v411
      %v413 = vrot.slane %v408, 4
      %v415 = vshrl.u32 %v244, 16
      %v417 = vrot.slane %v415, 7
      %v418 = vshll.u32 %v244, 16
      %v420 = vor.u32 %v417, %v418
      %v421 = vrot.slane %v417, 4
      %v423 = vshrl.u32 %v245, 16
      %v425 = vrot.slane %v423, 7
      %v426 = vshll.u32 %v245, 16
      %v428 = vor.u32 %v425, %v426
      %v429 = vsel %vm260, %v421, %v428
      %v430 = vrot.slane %v425, 4
      %v432 = vshrl.u32 %v246, 16
      %v434 = vrot.slane %v432, 7
      %v435 = vshll.u32 %v246, 16
      %v437 = vor.u32 %v434, %v435
      %v438 = vrot.slane %v434, 4
      %v440 = vshrl.u32 %v247, 16
      %v442 = vrot.slane %v440, 7
      %v443 = vshll.u32 %v247, 16
      %v445 = vor.u32 %v442, %v443
      %v446 = vsel %vm260, %v438, %v445
      %v447 = vrot.slane %v442, 4
      %v449 = vshrl.u32 %v248, 16
      %v451 = vrot.slane %v449, 7
      %v452 = vshll.u32 %v248, 16
      %v454 = vor.u32 %v451, %v452
      %v455 = vrot.slane %v451, 4
      %v457 = vshrl.u32 %v249, 16
      %v459 = vrot.slane %v457, 7
      %v460 = vshll.u32 %v249, 16
      %v462 = vor.u32 %v459, %v460
      %v463 = vsel %vm260, %v455, %v462
      %v464 = vrot.slane %v459, 4
      %v466 = vshrl.u32 %v250, 16
      %v468 = vrot.slane %v466, 7
      %v469 = vshll.u32 %v250, 16
      %v471 = vor.u32 %v468, %v469
      %v472 = vrot.slane %v468, 4
      %v474 = vshrl.u32 %v251, 16
      %v476 = vrot.slane %v474, 7
      %v477 = vshll.u32 %v251, 16
      %v479 = vor.u32 %v476, %v477
      %v480 = vsel %vm260, %v472, %v479
      %v481 = vrot.slane %v476, 4
      %v483 = vshrl.u32 %v252, 16
      %v485 = vrot.slane %v483, 7
      %v486 = vshll.u32 %v252, 16
      %v488 = vor.u32 %v485, %v486
      %v489 = vrot.slane %v485, 4
      %v491 = vshrl.u32 %v253, 16
      %v493 = vrot.slane %v491, 7
      %v494 = vshll.u32 %v253, 16
      %v496 = vor.u32 %v493, %v494
      %v497 = vsel %vm260, %v489, %v496
      %v498 = vrot.slane %v493, 4
      %v500 = vshrl.u32 %v254, 16
      %v502 = vrot.slane %v500, 7
      %v503 = vshll.u32 %v254, 16
      %v505 = vor.u32 %v502, %v503
      %v506 = vrot.slane %v502, 4
      %v508 = vshrl.u32 %v255, 16
      %v510 = vrot.slane %v508, 7
      %v511 = vshll.u32 %v255, 16
      %v513 = vor.u32 %v510, %v511
      %v514 = vsel %vm260, %v506, %v513
      %v515 = vrot.slane %v510, 4
      %v517 = vshrl.u32 %v256, 16
      %v519 = vrot.slane %v517, 7
      %v520 = vshll.u32 %v256, 16
      %v522 = vor.u32 %v519, %v520
      %v523 = vrot.slane %v519, 4
      %v525 = vshrl.u32 %v257, 16
      %v527 = vrot.slane %v525, 7
      %v528 = vshll.u32 %v257, 16
      %v530 = vor.u32 %v527, %v528
      %v531 = vsel %vm260, %v523, %v530
      %v532 = vrot.slane %v527, 4
      %s581 = scalar_lea.vmem [#allocation2], 12
      %vm582 = vcmask 1043456
      %vm583 = vsmask.f32 7938
      %vm584 = vmand %vm582, %vm583
      %v585 = vld [vmem:[%s581] sm:$0xf]
      %v586 = vsel %vm584, %v267, %v585
      %587 = vst [vmem:[%s581] sm:$0xf] %v586
      %588 = vst [vmem:[%s581 + $0x4] sm:$0xf] %v276
      %vm589 = vcmask 1040384
      %vm590 = vmand %vm589, %vm258
      %v591 = vld [vmem:[%s581 + $0x8] sm:$0x1]
      %v592 = vsel %vm590, %v277, %v591
      %593 = vst [vmem:[%s581 + $0x8] sm:$0x1] %v592
      %v594 = vld [vmem:[%s581 + $0xc] sm:$0xf]
      %v595 = vsel %vm584, %v284, %v594
      %596 = vst [vmem:[%s581 + $0xc] sm:$0xf] %v595
      %597 = vst [vmem:[%s581 + $0x10] sm:$0xf] %v293
      %v598 = vld [vmem:[%s581 + $0x14] sm:$0x1]
      %v599 = vsel %vm590, %v294, %v598
      %600 = vst [vmem:[%s581 + $0x14] sm:$0x1] %v599
      %v601 = vld [vmem:[%s581 + $0x18] sm:$0xf]
      %v602 = vsel %vm584, %v301, %v601
      %603 = vst [vmem:[%s581 + $0x18] sm:$0xf] %v602
      %604 = vst [vmem:[%s581 + $0x1c] sm:$0xf] %v310
      %v605 = vld [vmem:[%s581 + $0x20] sm:$0x1]
      %v606 = vsel %vm590, %v311, %v605
      %607 = vst [vmem:[%s581 + $0x20] sm:$0x1] %v606
      %v608 = vld [vmem:[%s581 + $0x24] sm:$0xf]
      %v609 = vsel %vm584, %v318, %v608
      %610 = vst [vmem:[%s581 + $0x24] sm:$0xf] %v609
      %611 = vst [vmem:[%s581 + $0x28] sm:$0xf] %v327
      %v612 = vld [vmem:[%s581 + $0x2c] sm:$0x1]
      %v613 = vsel %vm590, %v328, %v612
      %614 = vst [vmem:[%s581 + $0x2c] sm:$0x1] %v613
      %v615 = vld [vmem:[%s581 + $0x30] sm:$0xf]
      %v616 = vsel %vm584, %v335, %v615
      %617 = vst [vmem:[%s581 + $0x30] sm:$0xf] %v616
      %618 = vst [vmem:[%s581 + $0x34] sm:$0xf] %v344
      %v619 = vld [vmem:[%s581 + $0x38] sm:$0x1]
      %v620 = vsel %vm590, %v345, %v619
      %621 = vst [vmem:[%s581 + $0x38] sm:$0x1] %v620
      %v622 = vld [vmem:[%s581 + $0x3c] sm:$0xf]
      %v623 = vsel %vm584, %v352, %v622
      %624 = vst [vmem:[%s581 + $0x3c] sm:$0xf] %v623
      %625 = vst [vmem:[%s581 + $0x40] sm:$0xf] %v361
      %v626 = vld [vmem:[%s581 + $0x44] sm:$0x1]
      %v627 = vsel %vm590, %v362, %v626
      %628 = vst [vmem:[%s581 + $0x44] sm:$0x1] %v627
      %v629 = vld [vmem:[%s581 + $0x48] sm:$0xf]
      %v630 = vsel %vm584, %v369, %v629
      %631 = vst [vmem:[%s581 + $0x48] sm:$0xf] %v630
      %632 = vst [vmem:[%s581 + $0x4c] sm:$0xf] %v378
      %v633 = vld [vmem:[%s581 + $0x50] sm:$0x1]
      %v634 = vsel %vm590, %v379, %v633
      %635 = vst [vmem:[%s581 + $0x50] sm:$0x1] %v634
      %v636 = vld [vmem:[%s581 + $0x54] sm:$0xf]
      %v637 = vsel %vm584, %v386, %v636
      %638 = vst [vmem:[%s581 + $0x54] sm:$0xf] %v637
      %639 = vst [vmem:[%s581 + $0x58] sm:$0xf] %v395
      %v640 = vld [vmem:[%s581 + $0x5c] sm:$0x1]
      %v641 = vsel %vm590, %v396, %v640
      %642 = vst [vmem:[%s581 + $0x5c] sm:$0x1] %v641
      %v643 = vld [vmem:[%s581 + $0x60] sm:$0xf]
      %v644 = vsel %vm584, %v403, %v643
      %645 = vst [vmem:[%s581 + $0x60] sm:$0xf] %v644
      %646 = vst [vmem:[%s581 + $0x64] sm:$0xf] %v412
      %v647 = vld [vmem:[%s581 + $0x68] sm:$0x1]
      %v648 = vsel %vm590, %v413, %v647
      %649 = vst [vmem:[%s581 + $0x68] sm:$0x1] %v648
      %v650 = vld [vmem:[%s581 + $0x6c] sm:$0xf]
      %v651 = vsel %vm584, %v420, %v650
      %652 = vst [vmem:[%s581 + $0x6c] sm:$0xf] %v651
      %653 = vst [vmem:[%s581 + $0x70] sm:$0xf] %v429
      %v654 = vld [vmem:[%s581 + $0x74] sm:$0x1]
      %v655 = vsel %vm590, %v430, %v654
      %656 = vst [vmem:[%s581 + $0x74] sm:$0x1] %v655
      %v657 = vld [vmem:[%s581 + $0x78] sm:$0xf]
      %v658 = vsel %vm584, %v437, %v657
      %659 = vst [vmem:[%s581 + $0x78] sm:$0xf] %v658
      %660 = vst [vmem:[%s581 + $0x7c] sm:$0xf] %v446
      %v661 = vld [vmem:[%s581 + $0x80] sm:$0x1]
      %v662 = vsel %vm590, %v447, %v661
      %663 = vst [vmem:[%s581 + $0x80] sm:$0x1] %v662
      %v664 = vld [vmem:[%s581 + $0x84] sm:$0xf]
      %v665 = vsel %vm584, %v454, %v664
      %666 = vst [vmem:[%s581 + $0x84] sm:$0xf] %v665
      %667 = vst [vmem:[%s581 + $0x88] sm:$0xf] %v463
      %v668 = vld [vmem:[%s581 + $0x8c] sm:$0x1]
      %v669 = vsel %vm590, %v464, %v668
      %670 = vst [vmem:[%s581 + $0x8c] sm:$0x1] %v669
      %v671 = vld [vmem:[%s581 + $0x90] sm:$0xf]
      %v672 = vsel %vm584, %v471, %v671
      %673 = vst [vmem:[%s581 + $0x90] sm:$0xf] %v672
      %674 = vst [vmem:[%s581 + $0x94] sm:$0xf] %v480
      %v675 = vld [vmem:[%s581 + $0x98] sm:$0x1]
      %v676 = vsel %vm590, %v481, %v675
      %677 = vst [vmem:[%s581 + $0x98] sm:$0x1] %v676
      %v678 = vld [vmem:[%s581 + $0x9c] sm:$0xf]
      %v679 = vsel %vm584, %v488, %v678
      %680 = vst [vmem:[%s581 + $0x9c] sm:$0xf] %v679
      %681 = vst [vmem:[%s581 + $0xa0] sm:$0xf] %v497
      %v682 = vld [vmem:[%s581 + $0xa4] sm:$0x1]
      %v683 = vsel %vm590, %v498, %v682
      %684 = vst [vmem:[%s581 + $0xa4] sm:$0x1] %v683
      %v685 = vld [vmem:[%s581 + $0xa8] sm:$0xf]
      %v686 = vsel %vm584, %v505, %v685
      %687 = vst [vmem:[%s581 + $0xa8] sm:$0xf] %v686
      %688 = vst [vmem:[%s581 + $0xac] sm:$0xf] %v514
      %v689 = vld [vmem:[%s581 + $0xb0] sm:$0x1]
      %v690 = vsel %vm590, %v515, %v689
      %691 = vst [vmem:[%s581 + $0xb0] sm:$0x1] %v690
      %v692 = vld [vmem:[%s581 + $0xb4] sm:$0xf]
      %v693 = vsel %vm584, %v522, %v692
      %694 = vst [vmem:[%s581 + $0xb4] sm:$0xf] %v693
      %695 = vst [vmem:[%s581 + $0xb8] sm:$0xf] %v531
      %v696 = vld [vmem:[%s581 + $0xbc] sm:$0x1]
      %v697 = vsel %vm590, %v532, %v696
      %698 = vst [vmem:[%s581 + $0xbc] sm:$0x1] %v697
      %v699 = vld [vmem:[#allocation2] sm:$0xf]
      %v700 = vld [vmem:[#allocation2 + $0x4] sm:$0xf]
      %v701 = vld [vmem:[#allocation2 + $0x8] sm:$0x1]
      %v702 = vld [vmem:[#allocation2 + $0xc] sm:$0xf]
      %v703 = vld [vmem:[#allocation2 + $0x10] sm:$0xf]
      %v704 = vld [vmem:[#allocation2 + $0x14] sm:$0x1]
      %v705 = vld [vmem:[#allocation2 + $0x18] sm:$0xf]
      %v706 = vld [vmem:[#allocation2 + $0x1c] sm:$0xf]
      %v707 = vld [vmem:[#allocation2 + $0x20] sm:$0x1]
      %v708 = vld [vmem:[#allocation2 + $0x24] sm:$0xf]
      %v709 = vld [vmem:[#allocation2 + $0x28] sm:$0xf]
      %v710 = vld [vmem:[#allocation2 + $0x2c] sm:$0x1]
      %v711 = vld [vmem:[#allocation2 + $0x30] sm:$0xf]
      %v712 = vld [vmem:[#allocation2 + $0x34] sm:$0xf]
      %v713 = vld [vmem:[#allocation2 + $0x38] sm:$0x1]
      %v714 = vld [vmem:[#allocation2 + $0x3c] sm:$0xf]
      %v715 = vld [vmem:[#allocation2 + $0x40] sm:$0xf]
      %v716 = vld [vmem:[#allocation2 + $0x44] sm:$0x1]
      %v717 = vld [vmem:[#allocation2 + $0x48] sm:$0xf]
      %v718 = vld [vmem:[#allocation2 + $0x4c] sm:$0xf]
      %v719 = vld [vmem:[#allocation2 + $0x50] sm:$0x1]
      %v720 = vld [vmem:[#allocation2 + $0x54] sm:$0xf]
      %v721 = vld [vmem:[#allocation2 + $0x58] sm:$0xf]
      %v722 = vld [vmem:[#allocation2 + $0x5c] sm:$0x1]
      %v723 = vld [vmem:[#allocation2 + $0x60] sm:$0xf]
      %v724 = vld [vmem:[#allocation2 + $0x64] sm:$0xf]
      %v725 = vld [vmem:[#allocation2 + $0x68] sm:$0x1]
      %v726 = vld [vmem:[#allocation2 + $0x6c] sm:$0xf]
      %v727 = vld [vmem:[#allocation2 + $0x70] sm:$0xf]
      %v728 = vld [vmem:[#allocation2 + $0x74] sm:$0x1]
      %v729 = vld [vmem:[#allocation2 + $0x78] sm:$0xf]
      %v730 = vld [vmem:[#allocation2 + $0x7c] sm:$0xf]
      %v731 = vld [vmem:[#allocation2 + $0x80] sm:$0x1]
      %v732 = vld [vmem:[#allocation2 + $0x84] sm:$0xf]
      %v733 = vld [vmem:[#allocation2 + $0x88] sm:$0xf]
      %v734 = vld [vmem:[#allocation2 + $0x8c] sm:$0x1]
      %v735 = vld [vmem:[#allocation2 + $0x90] sm:$0xf]
      %v736 = vld [vmem:[#allocation2 + $0x94] sm:$0xf]
      %v737 = vld [vmem:[#allocation2 + $0x98] sm:$0x1]
      %v738 = vld [vmem:[#allocation2 + $0x9c] sm:$0xf]
      %v739 = vld [vmem:[#allocation2 + $0xa0] sm:$0xf]
      %v740 = vld [vmem:[#allocation2 + $0xa4] sm:$0x1]
      %v741 = vld [vmem:[#allocation2 + $0xa8] sm:$0xf]
      %v742 = vld [vmem:[#allocation2 + $0xac] sm:$0xf]
      %v743 = vld [vmem:[#allocation2 + $0xb0] sm:$0x1]
      %v744 = vld [vmem:[#allocation2 + $0xb4] sm:$0xf]
      %v745 = vld [vmem:[#allocation2 + $0xb8] sm:$0xf]
      %v746 = vld [vmem:[#allocation2 + $0xbc] sm:$0x1]
      %v747 = vld [vmem:[#allocation2 + $0xc0] sm:$0xf]
      %v748 = vld [vmem:[#allocation2 + $0xc4] sm:$0xf]
      %v749 = vld [vmem:[#allocation2 + $0xc8] sm:$0x1]
      %v750 = vld [vmem:[#allocation2 + $0xcc] sm:$0xf]
      %v751 = vld [vmem:[#allocation2 + $0xd0] sm:$0xf]
      %v752 = vld [vmem:[#allocation2 + $0xd4] sm:$0x1]
      %v789 = vunpack.c.l.b16 %v699
      %v790 = vunpack.c.l.b16 %v700
      %v791 = vunpack.c.l.b16 %v702
      %v792 = vunpack.c.l.b16 %v703
      %v793 = vunpack.c.l.b16 %v705
      %v794 = vunpack.c.l.b16 %v706
      %v795 = vunpack.c.l.b16 %v708
      %v796 = vunpack.c.l.b16 %v709
      %v797 = vunpack.c.l.b16 %v711
      %v798 = vunpack.c.l.b16 %v712
      %v799 = vunpack.c.l.b16 %v714
      %v800 = vunpack.c.l.b16 %v715
      %v801 = vunpack.c.l.b16 %v717
      %v802 = vunpack.c.l.b16 %v718
      %v803 = vunpack.c.l.b16 %v720
      %v804 = vunpack.c.l.b16 %v721
      %v805 = vunpack.c.l.b16 %v723
      %v806 = vunpack.c.l.b16 %v724
      %v807 = vunpack.c.l.b16 %v726
      %v808 = vunpack.c.l.b16 %v727
      %v809 = vunpack.c.l.b16 %v729
      %v810 = vunpack.c.l.b16 %v730
      %v811 = vunpack.c.l.b16 %v732
      %v812 = vunpack.c.l.b16 %v733
      %v813 = vunpack.c.l.b16 %v735
      %v814 = vunpack.c.l.b16 %v736
      %v815 = vunpack.c.l.b16 %v738
      %v816 = vunpack.c.l.b16 %v739
      %v817 = vunpack.c.l.b16 %v741
      %v818 = vunpack.c.l.b16 %v742
      %v819 = vunpack.c.l.b16 %v744
      %v820 = vunpack.c.l.b16 %v745
      %v821 = vunpack.c.l.b16 %v747
      %v822 = vunpack.c.l.b16 %v748
      %v823 = vunpack.c.l.b16 %v750
      %v824 = vunpack.c.l.b16 %v751
      %v825 = vpack.c.b16 %v790, %v789
      %v826 = vpack.c.b16 %v792, %v791
      %v827 = vpack.c.b16 %v794, %v793
      %v828 = vpack.c.b16 %v796, %v795
      %v829 = vpack.c.b16 %v798, %v797
      %v830 = vpack.c.b16 %v800, %v799
      %v831 = vpack.c.b16 %v802, %v801
      %v832 = vpack.c.b16 %v804, %v803
      %v833 = vpack.c.b16 %v806, %v805
      %v834 = vpack.c.b16 %v808, %v807
      %v835 = vpack.c.b16 %v810, %v809
      %v836 = vpack.c.b16 %v812, %v811
      %v837 = vpack.c.b16 %v814, %v813
      %v838 = vpack.c.b16 %v816, %v815
      %v839 = vpack.c.b16 %v818, %v817
      %v840 = vpack.c.b16 %v820, %v819
      %v841 = vpack.c.b16 %v822, %v821
      %v842 = vpack.c.b16 %v824, %v823
      %v879 = vunpack.c.l.b16 %v701
      %v880 = vunpack.c.l.b16 %v704
      %v881 = vunpack.c.l.b16 %v707
      %v882 = vunpack.c.l.b16 %v710
      %v883 = vunpack.c.l.b16 %v713
      %v884 = vunpack.c.l.b16 %v716
      %v885 = vunpack.c.l.b16 %v719
      %v886 = vunpack.c.l.b16 %v722
      %v887 = vunpack.c.l.b16 %v725
      %v888 = vunpack.c.l.b16 %v728
      %v889 = vunpack.c.l.b16 %v731
      %v890 = vunpack.c.l.b16 %v734
      %v891 = vunpack.c.l.b16 %v737
      %v892 = vunpack.c.l.b16 %v740
      %v893 = vunpack.c.l.b16 %v743
      %v894 = vunpack.c.l.b16 %v746
      %v895 = vunpack.c.l.b16 %v749
      %v896 = vunpack.c.l.b16 %v752
      %v897 = vpack.c.b16 %v879, %v879
      %v898 = vpack.c.b16 %v880, %v880
      %v899 = vpack.c.b16 %v881, %v881
      %v900 = vpack.c.b16 %v882, %v882
      %v901 = vpack.c.b16 %v883, %v883
      %v902 = vpack.c.b16 %v884, %v884
      %v903 = vpack.c.b16 %v885, %v885
      %v904 = vpack.c.b16 %v886, %v886
      %v905 = vpack.c.b16 %v887, %v887
      %v906 = vpack.c.b16 %v888, %v888
      %v907 = vpack.c.b16 %v889, %v889
      %v908 = vpack.c.b16 %v890, %v890
      %v909 = vpack.c.b16 %v891, %v891
      %v910 = vpack.c.b16 %v892, %v892
      %v911 = vpack.c.b16 %v893, %v893
      %v912 = vpack.c.b16 %v894, %v894
      %v913 = vpack.c.b16 %v895, %v895
      %v914 = vpack.c.b16 %v896, %v896
      %vm915 = vsmask.f32 7424
      %v917 = vshrl.u32 %v825, 16
      %v919 = vshll.u32 %v825, 16
      %v921 = vrot.slane %v919, 1
      %v922 = vor.u32 %v917, %v921
      %v924 = vshll.u32 %v897, 16
      %v926 = vrot.slane %v924, 1
      %v927 = vsel %vm915, %v922, %v926
      %v929 = vshrl.u32 %v826, 16
      %v931 = vshll.u32 %v826, 16
      %v933 = vrot.slane %v931, 1
      %v934 = vor.u32 %v929, %v933
      %v936 = vshll.u32 %v898, 16
      %v938 = vrot.slane %v936, 1
      %v939 = vsel %vm915, %v934, %v938
      %v941 = vshrl.u32 %v827, 16
      %v943 = vshll.u32 %v827, 16
      %v945 = vrot.slane %v943, 1
      %v946 = vor.u32 %v941, %v945
      %v948 = vshll.u32 %v899, 16
      %v950 = vrot.slane %v948, 1
      %v951 = vsel %vm915, %v946, %v950
      %v953 = vshrl.u32 %v828, 16
      %v955 = vshll.u32 %v828, 16
      %v957 = vrot.slane %v955, 1
      %v958 = vor.u32 %v953, %v957
      %v960 = vshll.u32 %v900, 16
      %v962 = vrot.slane %v960, 1
      %v963 = vsel %vm915, %v958, %v962
      %v965 = vshrl.u32 %v829, 16
      %v967 = vshll.u32 %v829, 16
      %v969 = vrot.slane %v967, 1
      %v970 = vor.u32 %v965, %v969
      %v972 = vshll.u32 %v901, 16
      %v974 = vrot.slane %v972, 1
      %v975 = vsel %vm915, %v970, %v974
      %v977 = vshrl.u32 %v830, 16
      %v979 = vshll.u32 %v830, 16
      %v981 = vrot.slane %v979, 1
      %v982 = vor.u32 %v977, %v981
      %v984 = vshll.u32 %v902, 16
      %v986 = vrot.slane %v984, 1
      %v987 = vsel %vm915, %v982, %v986
      %v989 = vshrl.u32 %v831, 16
      %v991 = vshll.u32 %v831, 16
      %v993 = vrot.slane %v991, 1
      %v994 = vor.u32 %v989, %v993
      %v996 = vshll.u32 %v903, 16
      %v998 = vrot.slane %v996, 1
      %v999 = vsel %vm915, %v994, %v998
      %v1001 = vshrl.u32 %v832, 16
      %v1003 = vshll.u32 %v832, 16
      %v1005 = vrot.slane %v1003, 1
      %v1006 = vor.u32 %v1001, %v1005
      %v1008 = vshll.u32 %v904, 16
      %v1010 = vrot.slane %v1008, 1
      %v1011 = vsel %vm915, %v1006, %v1010
      %v1013 = vshrl.u32 %v833, 16
      %v1015 = vshll.u32 %v833, 16
      %v1017 = vrot.slane %v1015, 1
      %v1018 = vor.u32 %v1013, %v1017
      %v1020 = vshll.u32 %v905, 16
      %v1022 = vrot.slane %v1020, 1
      %v1023 = vsel %vm915, %v1018, %v1022
      %v1025 = vshrl.u32 %v834, 16
      %v1027 = vshll.u32 %v834, 16
      %v1029 = vrot.slane %v1027, 1
      %v1030 = vor.u32 %v1025, %v1029
      %v1032 = vshll.u32 %v906, 16
      %v1034 = vrot.slane %v1032, 1
      %v1035 = vsel %vm915, %v1030, %v1034
      %v1037 = vshrl.u32 %v835, 16
      %v1039 = vshll.u32 %v835, 16
      %v1041 = vrot.slane %v1039, 1
      %v1042 = vor.u32 %v1037, %v1041
      %v1044 = vshll.u32 %v907, 16
      %v1046 = vrot.slane %v1044, 1
      %v1047 = vsel %vm915, %v1042, %v1046
      %v1049 = vshrl.u32 %v836, 16
      %v1051 = vshll.u32 %v836, 16
      %v1053 = vrot.slane %v1051, 1
      %v1054 = vor.u32 %v1049, %v1053
      %v1056 = vshll.u32 %v908, 16
      %v1058 = vrot.slane %v1056, 1
      %v1059 = vsel %vm915, %v1054, %v1058
      %v1061 = vshrl.u32 %v837, 16
      %v1063 = vshll.u32 %v837, 16
      %v1065 = vrot.slane %v1063, 1
      %v1066 = vor.u32 %v1061, %v1065
      %v1068 = vshll.u32 %v909, 16
      %v1070 = vrot.slane %v1068, 1
      %v1071 = vsel %vm915, %v1066, %v1070
      %v1073 = vshrl.u32 %v838, 16
      %v1075 = vshll.u32 %v838, 16
      %v1077 = vrot.slane %v1075, 1
      %v1078 = vor.u32 %v1073, %v1077
      %v1080 = vshll.u32 %v910, 16
      %v1082 = vrot.slane %v1080, 1
      %v1083 = vsel %vm915, %v1078, %v1082
      %v1085 = vshrl.u32 %v839, 16
      %v1087 = vshll.u32 %v839, 16
      %v1089 = vrot.slane %v1087, 1
      %v1090 = vor.u32 %v1085, %v1089
      %v1092 = vshll.u32 %v911, 16
      %v1094 = vrot.slane %v1092, 1
      %v1095 = vsel %vm915, %v1090, %v1094
      %v1097 = vshrl.u32 %v840, 16
      %v1099 = vshll.u32 %v840, 16
      %v1101 = vrot.slane %v1099, 1
      %v1102 = vor.u32 %v1097, %v1101
      %v1104 = vshll.u32 %v912, 16
      %v1106 = vrot.slane %v1104, 1
      %v1107 = vsel %vm915, %v1102, %v1106
      %v1109 = vshrl.u32 %v841, 16
      %v1111 = vshll.u32 %v841, 16
      %v1113 = vrot.slane %v1111, 1
      %v1114 = vor.u32 %v1109, %v1113
      %v1116 = vshll.u32 %v913, 16
      %v1118 = vrot.slane %v1116, 1
      %v1119 = vsel %vm915, %v1114, %v1118
      %v1121 = vshrl.u32 %v842, 16
      %v1123 = vshll.u32 %v842, 16
      %v1125 = vrot.slane %v1123, 1
      %v1126 = vor.u32 %v1121, %v1125
      %v1128 = vshll.u32 %v914, 16
      %v1130 = vrot.slane %v1128, 1
      %v1131 = vsel %vm915, %v1126, %v1130
      %vm1150 = vcmask 1046528
      %v1151 = vrot.slane %v825, 1
      %v1152 = vrot.slane %v897, 1
      %v1153 = vsel %vm1150, %v1151, %v1152
      %v1154 = vrot.slane %v826, 1
      %v1155 = vrot.slane %v898, 1
      %v1156 = vsel %vm1150, %v1154, %v1155
      %v1157 = vrot.slane %v827, 1
      %v1158 = vrot.slane %v899, 1
      %v1159 = vsel %vm1150, %v1157, %v1158
      %v1160 = vrot.slane %v828, 1
      %v1161 = vrot.slane %v900, 1
      %v1162 = vsel %vm1150, %v1160, %v1161
      %v1163 = vrot.slane %v829, 1
      %v1164 = vrot.slane %v901, 1
      %v1165 = vsel %vm1150, %v1163, %v1164
      %v1166 = vrot.slane %v830, 1
      %v1167 = vrot.slane %v902, 1
      %v1168 = vsel %vm1150, %v1166, %v1167
      %v1169 = vrot.slane %v831, 1
      %v1170 = vrot.slane %v903, 1
      %v1171 = vsel %vm1150, %v1169, %v1170
      %v1172 = vrot.slane %v832, 1
      %v1173 = vrot.slane %v904, 1
      %v1174 = vsel %vm1150, %v1172, %v1173
      %v1175 = vrot.slane %v833, 1
      %v1176 = vrot.slane %v905, 1
      %v1177 = vsel %vm1150, %v1175, %v1176
      %v1178 = vrot.slane %v834, 1
      %v1179 = vrot.slane %v906, 1
      %v1180 = vsel %vm1150, %v1178, %v1179
      %v1181 = vrot.slane %v835, 1
      %v1182 = vrot.slane %v907, 1
      %v1183 = vsel %vm1150, %v1181, %v1182
      %v1184 = vrot.slane %v836, 1
      %v1185 = vrot.slane %v908, 1
      %v1186 = vsel %vm1150, %v1184, %v1185
      %v1187 = vrot.slane %v837, 1
      %v1188 = vrot.slane %v909, 1
      %v1189 = vsel %vm1150, %v1187, %v1188
      %v1190 = vrot.slane %v838, 1
      %v1191 = vrot.slane %v910, 1
      %v1192 = vsel %vm1150, %v1190, %v1191
      %v1193 = vrot.slane %v839, 1
      %v1194 = vrot.slane %v911, 1
      %v1195 = vsel %vm1150, %v1193, %v1194
      %v1196 = vrot.slane %v840, 1
      %v1197 = vrot.slane %v912, 1
      %v1198 = vsel %vm1150, %v1196, %v1197
      %v1199 = vrot.slane %v841, 1
      %v1200 = vrot.slane %v913, 1
      %v1201 = vsel %vm1150, %v1199, %v1200
      %v1202 = vrot.slane %v842, 1
      %v1203 = vrot.slane %v914, 1
      %v1204 = vsel %vm1150, %v1202, %v1203
      %v1223 = vld [vmem:[%s1] sm:$0xf]
      %v1224 = vld [vmem:[%s1 + $0x4] sm:$0xf]
      %v1225 = vld [vmem:[%s1 + $0x8] sm:$0xf]
      %v1226 = vld [vmem:[%s1 + $0xc] sm:$0xf]
      %v1227 = vld [vmem:[%s1 + $0x10] sm:$0xf]
      %v1228 = vld [vmem:[%s1 + $0x14] sm:$0xf]
      %v1229 = vld [vmem:[%s1 + $0x18] sm:$0xf]
      %v1230 = vld [vmem:[%s1 + $0x1c] sm:$0xf]
      %v1231 = vld [vmem:[%s1 + $0x20] sm:$0xf]
      %v1232 = vld [vmem:[%s1 + $0x24] sm:$0xf]
      %v1233 = vld [vmem:[%s1 + $0x28] sm:$0xf]
      %v1234 = vld [vmem:[%s1 + $0x2c] sm:$0xf]
      %v1235 = vld [vmem:[%s1 + $0x30] sm:$0xf]
      %v1236 = vld [vmem:[%s1 + $0x34] sm:$0xf]
      %v1237 = vld [vmem:[%s1 + $0x38] sm:$0xf]
      %v1238 = vld [vmem:[%s1 + $0x3c] sm:$0xf]
      %v1239 = vld [vmem:[%s1 + $0x40] sm:$0xf]
      %v1240 = vld [vmem:[%s1 + $0x44] sm:$0xf]
      %v1241 = vld [vmem:[%s1 + $0x48] sm:$0xf]
      %v1242 = vld [vmem:[%s1 + $0x4c] sm:$0xf]
      %v1243 = vld [vmem:[%s1 + $0x50] sm:$0xf]
      %v1244 = vld [vmem:[%s1 + $0x54] sm:$0xf]
      %v1245 = vld [vmem:[%s1 + $0x58] sm:$0xf]
      %v1246 = vld [vmem:[%s1 + $0x5c] sm:$0xf]
      %v1247 = vld [vmem:[%s1 + $0x60] sm:$0xf]
      %v1248 = vld [vmem:[%s1 + $0x64] sm:$0xf]
      %v1249 = vld [vmem:[%s1 + $0x68] sm:$0xf]
      %v1250 = vld [vmem:[%s1 + $0x6c] sm:$0xf]
      %v1251 = vld [vmem:[%s1 + $0x70] sm:$0xf]
      %v1252 = vld [vmem:[%s1 + $0x74] sm:$0xf]
      %v1253 = vld [vmem:[%s1 + $0x78] sm:$0xf]
      %v1254 = vld [vmem:[%s1 + $0x7c] sm:$0xf]
      %v1255 = vld [vmem:[%s1 + $0x80] sm:$0xf]
      %v1256 = vld [vmem:[%s1 + $0x84] sm:$0xf]
      %v1257 = vld [vmem:[%s1 + $0x88] sm:$0xf]
      %v1258 = vld [vmem:[%s1 + $0x8c] sm:$0xf]
      %v1259 = vld [vmem:[%s1 + $0x90] sm:$0xf]
      %v1260 = vld [vmem:[%s1 + $0x94] sm:$0xf]
      %v1261 = vld [vmem:[%s1 + $0x98] sm:$0xf]
      %v1262 = vld [vmem:[%s1 + $0x9c] sm:$0xf]
      %v1263 = vld [vmem:[%s1 + $0xa0] sm:$0xf]
      %v1264 = vld [vmem:[%s1 + $0xa4] sm:$0xf]
      %v1265 = vld [vmem:[%s1 + $0xa8] sm:$0xf]
      %v1266 = vld [vmem:[%s1 + $0xac] sm:$0xf]
      %v1267 = vld [vmem:[%s1 + $0xb0] sm:$0xf]
      %v1268 = vld [vmem:[%s1 + $0xb4] sm:$0xf]
      %v1269 = vld [vmem:[%s1 + $0xb8] sm:$0xf]
      %v1270 = vld [vmem:[%s1 + $0xbc] sm:$0xf]
      %s1271 = scalar_lea.vmem %s1, 192
      %v1272 = vld [vmem:[%s1271] sm:$0xf]
      %v1273 = vld [vmem:[%s1271 + $0x4] sm:$0xf]
      %v1274 = vld [vmem:[%s1271 + $0x8] sm:$0xf]
      %v1275 = vld [vmem:[%s1271 + $0xc] sm:$0xf]
      %v1276 = vld [vmem:[%s1271 + $0x10] sm:$0xf]
      %v1277 = vld [vmem:[%s1271 + $0x14] sm:$0xf]
      %v1278 = vld [vmem:[%s1271 + $0x18] sm:$0xf]
      %v1279 = vld [vmem:[%s1271 + $0x1c] sm:$0xf]
      %v1280 = vld [vmem:[%s1271 + $0x20] sm:$0xf]
      %v1281 = vld [vmem:[%s1271 + $0x24] sm:$0xf]
      %v1282 = vld [vmem:[%s1271 + $0x28] sm:$0xf]
      %v1283 = vld [vmem:[%s1271 + $0x2c] sm:$0xf]
      %v1284 = vld [vmem:[%s1271 + $0x30] sm:$0xf]
      %v1285 = vld [vmem:[%s1271 + $0x34] sm:$0xf]
      %v1286 = vld [vmem:[%s1271 + $0x38] sm:$0xf]
      %v1287 = vld [vmem:[%s1271 + $0x3c] sm:$0xf]
      %v1288 = vld [vmem:[%s1271 + $0x40] sm:$0xf]
      %v1289 = vld [vmem:[%s1271 + $0x44] sm:$0xf]
      %v1290 = vld [vmem:[%s1271 + $0x48] sm:$0xf]
      %v1291 = vld [vmem:[%s1271 + $0x4c] sm:$0xf]
      %v1292 = vld [vmem:[%s1271 + $0x50] sm:$0xf]
      %v1293 = vld [vmem:[%s1271 + $0x54] sm:$0xf]
      %v1294 = vld [vmem:[%s1271 + $0x58] sm:$0xf]
      %v1295 = vld [vmem:[%s1271 + $0x5c] sm:$0xf]
      %v1296 = vld [vmem:[%s1271 + $0x60] sm:$0xf]
      %v1297 = vld [vmem:[%s1271 + $0x64] sm:$0xf]
      %v1298 = vld [vmem:[%s1271 + $0x68] sm:$0xf]
      %v1299 = vld [vmem:[%s1271 + $0x6c] sm:$0xf]
      %v1300 = vld [vmem:[%s1271 + $0x70] sm:$0xf]
      %v1301 = vld [vmem:[%s1271 + $0x74] sm:$0xf]
      %v1302 = vld [vmem:[%s1271 + $0x78] sm:$0xf]
      %v1303 = vld [vmem:[%s1271 + $0x7c] sm:$0xf]
      %v1304 = vld [vmem:[%s1271 + $0x80] sm:$0xf]
      %v1305 = vld [vmem:[%s1271 + $0x84] sm:$0xf]
      %v1306 = vld [vmem:[%s1271 + $0x88] sm:$0xf]
      %v1307 = vld [vmem:[%s1271 + $0x8c] sm:$0xf]
      %v1308 = vld [vmem:[%s1271 + $0x90] sm:$0xf]
      %v1309 = vld [vmem:[%s1271 + $0x94] sm:$0xf]
      %v1310 = vld [vmem:[%s1271 + $0x98] sm:$0xf]
      %v1311 = vld [vmem:[%s1271 + $0x9c] sm:$0xf]
      %v1312 = vld [vmem:[%s1271 + $0xa0] sm:$0xf]
      %v1313 = vld [vmem:[%s1271 + $0xa4] sm:$0xf]
      %v1314 = vld [vmem:[%s1271 + $0xa8] sm:$0xf]
      %v1315 = vld [vmem:[%s1271 + $0xac] sm:$0xf]
      %v1316 = vld [vmem:[%s1271 + $0xb0] sm:$0xf]
      %v1317 = vld [vmem:[%s1271 + $0xb4] sm:$0xf]
      %v1318 = vld [vmem:[%s1271 + $0xb8] sm:$0xf]
      %v1319 = vld [vmem:[%s1271 + $0xbc] sm:$0xf]
      %v1368 = vunpack.c.l.b16 %v1272
      %v1369 = vunpack.c.l.b16 %v1273
      %v1370 = vunpack.c.l.b16 %v1274
      %v1371 = vunpack.c.l.b16 %v1275
      %v1372 = vunpack.c.l.b16 %v1276
      %v1373 = vunpack.c.l.b16 %v1277
      %v1374 = vunpack.c.l.b16 %v1278
      %v1375 = vunpack.c.l.b16 %v1279
      %v1376 = vunpack.c.l.b16 %v1280
      %v1377 = vunpack.c.l.b16 %v1281
      %v1378 = vunpack.c.l.b16 %v1282
      %v1379 = vunpack.c.l.b16 %v1283
      %v1380 = vunpack.c.l.b16 %v1284
      %v1381 = vunpack.c.l.b16 %v1285
      %v1382 = vunpack.c.l.b16 %v1286
      %v1383 = vunpack.c.l.b16 %v1287
      %v1384 = vunpack.c.l.b16 %v1288
      %v1385 = vunpack.c.l.b16 %v1289
      %v1386 = vunpack.c.l.b16 %v1290
      %v1387 = vunpack.c.l.b16 %v1291
      %v1388 = vunpack.c.l.b16 %v1292
      %v1389 = vunpack.c.l.b16 %v1293
      %v1390 = vunpack.c.l.b16 %v1294
      %v1391 = vunpack.c.l.b16 %v1295
      %v1392 = vunpack.c.l.b16 %v1296
      %v1393 = vunpack.c.l.b16 %v1297
      %v1394 = vunpack.c.l.b16 %v1298
      %v1395 = vunpack.c.l.b16 %v1299
      %v1396 = vunpack.c.l.b16 %v1300
      %v1397 = vunpack.c.l.b16 %v1301
      %v1398 = vunpack.c.l.b16 %v1302
      %v1399 = vunpack.c.l.b16 %v1303
      %v1400 = vunpack.c.l.b16 %v1304
      %v1401 = vunpack.c.l.b16 %v1305
      %v1402 = vunpack.c.l.b16 %v1306
      %v1403 = vunpack.c.l.b16 %v1307
      %v1404 = vunpack.c.l.b16 %v1308
      %v1405 = vunpack.c.l.b16 %v1309
      %v1406 = vunpack.c.l.b16 %v1310
      %v1407 = vunpack.c.l.b16 %v1311
      %v1408 = vunpack.c.l.b16 %v1312
      %v1409 = vunpack.c.l.b16 %v1313
      %v1410 = vunpack.c.l.b16 %v1314
      %v1411 = vunpack.c.l.b16 %v1315
      %v1412 = vunpack.c.l.b16 %v1316
      %v1413 = vunpack.c.l.b16 %v1317
      %v1414 = vunpack.c.l.b16 %v1318
      %v1415 = vunpack.c.l.b16 %v1319
      %v1416 = vpack.c.b16 %v1369, %v1368
      %v1417 = vpack.c.b16 %v1371, %v1370
      %v1418 = vpack.c.b16 %v1373, %v1372
      %v1419 = vpack.c.b16 %v1375, %v1374
      %v1420 = vpack.c.b16 %v1377, %v1376
      %v1421 = vpack.c.b16 %v1379, %v1378
      %v1422 = vpack.c.b16 %v1381, %v1380
      %v1423 = vpack.c.b16 %v1383, %v1382
      %v1424 = vpack.c.b16 %v1385, %v1384
      %v1425 = vpack.c.b16 %v1387, %v1386
      %v1426 = vpack.c.b16 %v1389, %v1388
      %v1427 = vpack.c.b16 %v1391, %v1390
      %v1428 = vpack.c.b16 %v1393, %v1392
      %v1429 = vpack.c.b16 %v1395, %v1394
      %v1430 = vpack.c.b16 %v1397, %v1396
      %v1431 = vpack.c.b16 %v1399, %v1398
      %v1432 = vpack.c.b16 %v1401, %v1400
      %v1433 = vpack.c.b16 %v1403, %v1402
      %v1434 = vpack.c.b16 %v1405, %v1404
      %v1435 = vpack.c.b16 %v1407, %v1406
      %v1436 = vpack.c.b16 %v1409, %v1408
      %v1437 = vpack.c.b16 %v1411, %v1410
      %v1438 = vpack.c.b16 %v1413, %v1412
      %v1439 = vpack.c.b16 %v1415, %v1414
      %1464 = vmatprep.subr.bf16.mxu0 0
      %1465 = vmatpush1.bf16.msra.mxu0 %v1423
      %1466 = vmatprep.subr.bf16.mxu0 0
      %1467 = vmatpush1.bf16.msra.mxu0 %v1422
      %1468 = vmatprep.subr.bf16.mxu0 0
      %1469 = vmatpush1.bf16.msra.mxu0 %v1421
      %1470 = vmatprep.subr.bf16.mxu0 0
      %1471 = vmatpush1.bf16.msra.mxu0 %v1420
      %1472 = vmatprep.subr.bf16.mxu0 0
      %1473 = vmatpush1.bf16.msra.mxu0 %v1419
      %1474 = vmatprep.subr.bf16.mxu0 0
      %1475 = vmatpush1.bf16.msra.mxu0 %v1418
      %1476 = vmatprep.subr.bf16.mxu0 0
      %1477 = vmatpush1.bf16.msra.mxu0 %v1417
      %1478 = vmatprep.subr.bf16.mxu0 0
      %1479 = vmatpush1.bf16.msra.mxu0 %v1416
      %1480 = vmatprep.subr.bf16.mxu0 0
      %1481 = vmatpush2.bf16.msra.mxu0 %v1431
      %1482 = vmatprep.subr.bf16.mxu0 0
      %1483 = vmatpush2.bf16.msra.mxu0 %v1430
      %1484 = vmatprep.subr.bf16.mxu0 0
      %1485 = vmatpush2.bf16.msra.mxu0 %v1429
      %1486 = vmatprep.subr.bf16.mxu0 0
      %1487 = vmatpush2.bf16.msra.mxu0 %v1428
      %1488 = vmatprep.subr.bf16.mxu0 0
      %1489 = vmatpush2.bf16.msra.mxu0 %v1427
      %1490 = vmatprep.subr.bf16.mxu0 0
      %1491 = vmatpush2.bf16.msra.mxu0 %v1426
      %1492 = vmatprep.subr.bf16.mxu0 0
      %1493 = vmatpush2.bf16.msra.mxu0 %v1425
      %1494 = vmatprep.subr.bf16.mxu0 0
      %1495 = vmatpush2.bf16.msra.mxu0 %v1424
      %1496 = vmatprep.mubr.bf16.mxu0 %v939
      %1497 = vmatmul.mubr.bf16.gmra.mxu0 %v826
      %v1498 = vpop.f32.mrf.mxu0
      %v1499 = vadd.f32 0.0, %v1498
      %v1500 = vpop.f32.mrf.mxu0
      %v1501 = vpop.f32.mrf.mxu0
      %v1502 = vadd.f32 0.0, %v1501
      %v1503 = vpop.f32.mrf.mxu0
      %1504 = vmatprep.mubr.bf16.mxu0 %v951
      %1505 = vmatmul.mubr.bf16.gmra.mxu0 %v827
      %v1506 = vpop.f32.mrf.mxu0
      %v1507 = vadd.f32 0.0, %v1506
      %v1508 = vpop.f32.mrf.mxu0
      %v1509 = vpop.f32.mrf.mxu0
      %v1510 = vadd.f32 0.0, %v1509
      %v1511 = vpop.f32.mrf.mxu0
      %1512 = vmatprep.mubr.bf16.mxu0 %v963
      %1513 = vmatmul.mubr.bf16.gmra.mxu0 %v828
      %v1514 = vpop.f32.mrf.mxu0
      %v1515 = vadd.f32 0.0, %v1514
      %v1516 = vpop.f32.mrf.mxu0
      %v1517 = vpop.f32.mrf.mxu0
      %v1518 = vadd.f32 0.0, %v1517
      %v1519 = vpop.f32.mrf.mxu0
      %1520 = vmatprep.mubr.bf16.mxu0 %v975
      %1521 = vmatmul.mubr.bf16.gmra.mxu0 %v829
      %v1522 = vpop.f32.mrf.mxu0
      %v1523 = vadd.f32 0.0, %v1522
      %v1524 = vpop.f32.mrf.mxu0
      %v1525 = vpop.f32.mrf.mxu0
      %v1526 = vadd.f32 0.0, %v1525
      %v1527 = vpop.f32.mrf.mxu0
      %1528 = vmatprep.mubr.bf16.mxu0 %v987
      %1529 = vmatmul.mubr.bf16.gmra.mxu0 %v830
      %v1530 = vpop.f32.mrf.mxu0
      %v1531 = vadd.f32 0.0, %v1530
      %v1532 = vpop.f32.mrf.mxu0
      %v1533 = vpop.f32.mrf.mxu0
      %v1534 = vadd.f32 0.0, %v1533
      %v1535 = vpop.f32.mrf.mxu0
      %1536 = vmatprep.mubr.bf16.mxu0 %v999
      %1537 = vmatmul.mubr.bf16.gmra.mxu0 %v831
      %v1538 = vpop.f32.mrf.mxu0
      %v1539 = vadd.f32 0.0, %v1538
      %v1540 = vpop.f32.mrf.mxu0
      %v1541 = vpop.f32.mrf.mxu0
      %v1542 = vadd.f32 0.0, %v1541
      %v1543 = vpop.f32.mrf.mxu0
      %1544 = vmatprep.mubr.bf16.mxu0 %v1011
      %1545 = vmatmul.mubr.bf16.gmra.mxu0 %v832
      %v1546 = vpop.f32.mrf.mxu0
      %v1547 = vadd.f32 0.0, %v1546
      %v1548 = vpop.f32.mrf.mxu0
      %v1549 = vpop.f32.mrf.mxu0
      %v1550 = vadd.f32 0.0, %v1549
      %v1551 = vpop.f32.mrf.mxu0
      %1552 = vmatprep.mubr.bf16.mxu0 %v1023
      %1553 = vmatmul.mubr.bf16.gmra.mxu0 %v833
      %v1554 = vpop.f32.mrf.mxu0
      %v1555 = vadd.f32 0.0, %v1554
      %v1556 = vpop.f32.mrf.mxu0
      %v1557 = vpop.f32.mrf.mxu0
      %v1558 = vadd.f32 0.0, %v1557
      %v1559 = vpop.f32.mrf.mxu0
      %1560 = vmatprep.mubr.bf16.mxu0 %v1035
      %1561 = vmatmul.mubr.bf16.gmra.mxu0 %v834
      %v1562 = vpop.f32.mrf.mxu0
      %v1563 = vadd.f32 0.0, %v1562
      %v1564 = vpop.f32.mrf.mxu0
      %v1565 = vpop.f32.mrf.mxu0
      %v1566 = vadd.f32 0.0, %v1565
      %v1567 = vpop.f32.mrf.mxu0
      %1568 = vmatprep.mubr.bf16.mxu0 %v1047
      %1569 = vmatmul.mubr.bf16.gmra.mxu0 %v835
      %v1570 = vpop.f32.mrf.mxu0
      %v1571 = vadd.f32 0.0, %v1570
      %v1572 = vpop.f32.mrf.mxu0
      %v1573 = vpop.f32.mrf.mxu0
      %v1574 = vadd.f32 0.0, %v1573
      %v1575 = vpop.f32.mrf.mxu0
      %1576 = vmatprep.mubr.bf16.mxu0 %v1059
      %1577 = vmatmul.mubr.bf16.gmra.mxu0 %v836
      %v1578 = vpop.f32.mrf.mxu0
      %v1579 = vadd.f32 0.0, %v1578
      %v1580 = vpop.f32.mrf.mxu0
      %v1581 = vpop.f32.mrf.mxu0
      %v1582 = vadd.f32 0.0, %v1581
      %v1583 = vpop.f32.mrf.mxu0
      %1584 = vmatprep.mubr.bf16.mxu0 %v1071
      %1585 = vmatmul.mubr.bf16.gmra.mxu0 %v837
      %v1586 = vpop.f32.mrf.mxu0
      %v1587 = vadd.f32 0.0, %v1586
      %v1588 = vpop.f32.mrf.mxu0
      %v1589 = vpop.f32.mrf.mxu0
      %v1590 = vadd.f32 0.0, %v1589
      %v1591 = vpop.f32.mrf.mxu0
      %1592 = vmatprep.mubr.bf16.mxu0 %v1083
      %1593 = vmatmul.mubr.bf16.gmra.mxu0 %v838
      %v1594 = vpop.f32.mrf.mxu0
      %v1595 = vadd.f32 0.0, %v1594
      %v1596 = vpop.f32.mrf.mxu0
      %v1597 = vpop.f32.mrf.mxu0
      %v1598 = vadd.f32 0.0, %v1597
      %v1599 = vpop.f32.mrf.mxu0
      %1600 = vmatprep.mubr.bf16.mxu0 %v1095
      %1601 = vmatmul.mubr.bf16.gmra.mxu0 %v839
      %v1602 = vpop.f32.mrf.mxu0
      %v1603 = vadd.f32 0.0, %v1602
      %v1604 = vpop.f32.mrf.mxu0
      %v1605 = vpop.f32.mrf.mxu0
      %v1606 = vadd.f32 0.0, %v1605
      %v1607 = vpop.f32.mrf.mxu0
      %1608 = vmatprep.mubr.bf16.mxu0 %v1107
      %1609 = vmatmul.mubr.bf16.gmra.mxu0 %v840
      %v1610 = vpop.f32.mrf.mxu0
      %v1611 = vadd.f32 0.0, %v1610
      %v1612 = vpop.f32.mrf.mxu0
      %v1613 = vpop.f32.mrf.mxu0
      %v1614 = vadd.f32 0.0, %v1613
      %v1615 = vpop.f32.mrf.mxu0
      %1616 = vmatprep.mubr.bf16.mxu0 %v1119
      %1617 = vmatmul.mubr.bf16.gmra.mxu0 %v841
      %v1618 = vpop.f32.mrf.mxu0
      %v1619 = vadd.f32 0.0, %v1618
      %v1620 = vpop.f32.mrf.mxu0
      %v1621 = vpop.f32.mrf.mxu0
      %v1622 = vadd.f32 0.0, %v1621
      %v1623 = vpop.f32.mrf.mxu0
      %1624 = vdwg.mxu0
      %1625 = vmatprep.subr.bf16.mxu0 0
      %1626 = vmatpush1.bf16.msra.mxu0 %v1439
      %1627 = vmatprep.subr.bf16.mxu0 0
      %1628 = vmatpush1.bf16.msra.mxu0 %v1438
      %1629 = vmatprep.subr.bf16.mxu0 0
      %1630 = vmatpush1.bf16.msra.mxu0 %v1437
      %1631 = vmatprep.subr.bf16.mxu0 0
      %1632 = vmatpush1.bf16.msra.mxu0 %v1436
      %1633 = vmatprep.subr.bf16.mxu0 0
      %1634 = vmatpush1.bf16.msra.mxu0 %v1435
      %1635 = vmatprep.subr.bf16.mxu0 0
      %1636 = vmatpush1.bf16.msra.mxu0 %v1434
      %1637 = vmatprep.subr.bf16.mxu0 0
      %1638 = vmatpush1.bf16.msra.mxu0 %v1433
      %1639 = vmatprep.subr.bf16.mxu0 0
      %1640 = vmatpush1.bf16.msra.mxu0 %v1432
      %1641 = vmatprep.subr.bf16.mxu0 0
      %1642 = vmatpush2.bf16.msra.mxu0 0
      %1643 = vmatprep.subr.bf16.mxu0 0
      %1644 = vmatpush2.bf16.msra.mxu0 0
      %1645 = vmatprep.subr.bf16.mxu0 0
      %1646 = vmatpush2.bf16.msra.mxu0 0
      %1647 = vmatprep.subr.bf16.mxu0 0
      %1648 = vmatpush2.bf16.msra.mxu0 0
      %1649 = vmatprep.subr.bf16.mxu0 0
      %1650 = vmatpush2.bf16.msra.mxu0 0
      %1651 = vmatprep.subr.bf16.mxu0 0
      %1652 = vmatpush2.bf16.msra.mxu0 0
      %1653 = vmatprep.subr.bf16.mxu0 0
      %1654 = vmatpush2.bf16.msra.mxu0 0
      %1655 = vmatprep.subr.bf16.mxu0 0
      %1656 = vmatpush2.bf16.msra.mxu0 0
      %1657 = vmatprep.mubr.bf16.mxu0 0
      %1658 = vmatmul.mubr.bf16.gmra.mxu0 %v1156
      %v1659 = vpop.f32.mrf.mxu0
      %v1660 = vadd.f32 %v1499, %v1659
      %v1661 = vpop.f32.mrf.mxu0
      %v1662 = vpop.f32.mrf.mxu0
      %v1663 = vadd.f32 %v1502, %v1662
      %v1664 = vpop.f32.mrf.mxu0
      %1665 = vmatprep.mubr.bf16.mxu0 0
      %1666 = vmatmul.mubr.bf16.gmra.mxu0 %v1159
      %v1667 = vpop.f32.mrf.mxu0
      %v1668 = vadd.f32 %v1507, %v1667
      %v1669 = vpop.f32.mrf.mxu0
      %v1670 = vpop.f32.mrf.mxu0
      %v1671 = vadd.f32 %v1510, %v1670
      %v1672 = vpop.f32.mrf.mxu0
      %1673 = vmatprep.mubr.bf16.mxu0 0
      %1674 = vmatmul.mubr.bf16.gmra.mxu0 %v1162
      %v1675 = vpop.f32.mrf.mxu0
      %v1676 = vadd.f32 %v1515, %v1675
      %v1677 = vpop.f32.mrf.mxu0
      %v1678 = vpop.f32.mrf.mxu0
      %v1679 = vadd.f32 %v1518, %v1678
      %v1680 = vpop.f32.mrf.mxu0
      %1681 = vmatprep.mubr.bf16.mxu0 0
      %1682 = vmatmul.mubr.bf16.gmra.mxu0 %v1165
      %v1683 = vpop.f32.mrf.mxu0
      %v1684 = vadd.f32 %v1523, %v1683
      %v1685 = vpop.f32.mrf.mxu0
      %v1686 = vpop.f32.mrf.mxu0
      %v1687 = vadd.f32 %v1526, %v1686
      %v1688 = vpop.f32.mrf.mxu0
      %1689 = vmatprep.mubr.bf16.mxu0 0
      %1690 = vmatmul.mubr.bf16.gmra.mxu0 %v1168
      %v1691 = vpop.f32.mrf.mxu0
      %v1692 = vadd.f32 %v1531, %v1691
      %v1693 = vpop.f32.mrf.mxu0
      %v1694 = vpop.f32.mrf.mxu0
      %v1695 = vadd.f32 %v1534, %v1694
      %v1696 = vpop.f32.mrf.mxu0
      %1697 = vmatprep.mubr.bf16.mxu0 0
      %1698 = vmatmul.mubr.bf16.gmra.mxu0 %v1171
      %v1699 = vpop.f32.mrf.mxu0
      %v1700 = vadd.f32 %v1539, %v1699
      %v1701 = vpop.f32.mrf.mxu0
      %v1702 = vpop.f32.mrf.mxu0
      %v1703 = vadd.f32 %v1542, %v1702
      %v1704 = vpop.f32.mrf.mxu0
      %1705 = vmatprep.mubr.bf16.mxu0 0
      %1706 = vmatmul.mubr.bf16.gmra.mxu0 %v1174
      %v1707 = vpop.f32.mrf.mxu0
      %v1708 = vadd.f32 %v1547, %v1707
      %v1709 = vpop.f32.mrf.mxu0
      %v1710 = vpop.f32.mrf.mxu0
      %v1711 = vadd.f32 %v1550, %v1710
      %v1712 = vpop.f32.mrf.mxu0
      %1713 = vmatprep.mubr.bf16.mxu0 0
      %1714 = vmatmul.mubr.bf16.gmra.mxu0 %v1177
      %v1715 = vpop.f32.mrf.mxu0
      %v1716 = vadd.f32 %v1555, %v1715
      %v1717 = vpop.f32.mrf.mxu0
      %v1718 = vpop.f32.mrf.mxu0
      %v1719 = vadd.f32 %v1558, %v1718
      %v1720 = vpop.f32.mrf.mxu0
      %1721 = vmatprep.mubr.bf16.mxu0 0
      %1722 = vmatmul.mubr.bf16.gmra.mxu0 %v1180
      %v1723 = vpop.f32.mrf.mxu0
      %v1724 = vadd.f32 %v1563, %v1723
      %v1725 = vpop.f32.mrf.mxu0
      %v1726 = vpop.f32.mrf.mxu0
      %v1727 = vadd.f32 %v1566, %v1726
      %v1728 = vpop.f32.mrf.mxu0
      %1729 = vmatprep.mubr.bf16.mxu0 0
      %1730 = vmatmul.mubr.bf16.gmra.mxu0 %v1183
      %v1731 = vpop.f32.mrf.mxu0
      %v1732 = vadd.f32 %v1571, %v1731
      %v1733 = vpop.f32.mrf.mxu0
      %v1734 = vpop.f32.mrf.mxu0
      %v1735 = vadd.f32 %v1574, %v1734
      %v1736 = vpop.f32.mrf.mxu0
      %1737 = vmatprep.mubr.bf16.mxu0 0
      %1738 = vmatmul.mubr.bf16.gmra.mxu0 %v1186
      %v1739 = vpop.f32.mrf.mxu0
      %v1740 = vadd.f32 %v1579, %v1739
      %v1741 = vpop.f32.mrf.mxu0
      %v1742 = vpop.f32.mrf.mxu0
      %v1743 = vadd.f32 %v1582, %v1742
      %v1744 = vpop.f32.mrf.mxu0
      %1745 = vmatprep.mubr.bf16.mxu0 0
      %1746 = vmatmul.mubr.bf16.gmra.mxu0 %v1189
      %v1747 = vpop.f32.mrf.mxu0
      %v1748 = vadd.f32 %v1587, %v1747
      %v1749 = vpop.f32.mrf.mxu0
      %v1750 = vpop.f32.mrf.mxu0
      %v1751 = vadd.f32 %v1590, %v1750
      %v1752 = vpop.f32.mrf.mxu0
      %1753 = vmatprep.mubr.bf16.mxu0 0
      %1754 = vmatmul.mubr.bf16.gmra.mxu0 %v1192
      %v1755 = vpop.f32.mrf.mxu0
      %v1756 = vadd.f32 %v1595, %v1755
      %v1757 = vpop.f32.mrf.mxu0
      %v1758 = vpop.f32.mrf.mxu0
      %v1759 = vadd.f32 %v1598, %v1758
      %v1760 = vpop.f32.mrf.mxu0
      %1761 = vmatprep.mubr.bf16.mxu0 0
      %1762 = vmatmul.mubr.bf16.gmra.mxu0 %v1195
      %v1763 = vpop.f32.mrf.mxu0
      %v1764 = vadd.f32 %v1603, %v1763
      %v1765 = vpop.f32.mrf.mxu0
      %v1766 = vpop.f32.mrf.mxu0
      %v1767 = vadd.f32 %v1606, %v1766
      %v1768 = vpop.f32.mrf.mxu0
      %1769 = vmatprep.mubr.bf16.mxu0 0
      %1770 = vmatmul.mubr.bf16.gmra.mxu0 %v1198
      %v1771 = vpop.f32.mrf.mxu0
      %v1772 = vadd.f32 %v1611, %v1771
      %v1773 = vpop.f32.mrf.mxu0
      %v1774 = vpop.f32.mrf.mxu0
      %v1775 = vadd.f32 %v1614, %v1774
      %v1776 = vpop.f32.mrf.mxu0
      %1777 = vmatprep.mubr.bf16.mxu0 0
      %1778 = vmatmul.mubr.bf16.gmra.mxu0 %v1201
      %v1779 = vpop.f32.mrf.mxu0
      %v1780 = vadd.f32 %v1619, %v1779
      %v1781 = vpop.f32.mrf.mxu0
      %v1782 = vpop.f32.mrf.mxu0
      %v1783 = vadd.f32 %v1622, %v1782
      %v1784 = vpop.f32.mrf.mxu0
      %1785 = vdwg.mxu0
      %v1834 = vunpack.c.l.b16 %v1223
      %v1835 = vunpack.c.l.b16 %v1224
      %v1836 = vunpack.c.l.b16 %v1225
      %v1837 = vunpack.c.l.b16 %v1226
      %v1838 = vunpack.c.l.b16 %v1227
      %v1839 = vunpack.c.l.b16 %v1228
      %v1840 = vunpack.c.l.b16 %v1229
      %v1841 = vunpack.c.l.b16 %v1230
      %v1842 = vunpack.c.l.b16 %v1231
      %v1843 = vunpack.c.l.b16 %v1232
      %v1844 = vunpack.c.l.b16 %v1233
      %v1845 = vunpack.c.l.b16 %v1234
      %v1846 = vunpack.c.l.b16 %v1235
      %v1847 = vunpack.c.l.b16 %v1236
      %v1848 = vunpack.c.l.b16 %v1237
      %v1849 = vunpack.c.l.b16 %v1238
      %v1850 = vunpack.c.l.b16 %v1239
      %v1851 = vunpack.c.l.b16 %v1240
      %v1852 = vunpack.c.l.b16 %v1241
      %v1853 = vunpack.c.l.b16 %v1242
      %v1854 = vunpack.c.l.b16 %v1243
      %v1855 = vunpack.c.l.b16 %v1244
      %v1856 = vunpack.c.l.b16 %v1245
      %v1857 = vunpack.c.l.b16 %v1246
      %v1858 = vunpack.c.l.b16 %v1247
      %v1859 = vunpack.c.l.b16 %v1248
      %v1860 = vunpack.c.l.b16 %v1249
      %v1861 = vunpack.c.l.b16 %v1250
      %v1862 = vunpack.c.l.b16 %v1251
      %v1863 = vunpack.c.l.b16 %v1252
      %v1864 = vunpack.c.l.b16 %v1253
      %v1865 = vunpack.c.l.b16 %v1254
      %v1866 = vunpack.c.l.b16 %v1255
      %v1867 = vunpack.c.l.b16 %v1256
      %v1868 = vunpack.c.l.b16 %v1257
      %v1869 = vunpack.c.l.b16 %v1258
      %v1870 = vunpack.c.l.b16 %v1259
      %v1871 = vunpack.c.l.b16 %v1260
      %v1872 = vunpack.c.l.b16 %v1261
      %v1873 = vunpack.c.l.b16 %v1262
      %v1874 = vunpack.c.l.b16 %v1263
      %v1875 = vunpack.c.l.b16 %v1264
      %v1876 = vunpack.c.l.b16 %v1265
      %v1877 = vunpack.c.l.b16 %v1266
      %v1878 = vunpack.c.l.b16 %v1267
      %v1879 = vunpack.c.l.b16 %v1268
      %v1880 = vunpack.c.l.b16 %v1269
      %v1881 = vunpack.c.l.b16 %v1270
      %v1882 = vpack.c.b16 %v1835, %v1834
      %v1883 = vpack.c.b16 %v1837, %v1836
      %v1884 = vpack.c.b16 %v1839, %v1838
      %v1885 = vpack.c.b16 %v1841, %v1840
      %v1886 = vpack.c.b16 %v1843, %v1842
      %v1887 = vpack.c.b16 %v1845, %v1844
      %v1888 = vpack.c.b16 %v1847, %v1846
      %v1889 = vpack.c.b16 %v1849, %v1848
      %v1890 = vpack.c.b16 %v1851, %v1850
      %v1891 = vpack.c.b16 %v1853, %v1852
      %v1892 = vpack.c.b16 %v1855, %v1854
      %v1893 = vpack.c.b16 %v1857, %v1856
      %v1894 = vpack.c.b16 %v1859, %v1858
      %v1895 = vpack.c.b16 %v1861, %v1860
      %v1896 = vpack.c.b16 %v1863, %v1862
      %v1897 = vpack.c.b16 %v1865, %v1864
      %v1898 = vpack.c.b16 %v1867, %v1866
      %v1899 = vpack.c.b16 %v1869, %v1868
      %v1900 = vpack.c.b16 %v1871, %v1870
      %v1901 = vpack.c.b16 %v1873, %v1872
      %v1902 = vpack.c.b16 %v1875, %v1874
      %v1903 = vpack.c.b16 %v1877, %v1876
      %v1904 = vpack.c.b16 %v1879, %v1878
      %v1905 = vpack.c.b16 %v1881, %v1880
      %1930 = vmatprep.subr.bf16.mxu0 0
      %1931 = vmatpush1.bf16.msra.mxu0 %v1889
      %1932 = vmatprep.subr.bf16.mxu0 0
      %1933 = vmatpush1.bf16.msra.mxu0 %v1888
      %1934 = vmatprep.subr.bf16.mxu0 0
      %1935 = vmatpush1.bf16.msra.mxu0 %v1887
      %1936 = vmatprep.subr.bf16.mxu0 0
      %1937 = vmatpush1.bf16.msra.mxu0 %v1886
      %1938 = vmatprep.subr.bf16.mxu0 0
      %1939 = vmatpush1.bf16.msra.mxu0 %v1885
      %1940 = vmatprep.subr.bf16.mxu0 0
      %1941 = vmatpush1.bf16.msra.mxu0 %v1884
      %1942 = vmatprep.subr.bf16.mxu0 0
      %1943 = vmatpush1.bf16.msra.mxu0 %v1883
      %1944 = vmatprep.subr.bf16.mxu0 0
      %1945 = vmatpush1.bf16.msra.mxu0 %v1882
      %1946 = vmatprep.subr.bf16.mxu0 0
      %1947 = vmatpush2.bf16.msra.mxu0 %v1897
      %1948 = vmatprep.subr.bf16.mxu0 0
      %1949 = vmatpush2.bf16.msra.mxu0 %v1896
      %1950 = vmatprep.subr.bf16.mxu0 0
      %1951 = vmatpush2.bf16.msra.mxu0 %v1895
      %1952 = vmatprep.subr.bf16.mxu0 0
      %1953 = vmatpush2.bf16.msra.mxu0 %v1894
      %1954 = vmatprep.subr.bf16.mxu0 0
      %1955 = vmatpush2.bf16.msra.mxu0 %v1893
      %1956 = vmatprep.subr.bf16.mxu0 0
      %1957 = vmatpush2.bf16.msra.mxu0 %v1892
      %1958 = vmatprep.subr.bf16.mxu0 0
      %1959 = vmatpush2.bf16.msra.mxu0 %v1891
      %1960 = vmatprep.subr.bf16.mxu0 0
      %1961 = vmatpush2.bf16.msra.mxu0 %v1890
      %1962 = vmatprep.mubr.bf16.mxu0 %v927
      %1963 = vmatmul.mubr.bf16.gmra.mxu0 %v825
      %v1964 = vpop.f32.mrf.mxu0
      %v1965 = vadd.f32 %v1660, %v1964
      %v1966 = vpop.f32.mrf.mxu0
      %v1967 = vpop.f32.mrf.mxu0
      %v1968 = vadd.f32 %v1663, %v1967
      %v1969 = vpop.f32.mrf.mxu0
      %1970 = vmatprep.mubr.bf16.mxu0 %v939
      %1971 = vmatmul.mubr.bf16.gmra.mxu0 %v826
      %v1972 = vpop.f32.mrf.mxu0
      %v1973 = vadd.f32 %v1668, %v1972
      %v1974 = vpop.f32.mrf.mxu0
      %v1975 = vpop.f32.mrf.mxu0
      %v1976 = vadd.f32 %v1671, %v1975
      %v1977 = vpop.f32.mrf.mxu0
      %1978 = vmatprep.mubr.bf16.mxu0 %v951
      %1979 = vmatmul.mubr.bf16.gmra.mxu0 %v827
      %v1980 = vpop.f32.mrf.mxu0
      %v1981 = vadd.f32 %v1676, %v1980
      %v1982 = vpop.f32.mrf.mxu0
      %v1983 = vpop.f32.mrf.mxu0
      %v1984 = vadd.f32 %v1679, %v1983
      %v1985 = vpop.f32.mrf.mxu0
      %1986 = vmatprep.mubr.bf16.mxu0 %v963
      %1987 = vmatmul.mubr.bf16.gmra.mxu0 %v828
      %v1988 = vpop.f32.mrf.mxu0
      %v1989 = vadd.f32 %v1684, %v1988
      %v1990 = vpop.f32.mrf.mxu0
      %v1991 = vpop.f32.mrf.mxu0
      %v1992 = vadd.f32 %v1687, %v1991
      %v1993 = vpop.f32.mrf.mxu0
      %1994 = vmatprep.mubr.bf16.mxu0 %v975
      %1995 = vmatmul.mubr.bf16.gmra.mxu0 %v829
      %v1996 = vpop.f32.mrf.mxu0
      %v1997 = vadd.f32 %v1692, %v1996
      %v1998 = vpop.f32.mrf.mxu0
      %v1999 = vpop.f32.mrf.mxu0
      %v2000 = vadd.f32 %v1695, %v1999
      %v2001 = vpop.f32.mrf.mxu0
      %2002 = vmatprep.mubr.bf16.mxu0 %v987
      %2003 = vmatmul.mubr.bf16.gmra.mxu0 %v830
      %v2004 = vpop.f32.mrf.mxu0
      %v2005 = vadd.f32 %v1700, %v2004
      %v2006 = vpop.f32.mrf.mxu0
      %v2007 = vpop.f32.mrf.mxu0
      %v2008 = vadd.f32 %v1703, %v2007
      %v2009 = vpop.f32.mrf.mxu0
      %2010 = vmatprep.mubr.bf16.mxu0 %v999
      %2011 = vmatmul.mubr.bf16.gmra.mxu0 %v831
      %v2012 = vpop.f32.mrf.mxu0
      %v2013 = vadd.f32 %v1708, %v2012
      %v2014 = vpop.f32.mrf.mxu0
      %v2015 = vpop.f32.mrf.mxu0
      %v2016 = vadd.f32 %v1711, %v2015
      %v2017 = vpop.f32.mrf.mxu0
      %2018 = vmatprep.mubr.bf16.mxu0 %v1011
      %2019 = vmatmul.mubr.bf16.gmra.mxu0 %v832
      %v2020 = vpop.f32.mrf.mxu0
      %v2021 = vadd.f32 %v1716, %v2020
      %v2022 = vpop.f32.mrf.mxu0
      %v2023 = vpop.f32.mrf.mxu0
      %v2024 = vadd.f32 %v1719, %v2023
      %v2025 = vpop.f32.mrf.mxu0
      %2026 = vmatprep.mubr.bf16.mxu0 %v1023
      %2027 = vmatmul.mubr.bf16.gmra.mxu0 %v833
      %v2028 = vpop.f32.mrf.mxu0
      %v2029 = vadd.f32 %v1724, %v2028
      %v2030 = vpop.f32.mrf.mxu0
      %v2031 = vpop.f32.mrf.mxu0
      %v2032 = vadd.f32 %v1727, %v2031
      %v2033 = vpop.f32.mrf.mxu0
      %2034 = vmatprep.mubr.bf16.mxu0 %v1035
      %2035 = vmatmul.mubr.bf16.gmra.mxu0 %v834
      %v2036 = vpop.f32.mrf.mxu0
      %v2037 = vadd.f32 %v1732, %v2036
      %v2038 = vpop.f32.mrf.mxu0
      %v2039 = vpop.f32.mrf.mxu0
      %v2040 = vadd.f32 %v1735, %v2039
      %v2041 = vpop.f32.mrf.mxu0
      %2042 = vmatprep.mubr.bf16.mxu0 %v1047
      %2043 = vmatmul.mubr.bf16.gmra.mxu0 %v835
      %v2044 = vpop.f32.mrf.mxu0
      %v2045 = vadd.f32 %v1740, %v2044
      %v2046 = vpop.f32.mrf.mxu0
      %v2047 = vpop.f32.mrf.mxu0
      %v2048 = vadd.f32 %v1743, %v2047
      %v2049 = vpop.f32.mrf.mxu0
      %2050 = vmatprep.mubr.bf16.mxu0 %v1059
      %2051 = vmatmul.mubr.bf16.gmra.mxu0 %v836
      %v2052 = vpop.f32.mrf.mxu0
      %v2053 = vadd.f32 %v1748, %v2052
      %v2054 = vpop.f32.mrf.mxu0
      %v2055 = vpop.f32.mrf.mxu0
      %v2056 = vadd.f32 %v1751, %v2055
      %v2057 = vpop.f32.mrf.mxu0
      %2058 = vmatprep.mubr.bf16.mxu0 %v1071
      %2059 = vmatmul.mubr.bf16.gmra.mxu0 %v837
      %v2060 = vpop.f32.mrf.mxu0
      %v2061 = vadd.f32 %v1756, %v2060
      %v2062 = vpop.f32.mrf.mxu0
      %v2063 = vpop.f32.mrf.mxu0
      %v2064 = vadd.f32 %v1759, %v2063
      %v2065 = vpop.f32.mrf.mxu0
      %2066 = vmatprep.mubr.bf16.mxu0 %v1083
      %2067 = vmatmul.mubr.bf16.gmra.mxu0 %v838
      %v2068 = vpop.f32.mrf.mxu0
      %v2069 = vadd.f32 %v1764, %v2068
      %v2070 = vpop.f32.mrf.mxu0
      %v2071 = vpop.f32.mrf.mxu0
      %v2072 = vadd.f32 %v1767, %v2071
      %v2073 = vpop.f32.mrf.mxu0
      %2074 = vmatprep.mubr.bf16.mxu0 %v1095
      %2075 = vmatmul.mubr.bf16.gmra.mxu0 %v839
      %v2076 = vpop.f32.mrf.mxu0
      %v2077 = vadd.f32 %v1772, %v2076
      %v2078 = vpop.f32.mrf.mxu0
      %v2079 = vpop.f32.mrf.mxu0
      %v2080 = vadd.f32 %v1775, %v2079
      %v2081 = vpop.f32.mrf.mxu0
      %2082 = vmatprep.mubr.bf16.mxu0 %v1107
      %2083 = vmatmul.mubr.bf16.gmra.mxu0 %v840
      %v2084 = vpop.f32.mrf.mxu0
      %v2085 = vadd.f32 %v1780, %v2084
      %v2086 = vpop.f32.mrf.mxu0
      %v2087 = vpop.f32.mrf.mxu0
      %v2088 = vadd.f32 %v1783, %v2087
      %v2089 = vpop.f32.mrf.mxu0
      %2090 = vdwg.mxu0
      %2091 = vmatprep.subr.bf16.mxu0 0
      %2092 = vmatpush1.bf16.msra.mxu0 %v1905
      %2093 = vmatprep.subr.bf16.mxu0 0
      %2094 = vmatpush1.bf16.msra.mxu0 %v1904
      %2095 = vmatprep.subr.bf16.mxu0 0
      %2096 = vmatpush1.bf16.msra.mxu0 %v1903
      %2097 = vmatprep.subr.bf16.mxu0 0
      %2098 = vmatpush1.bf16.msra.mxu0 %v1902
      %2099 = vmatprep.subr.bf16.mxu0 0
      %2100 = vmatpush1.bf16.msra.mxu0 %v1901
      %2101 = vmatprep.subr.bf16.mxu0 0
      %2102 = vmatpush1.bf16.msra.mxu0 %v1900
      %2103 = vmatprep.subr.bf16.mxu0 0
      %2104 = vmatpush1.bf16.msra.mxu0 %v1899
      %2105 = vmatprep.subr.bf16.mxu0 0
      %2106 = vmatpush1.bf16.msra.mxu0 %v1898
      %2107 = vmatprep.subr.bf16.mxu0 0
      %2108 = vmatpush2.bf16.msra.mxu0 0
      %2109 = vmatprep.subr.bf16.mxu0 0
      %2110 = vmatpush2.bf16.msra.mxu0 0
      %2111 = vmatprep.subr.bf16.mxu0 0
      %2112 = vmatpush2.bf16.msra.mxu0 0
      %2113 = vmatprep.subr.bf16.mxu0 0
      %2114 = vmatpush2.bf16.msra.mxu0 0
      %2115 = vmatprep.subr.bf16.mxu0 0
      %2116 = vmatpush2.bf16.msra.mxu0 0
      %2117 = vmatprep.subr.bf16.mxu0 0
      %2118 = vmatpush2.bf16.msra.mxu0 0
      %2119 = vmatprep.subr.bf16.mxu0 0
      %2120 = vmatpush2.bf16.msra.mxu0 0
      %2121 = vmatprep.subr.bf16.mxu0 0
      %2122 = vmatpush2.bf16.msra.mxu0 0
      %2123 = vmatprep.mubr.bf16.mxu0 0
      %2124 = vmatmul.mubr.bf16.gmra.mxu0 %v1153
      %v2125 = vpop.f32.mrf.mxu0
      %v2126 = vadd.f32 %v1965, %v2125
      %v2127 = vpop.f32.mrf.mxu0
      %v2128 = vpop.f32.mrf.mxu0
      %v2129 = vadd.f32 %v1968, %v2128
      %v2130 = vpop.f32.mrf.mxu0
      %2131 = vmatprep.mubr.bf16.mxu0 0
      %2132 = vmatmul.mubr.bf16.gmra.mxu0 %v1156
      %v2133 = vpop.f32.mrf.mxu0
      %v2134 = vadd.f32 %v1973, %v2133
      %v2135 = vpop.f32.mrf.mxu0
      %v2136 = vpop.f32.mrf.mxu0
      %v2137 = vadd.f32 %v1976, %v2136
      %v2138 = vpop.f32.mrf.mxu0
      %2139 = vmatprep.mubr.bf16.mxu0 0
      %2140 = vmatmul.mubr.bf16.gmra.mxu0 %v1159
      %v2141 = vpop.f32.mrf.mxu0
      %v2142 = vadd.f32 %v1981, %v2141
      %v2143 = vpop.f32.mrf.mxu0
      %v2144 = vpop.f32.mrf.mxu0
      %v2145 = vadd.f32 %v1984, %v2144
      %v2146 = vpop.f32.mrf.mxu0
      %2147 = vmatprep.mubr.bf16.mxu0 0
      %2148 = vmatmul.mubr.bf16.gmra.mxu0 %v1162
      %v2149 = vpop.f32.mrf.mxu0
      %v2150 = vadd.f32 %v1989, %v2149
      %v2151 = vpop.f32.mrf.mxu0
      %v2152 = vpop.f32.mrf.mxu0
      %v2153 = vadd.f32 %v1992, %v2152
      %v2154 = vpop.f32.mrf.mxu0
      %2155 = vmatprep.mubr.bf16.mxu0 0
      %2156 = vmatmul.mubr.bf16.gmra.mxu0 %v1165
      %v2157 = vpop.f32.mrf.mxu0
      %v2158 = vadd.f32 %v1997, %v2157
      %v2159 = vpop.f32.mrf.mxu0
      %v2160 = vpop.f32.mrf.mxu0
      %v2161 = vadd.f32 %v2000, %v2160
      %v2162 = vpop.f32.mrf.mxu0
      %2163 = vmatprep.mubr.bf16.mxu0 0
      %2164 = vmatmul.mubr.bf16.gmra.mxu0 %v1168
      %v2165 = vpop.f32.mrf.mxu0
      %v2166 = vadd.f32 %v2005, %v2165
      %v2167 = vpop.f32.mrf.mxu0
      %v2168 = vpop.f32.mrf.mxu0
      %v2169 = vadd.f32 %v2008, %v2168
      %v2170 = vpop.f32.mrf.mxu0
      %2171 = vmatprep.mubr.bf16.mxu0 0
      %2172 = vmatmul.mubr.bf16.gmra.mxu0 %v1171
      %v2173 = vpop.f32.mrf.mxu0
      %v2174 = vadd.f32 %v2013, %v2173
      %v2175 = vpop.f32.mrf.mxu0
      %v2176 = vpop.f32.mrf.mxu0
      %v2177 = vadd.f32 %v2016, %v2176
      %v2178 = vpop.f32.mrf.mxu0
      %2179 = vmatprep.mubr.bf16.mxu0 0
      %2180 = vmatmul.mubr.bf16.gmra.mxu0 %v1174
      %v2181 = vpop.f32.mrf.mxu0
      %v2182 = vadd.f32 %v2021, %v2181
      %v2183 = vpop.f32.mrf.mxu0
      %v2184 = vpop.f32.mrf.mxu0
      %v2185 = vadd.f32 %v2024, %v2184
      %v2186 = vpop.f32.mrf.mxu0
      %2187 = vmatprep.mubr.bf16.mxu0 0
      %2188 = vmatmul.mubr.bf16.gmra.mxu0 %v1177
      %v2189 = vpop.f32.mrf.mxu0
      %v2190 = vadd.f32 %v2029, %v2189
      %v2191 = vpop.f32.mrf.mxu0
      %v2192 = vpop.f32.mrf.mxu0
      %v2193 = vadd.f32 %v2032, %v2192
      %v2194 = vpop.f32.mrf.mxu0
      %2195 = vmatprep.mubr.bf16.mxu0 0
      %2196 = vmatmul.mubr.bf16.gmra.mxu0 %v1180
      %v2197 = vpop.f32.mrf.mxu0
      %v2198 = vadd.f32 %v2037, %v2197
      %v2199 = vpop.f32.mrf.mxu0
      %v2200 = vpop.f32.mrf.mxu0
      %v2201 = vadd.f32 %v2040, %v2200
      %v2202 = vpop.f32.mrf.mxu0
      %2203 = vmatprep.mubr.bf16.mxu0 0
      %2204 = vmatmul.mubr.bf16.gmra.mxu0 %v1183
      %v2205 = vpop.f32.mrf.mxu0
      %v2206 = vadd.f32 %v2045, %v2205
      %v2207 = vpop.f32.mrf.mxu0
      %v2208 = vpop.f32.mrf.mxu0
      %v2209 = vadd.f32 %v2048, %v2208
      %v2210 = vpop.f32.mrf.mxu0
      %2211 = vmatprep.mubr.bf16.mxu0 0
      %2212 = vmatmul.mubr.bf16.gmra.mxu0 %v1186
      %v2213 = vpop.f32.mrf.mxu0
      %v2214 = vadd.f32 %v2053, %v2213
      %v2215 = vpop.f32.mrf.mxu0
      %v2216 = vpop.f32.mrf.mxu0
      %v2217 = vadd.f32 %v2056, %v2216
      %v2218 = vpop.f32.mrf.mxu0
      %2219 = vmatprep.mubr.bf16.mxu0 0
      %2220 = vmatmul.mubr.bf16.gmra.mxu0 %v1189
      %v2221 = vpop.f32.mrf.mxu0
      %v2222 = vadd.f32 %v2061, %v2221
      %v2223 = vpop.f32.mrf.mxu0
      %v2224 = vpop.f32.mrf.mxu0
      %v2225 = vadd.f32 %v2064, %v2224
      %v2226 = vpop.f32.mrf.mxu0
      %2227 = vmatprep.mubr.bf16.mxu0 0
      %2228 = vmatmul.mubr.bf16.gmra.mxu0 %v1192
      %v2229 = vpop.f32.mrf.mxu0
      %v2230 = vadd.f32 %v2069, %v2229
      %v2231 = vpop.f32.mrf.mxu0
      %v2232 = vpop.f32.mrf.mxu0
      %v2233 = vadd.f32 %v2072, %v2232
      %v2234 = vpop.f32.mrf.mxu0
      %2235 = vmatprep.mubr.bf16.mxu0 0
      %2236 = vmatmul.mubr.bf16.gmra.mxu0 %v1195
      %v2237 = vpop.f32.mrf.mxu0
      %v2238 = vadd.f32 %v2077, %v2237
      %v2239 = vpop.f32.mrf.mxu0
      %v2240 = vpop.f32.mrf.mxu0
      %v2241 = vadd.f32 %v2080, %v2240
      %v2242 = vpop.f32.mrf.mxu0
      %2243 = vmatprep.mubr.bf16.mxu0 0
      %2244 = vmatmul.mubr.bf16.gmra.mxu0 %v1198
      %v2245 = vpop.f32.mrf.mxu0
      %v2246 = vadd.f32 %v2085, %v2245
      %v2247 = vpop.f32.mrf.mxu0
      %v2248 = vpop.f32.mrf.mxu0
      %v2249 = vadd.f32 %v2088, %v2248
      %v2250 = vpop.f32.mrf.mxu0
      %2251 = vdwg.mxu0
      %s2252 = scalar_lea.vmem %s1, 384
      %v2253 = vld [vmem:[%s2252] sm:$0xf]
      %v2254 = vld [vmem:[%s2252 + $0x4] sm:$0xf]
      %v2255 = vld [vmem:[%s2252 + $0x8] sm:$0xf]
      %v2256 = vld [vmem:[%s2252 + $0xc] sm:$0xf]
      %v2257 = vld [vmem:[%s2252 + $0x10] sm:$0xf]
      %v2258 = vld [vmem:[%s2252 + $0x14] sm:$0xf]
      %v2259 = vld [vmem:[%s2252 + $0x18] sm:$0xf]
      %v2260 = vld [vmem:[%s2252 + $0x1c] sm:$0xf]
      %v2261 = vld [vmem:[%s2252 + $0x20] sm:$0xf]
      %v2262 = vld [vmem:[%s2252 + $0x24] sm:$0xf]
      %v2263 = vld [vmem:[%s2252 + $0x28] sm:$0xf]
      %v2264 = vld [vmem:[%s2252 + $0x2c] sm:$0xf]
      %v2265 = vld [vmem:[%s2252 + $0x30] sm:$0xf]
      %v2266 = vld [vmem:[%s2252 + $0x34] sm:$0xf]
      %v2267 = vld [vmem:[%s2252 + $0x38] sm:$0xf]
      %v2268 = vld [vmem:[%s2252 + $0x3c] sm:$0xf]
      %v2269 = vld [vmem:[%s2252 + $0x40] sm:$0xf]
      %v2270 = vld [vmem:[%s2252 + $0x44] sm:$0xf]
      %v2271 = vld [vmem:[%s2252 + $0x48] sm:$0xf]
      %v2272 = vld [vmem:[%s2252 + $0x4c] sm:$0xf]
      %v2273 = vld [vmem:[%s2252 + $0x50] sm:$0xf]
      %v2274 = vld [vmem:[%s2252 + $0x54] sm:$0xf]
      %v2275 = vld [vmem:[%s2252 + $0x58] sm:$0xf]
      %v2276 = vld [vmem:[%s2252 + $0x5c] sm:$0xf]
      %v2277 = vld [vmem:[%s2252 + $0x60] sm:$0xf]
      %v2278 = vld [vmem:[%s2252 + $0x64] sm:$0xf]
      %v2279 = vld [vmem:[%s2252 + $0x68] sm:$0xf]
      %v2280 = vld [vmem:[%s2252 + $0x6c] sm:$0xf]
      %v2281 = vld [vmem:[%s2252 + $0x70] sm:$0xf]
      %v2282 = vld [vmem:[%s2252 + $0x74] sm:$0xf]
      %v2283 = vld [vmem:[%s2252 + $0x78] sm:$0xf]
      %v2284 = vld [vmem:[%s2252 + $0x7c] sm:$0xf]
      %v2285 = vld [vmem:[%s2252 + $0x80] sm:$0xf]
      %v2286 = vld [vmem:[%s2252 + $0x84] sm:$0xf]
      %v2287 = vld [vmem:[%s2252 + $0x88] sm:$0xf]
      %v2288 = vld [vmem:[%s2252 + $0x8c] sm:$0xf]
      %v2289 = vld [vmem:[%s2252 + $0x90] sm:$0xf]
      %v2290 = vld [vmem:[%s2252 + $0x94] sm:$0xf]
      %v2291 = vld [vmem:[%s2252 + $0x98] sm:$0xf]
      %v2292 = vld [vmem:[%s2252 + $0x9c] sm:$0xf]
      %v2293 = vld [vmem:[%s2252 + $0xa0] sm:$0xf]
      %v2294 = vld [vmem:[%s2252 + $0xa4] sm:$0xf]
      %v2295 = vld [vmem:[%s2252 + $0xa8] sm:$0xf]
      %v2296 = vld [vmem:[%s2252 + $0xac] sm:$0xf]
      %v2297 = vld [vmem:[%s2252 + $0xb0] sm:$0xf]
      %v2298 = vld [vmem:[%s2252 + $0xb4] sm:$0xf]
      %v2299 = vld [vmem:[%s2252 + $0xb8] sm:$0xf]
      %v2300 = vld [vmem:[%s2252 + $0xbc] sm:$0xf]
      %v2349 = vunpack.c.l.b16 %v2253
      %v2350 = vunpack.c.l.b16 %v2254
      %v2351 = vunpack.c.l.b16 %v2255
      %v2352 = vunpack.c.l.b16 %v2256
      %v2353 = vunpack.c.l.b16 %v2257
      %v2354 = vunpack.c.l.b16 %v2258
      %v2355 = vunpack.c.l.b16 %v2259
      %v2356 = vunpack.c.l.b16 %v2260
      %v2357 = vunpack.c.l.b16 %v2261
      %v2358 = vunpack.c.l.b16 %v2262
      %v2359 = vunpack.c.l.b16 %v2263
      %v2360 = vunpack.c.l.b16 %v2264
      %v2361 = vunpack.c.l.b16 %v2265
      %v2362 = vunpack.c.l.b16 %v2266
      %v2363 = vunpack.c.l.b16 %v2267
      %v2364 = vunpack.c.l.b16 %v2268
      %v2365 = vunpack.c.l.b16 %v2269
      %v2366 = vunpack.c.l.b16 %v2270
      %v2367 = vunpack.c.l.b16 %v2271
      %v2368 = vunpack.c.l.b16 %v2272
      %v2369 = vunpack.c.l.b16 %v2273
      %v2370 = vunpack.c.l.b16 %v2274
      %v2371 = vunpack.c.l.b16 %v2275
      %v2372 = vunpack.c.l.b16 %v2276
      %v2373 = vunpack.c.l.b16 %v2277
      %v2374 = vunpack.c.l.b16 %v2278
      %v2375 = vunpack.c.l.b16 %v2279
      %v2376 = vunpack.c.l.b16 %v2280
      %v2377 = vunpack.c.l.b16 %v2281
      %v2378 = vunpack.c.l.b16 %v2282
      %v2379 = vunpack.c.l.b16 %v2283
      %v2380 = vunpack.c.l.b16 %v2284
      %v2381 = vunpack.c.l.b16 %v2285
      %v2382 = vunpack.c.l.b16 %v2286
      %v2383 = vunpack.c.l.b16 %v2287
      %v2384 = vunpack.c.l.b16 %v2288
      %v2385 = vunpack.c.l.b16 %v2289
      %v2386 = vunpack.c.l.b16 %v2290
      %v2387 = vunpack.c.l.b16 %v2291
      %v2388 = vunpack.c.l.b16 %v2292
      %v2389 = vunpack.c.l.b16 %v2293
      %v2390 = vunpack.c.l.b16 %v2294
      %v2391 = vunpack.c.l.b16 %v2295
      %v2392 = vunpack.c.l.b16 %v2296
      %v2393 = vunpack.c.l.b16 %v2297
      %v2394 = vunpack.c.l.b16 %v2298
      %v2395 = vunpack.c.l.b16 %v2299
      %v2396 = vunpack.c.l.b16 %v2300
      %v2397 = vpack.c.b16 %v2350, %v2349
      %v2398 = vpack.c.b16 %v2352, %v2351
      %v2399 = vpack.c.b16 %v2354, %v2353
      %v2400 = vpack.c.b16 %v2356, %v2355
      %v2401 = vpack.c.b16 %v2358, %v2357
      %v2402 = vpack.c.b16 %v2360, %v2359
      %v2403 = vpack.c.b16 %v2362, %v2361
      %v2404 = vpack.c.b16 %v2364, %v2363
      %v2405 = vpack.c.b16 %v2366, %v2365
      %v2406 = vpack.c.b16 %v2368, %v2367
      %v2407 = vpack.c.b16 %v2370, %v2369
      %v2408 = vpack.c.b16 %v2372, %v2371
      %v2409 = vpack.c.b16 %v2374, %v2373
      %v2410 = vpack.c.b16 %v2376, %v2375
      %v2411 = vpack.c.b16 %v2378, %v2377
      %v2412 = vpack.c.b16 %v2380, %v2379
      %v2413 = vpack.c.b16 %v2382, %v2381
      %v2414 = vpack.c.b16 %v2384, %v2383
      %v2415 = vpack.c.b16 %v2386, %v2385
      %v2416 = vpack.c.b16 %v2388, %v2387
      %v2417 = vpack.c.b16 %v2390, %v2389
      %v2418 = vpack.c.b16 %v2392, %v2391
      %v2419 = vpack.c.b16 %v2394, %v2393
      %v2420 = vpack.c.b16 %v2396, %v2395
      %2445 = vmatprep.subr.bf16.mxu0 0
      %2446 = vmatpush1.bf16.msra.mxu0 %v2404
      %2447 = vmatprep.subr.bf16.mxu0 0
      %2448 = vmatpush1.bf16.msra.mxu0 %v2403
      %2449 = vmatprep.subr.bf16.mxu0 0
      %2450 = vmatpush1.bf16.msra.mxu0 %v2402
      %2451 = vmatprep.subr.bf16.mxu0 0
      %2452 = vmatpush1.bf16.msra.mxu0 %v2401
      %2453 = vmatprep.subr.bf16.mxu0 0
      %2454 = vmatpush1.bf16.msra.mxu0 %v2400
      %2455 = vmatprep.subr.bf16.mxu0 0
      %2456 = vmatpush1.bf16.msra.mxu0 %v2399
      %2457 = vmatprep.subr.bf16.mxu0 0
      %2458 = vmatpush1.bf16.msra.mxu0 %v2398
      %2459 = vmatprep.subr.bf16.mxu0 0
      %2460 = vmatpush1.bf16.msra.mxu0 %v2397
      %2461 = vmatprep.subr.bf16.mxu0 0
      %2462 = vmatpush2.bf16.msra.mxu0 %v2412
      %2463 = vmatprep.subr.bf16.mxu0 0
      %2464 = vmatpush2.bf16.msra.mxu0 %v2411
      %2465 = vmatprep.subr.bf16.mxu0 0
      %2466 = vmatpush2.bf16.msra.mxu0 %v2410
      %2467 = vmatprep.subr.bf16.mxu0 0
      %2468 = vmatpush2.bf16.msra.mxu0 %v2409
      %2469 = vmatprep.subr.bf16.mxu0 0
      %2470 = vmatpush2.bf16.msra.mxu0 %v2408
      %2471 = vmatprep.subr.bf16.mxu0 0
      %2472 = vmatpush2.bf16.msra.mxu0 %v2407
      %2473 = vmatprep.subr.bf16.mxu0 0
      %2474 = vmatpush2.bf16.msra.mxu0 %v2406
      %2475 = vmatprep.subr.bf16.mxu0 0
      %2476 = vmatpush2.bf16.msra.mxu0 %v2405
      %2477 = vmatprep.mubr.bf16.mxu0 %v951
      %2478 = vmatmul.mubr.bf16.gmra.mxu0 %v827
      %v2479 = vpop.f32.mrf.mxu0
      %v2480 = vadd.f32 0.0, %v2479
      %v2481 = vpop.f32.mrf.mxu0
      %v2482 = vpop.f32.mrf.mxu0
      %v2483 = vadd.f32 0.0, %v2482
      %v2484 = vpop.f32.mrf.mxu0
      %2485 = vmatprep.mubr.bf16.mxu0 %v963
      %2486 = vmatmul.mubr.bf16.gmra.mxu0 %v828
      %v2487 = vpop.f32.mrf.mxu0
      %v2488 = vadd.f32 0.0, %v2487
      %v2489 = vpop.f32.mrf.mxu0
      %v2490 = vpop.f32.mrf.mxu0
      %v2491 = vadd.f32 0.0, %v2490
      %v2492 = vpop.f32.mrf.mxu0
      %2493 = vmatprep.mubr.bf16.mxu0 %v975
      %2494 = vmatmul.mubr.bf16.gmra.mxu0 %v829
      %v2495 = vpop.f32.mrf.mxu0
      %v2496 = vadd.f32 0.0, %v2495
      %v2497 = vpop.f32.mrf.mxu0
      %v2498 = vpop.f32.mrf.mxu0
      %v2499 = vadd.f32 0.0, %v2498
      %v2500 = vpop.f32.mrf.mxu0
      %2501 = vmatprep.mubr.bf16.mxu0 %v987
      %2502 = vmatmul.mubr.bf16.gmra.mxu0 %v830
      %v2503 = vpop.f32.mrf.mxu0
      %v2504 = vadd.f32 0.0, %v2503
      %v2505 = vpop.f32.mrf.mxu0
      %v2506 = vpop.f32.mrf.mxu0
      %v2507 = vadd.f32 0.0, %v2506
      %v2508 = vpop.f32.mrf.mxu0
      %2509 = vmatprep.mubr.bf16.mxu0 %v999
      %2510 = vmatmul.mubr.bf16.gmra.mxu0 %v831
      %v2511 = vpop.f32.mrf.mxu0
      %v2512 = vadd.f32 0.0, %v2511
      %v2513 = vpop.f32.mrf.mxu0
      %v2514 = vpop.f32.mrf.mxu0
      %v2515 = vadd.f32 0.0, %v2514
      %v2516 = vpop.f32.mrf.mxu0
      %2517 = vmatprep.mubr.bf16.mxu0 %v1011
      %2518 = vmatmul.mubr.bf16.gmra.mxu0 %v832
      %v2519 = vpop.f32.mrf.mxu0
      %v2520 = vadd.f32 0.0, %v2519
      %v2521 = vpop.f32.mrf.mxu0
      %v2522 = vpop.f32.mrf.mxu0
      %v2523 = vadd.f32 0.0, %v2522
      %v2524 = vpop.f32.mrf.mxu0
      %2525 = vmatprep.mubr.bf16.mxu0 %v1023
      %2526 = vmatmul.mubr.bf16.gmra.mxu0 %v833
      %v2527 = vpop.f32.mrf.mxu0
      %v2528 = vadd.f32 0.0, %v2527
      %v2529 = vpop.f32.mrf.mxu0
      %v2530 = vpop.f32.mrf.mxu0
      %v2531 = vadd.f32 0.0, %v2530
      %v2532 = vpop.f32.mrf.mxu0
      %2533 = vmatprep.mubr.bf16.mxu0 %v1035
      %2534 = vmatmul.mubr.bf16.gmra.mxu0 %v834
      %v2535 = vpop.f32.mrf.mxu0
      %v2536 = vadd.f32 0.0, %v2535
      %v2537 = vpop.f32.mrf.mxu0
      %v2538 = vpop.f32.mrf.mxu0
      %v2539 = vadd.f32 0.0, %v2538
      %v2540 = vpop.f32.mrf.mxu0
      %2541 = vmatprep.mubr.bf16.mxu0 %v1047
      %2542 = vmatmul.mubr.bf16.gmra.mxu0 %v835
      %v2543 = vpop.f32.mrf.mxu0
      %v2544 = vadd.f32 0.0, %v2543
      %v2545 = vpop.f32.mrf.mxu0
      %v2546 = vpop.f32.mrf.mxu0
      %v2547 = vadd.f32 0.0, %v2546
      %v2548 = vpop.f32.mrf.mxu0
      %2549 = vmatprep.mubr.bf16.mxu0 %v1059
      %2550 = vmatmul.mubr.bf16.gmra.mxu0 %v836
      %v2551 = vpop.f32.mrf.mxu0
      %v2552 = vadd.f32 0.0, %v2551
      %v2553 = vpop.f32.mrf.mxu0
      %v2554 = vpop.f32.mrf.mxu0
      %v2555 = vadd.f32 0.0, %v2554
      %v2556 = vpop.f32.mrf.mxu0
      %2557 = vmatprep.mubr.bf16.mxu0 %v1071
      %2558 = vmatmul.mubr.bf16.gmra.mxu0 %v837
      %v2559 = vpop.f32.mrf.mxu0
      %v2560 = vadd.f32 0.0, %v2559
      %v2561 = vpop.f32.mrf.mxu0
      %v2562 = vpop.f32.mrf.mxu0
      %v2563 = vadd.f32 0.0, %v2562
      %v2564 = vpop.f32.mrf.mxu0
      %2565 = vmatprep.mubr.bf16.mxu0 %v1083
      %2566 = vmatmul.mubr.bf16.gmra.mxu0 %v838
      %v2567 = vpop.f32.mrf.mxu0
      %v2568 = vadd.f32 0.0, %v2567
      %v2569 = vpop.f32.mrf.mxu0
      %v2570 = vpop.f32.mrf.mxu0
      %v2571 = vadd.f32 0.0, %v2570
      %v2572 = vpop.f32.mrf.mxu0
      %2573 = vmatprep.mubr.bf16.mxu0 %v1095
      %2574 = vmatmul.mubr.bf16.gmra.mxu0 %v839
      %v2575 = vpop.f32.mrf.mxu0
      %v2576 = vadd.f32 0.0, %v2575
      %v2577 = vpop.f32.mrf.mxu0
      %v2578 = vpop.f32.mrf.mxu0
      %v2579 = vadd.f32 0.0, %v2578
      %v2580 = vpop.f32.mrf.mxu0
      %2581 = vmatprep.mubr.bf16.mxu0 %v1107
      %2582 = vmatmul.mubr.bf16.gmra.mxu0 %v840
      %v2583 = vpop.f32.mrf.mxu0
      %v2584 = vadd.f32 0.0, %v2583
      %v2585 = vpop.f32.mrf.mxu0
      %v2586 = vpop.f32.mrf.mxu0
      %v2587 = vadd.f32 0.0, %v2586
      %v2588 = vpop.f32.mrf.mxu0
      %2589 = vmatprep.mubr.bf16.mxu0 %v1119
      %2590 = vmatmul.mubr.bf16.gmra.mxu0 %v841
      %v2591 = vpop.f32.mrf.mxu0
      %v2592 = vadd.f32 0.0, %v2591
      %v2593 = vpop.f32.mrf.mxu0
      %v2594 = vpop.f32.mrf.mxu0
      %v2595 = vadd.f32 0.0, %v2594
      %v2596 = vpop.f32.mrf.mxu0
      %2597 = vmatprep.mubr.bf16.mxu0 %v1131
      %2598 = vmatmul.mubr.bf16.gmra.mxu0 %v842
      %v2599 = vpop.f32.mrf.mxu0
      %v2600 = vadd.f32 0.0, %v2599
      %v2601 = vpop.f32.mrf.mxu0
      %v2602 = vpop.f32.mrf.mxu0
      %v2603 = vadd.f32 0.0, %v2602
      %v2604 = vpop.f32.mrf.mxu0
      %2605 = vdwg.mxu0
      %2606 = vmatprep.subr.bf16.mxu0 0
      %2607 = vmatpush1.bf16.msra.mxu0 %v2420
      %2608 = vmatprep.subr.bf16.mxu0 0
      %2609 = vmatpush1.bf16.msra.mxu0 %v2419
      %2610 = vmatprep.subr.bf16.mxu0 0
      %2611 = vmatpush1.bf16.msra.mxu0 %v2418
      %2612 = vmatprep.subr.bf16.mxu0 0
      %2613 = vmatpush1.bf16.msra.mxu0 %v2417
      %2614 = vmatprep.subr.bf16.mxu0 0
      %2615 = vmatpush1.bf16.msra.mxu0 %v2416
      %2616 = vmatprep.subr.bf16.mxu0 0
      %2617 = vmatpush1.bf16.msra.mxu0 %v2415
      %2618 = vmatprep.subr.bf16.mxu0 0
      %2619 = vmatpush1.bf16.msra.mxu0 %v2414
      %2620 = vmatprep.subr.bf16.mxu0 0
      %2621 = vmatpush1.bf16.msra.mxu0 %v2413
      %2622 = vmatprep.subr.bf16.mxu0 0
      %2623 = vmatpush2.bf16.msra.mxu0 0
      %2624 = vmatprep.subr.bf16.mxu0 0
      %2625 = vmatpush2.bf16.msra.mxu0 0
      %2626 = vmatprep.subr.bf16.mxu0 0
      %2627 = vmatpush2.bf16.msra.mxu0 0
      %2628 = vmatprep.subr.bf16.mxu0 0
      %2629 = vmatpush2.bf16.msra.mxu0 0
      %2630 = vmatprep.subr.bf16.mxu0 0
      %2631 = vmatpush2.bf16.msra.mxu0 0
      %2632 = vmatprep.subr.bf16.mxu0 0
      %2633 = vmatpush2.bf16.msra.mxu0 0
      %2634 = vmatprep.subr.bf16.mxu0 0
      %2635 = vmatpush2.bf16.msra.mxu0 0
      %2636 = vmatprep.subr.bf16.mxu0 0
      %2637 = vmatpush2.bf16.msra.mxu0 0
      %2638 = vmatprep.mubr.bf16.mxu0 0
      %2639 = vmatmul.mubr.bf16.gmra.mxu0 %v1159
      %v2640 = vpop.f32.mrf.mxu0
      %v2641 = vadd.f32 %v2480, %v2640
      %v2642 = vpop.f32.mrf.mxu0
      %v2643 = vpop.f32.mrf.mxu0
      %v2644 = vadd.f32 %v2483, %v2643
      %v2645 = vpop.f32.mrf.mxu0
      %2646 = vmatprep.mubr.bf16.mxu0 0
      %2647 = vmatmul.mubr.bf16.gmra.mxu0 %v1162
      %v2648 = vpop.f32.mrf.mxu0
      %v2649 = vadd.f32 %v2488, %v2648
      %v2650 = vpop.f32.mrf.mxu0
      %v2651 = vpop.f32.mrf.mxu0
      %v2652 = vadd.f32 %v2491, %v2651
      %v2653 = vpop.f32.mrf.mxu0
      %2654 = vmatprep.mubr.bf16.mxu0 0
      %2655 = vmatmul.mubr.bf16.gmra.mxu0 %v1165
      %v2656 = vpop.f32.mrf.mxu0
      %v2657 = vadd.f32 %v2496, %v2656
      %v2658 = vpop.f32.mrf.mxu0
      %v2659 = vpop.f32.mrf.mxu0
      %v2660 = vadd.f32 %v2499, %v2659
      %v2661 = vpop.f32.mrf.mxu0
      %2662 = vmatprep.mubr.bf16.mxu0 0
      %2663 = vmatmul.mubr.bf16.gmra.mxu0 %v1168
      %v2664 = vpop.f32.mrf.mxu0
      %v2665 = vadd.f32 %v2504, %v2664
      %v2666 = vpop.f32.mrf.mxu0
      %v2667 = vpop.f32.mrf.mxu0
      %v2668 = vadd.f32 %v2507, %v2667
      %v2669 = vpop.f32.mrf.mxu0
      %2670 = vmatprep.mubr.bf16.mxu0 0
      %2671 = vmatmul.mubr.bf16.gmra.mxu0 %v1171
      %v2672 = vpop.f32.mrf.mxu0
      %v2673 = vadd.f32 %v2512, %v2672
      %v2674 = vpop.f32.mrf.mxu0
      %v2675 = vpop.f32.mrf.mxu0
      %v2676 = vadd.f32 %v2515, %v2675
      %v2677 = vpop.f32.mrf.mxu0
      %2678 = vmatprep.mubr.bf16.mxu0 0
      %2679 = vmatmul.mubr.bf16.gmra.mxu0 %v1174
      %v2680 = vpop.f32.mrf.mxu0
      %v2681 = vadd.f32 %v2520, %v2680
      %v2682 = vpop.f32.mrf.mxu0
      %v2683 = vpop.f32.mrf.mxu0
      %v2684 = vadd.f32 %v2523, %v2683
      %v2685 = vpop.f32.mrf.mxu0
      %2686 = vmatprep.mubr.bf16.mxu0 0
      %2687 = vmatmul.mubr.bf16.gmra.mxu0 %v1177
      %v2688 = vpop.f32.mrf.mxu0
      %v2689 = vadd.f32 %v2528, %v2688
      %v2690 = vpop.f32.mrf.mxu0
      %v2691 = vpop.f32.mrf.mxu0
      %v2692 = vadd.f32 %v2531, %v2691
      %v2693 = vpop.f32.mrf.mxu0
      %2694 = vmatprep.mubr.bf16.mxu0 0
      %2695 = vmatmul.mubr.bf16.gmra.mxu0 %v1180
      %v2696 = vpop.f32.mrf.mxu0
      %v2697 = vadd.f32 %v2536, %v2696
      %v2698 = vpop.f32.mrf.mxu0
      %v2699 = vpop.f32.mrf.mxu0
      %v2700 = vadd.f32 %v2539, %v2699
      %v2701 = vpop.f32.mrf.mxu0
      %2702 = vmatprep.mubr.bf16.mxu0 0
      %2703 = vmatmul.mubr.bf16.gmra.mxu0 %v1183
      %v2704 = vpop.f32.mrf.mxu0
      %v2705 = vadd.f32 %v2544, %v2704
      %v2706 = vpop.f32.mrf.mxu0
      %v2707 = vpop.f32.mrf.mxu0
      %v2708 = vadd.f32 %v2547, %v2707
      %v2709 = vpop.f32.mrf.mxu0
      %2710 = vmatprep.mubr.bf16.mxu0 0
      %2711 = vmatmul.mubr.bf16.gmra.mxu0 %v1186
      %v2712 = vpop.f32.mrf.mxu0
      %v2713 = vadd.f32 %v2552, %v2712
      %v2714 = vpop.f32.mrf.mxu0
      %v2715 = vpop.f32.mrf.mxu0
      %v2716 = vadd.f32 %v2555, %v2715
      %v2717 = vpop.f32.mrf.mxu0
      %2718 = vmatprep.mubr.bf16.mxu0 0
      %2719 = vmatmul.mubr.bf16.gmra.mxu0 %v1189
      %v2720 = vpop.f32.mrf.mxu0
      %v2721 = vadd.f32 %v2560, %v2720
      %v2722 = vpop.f32.mrf.mxu0
      %v2723 = vpop.f32.mrf.mxu0
      %v2724 = vadd.f32 %v2563, %v2723
      %v2725 = vpop.f32.mrf.mxu0
      %2726 = vmatprep.mubr.bf16.mxu0 0
      %2727 = vmatmul.mubr.bf16.gmra.mxu0 %v1192
      %v2728 = vpop.f32.mrf.mxu0
      %v2729 = vadd.f32 %v2568, %v2728
      %v2730 = vpop.f32.mrf.mxu0
      %v2731 = vpop.f32.mrf.mxu0
      %v2732 = vadd.f32 %v2571, %v2731
      %v2733 = vpop.f32.mrf.mxu0
      %2734 = vmatprep.mubr.bf16.mxu0 0
      %2735 = vmatmul.mubr.bf16.gmra.mxu0 %v1195
      %v2736 = vpop.f32.mrf.mxu0
      %v2737 = vadd.f32 %v2576, %v2736
      %v2738 = vpop.f32.mrf.mxu0
      %v2739 = vpop.f32.mrf.mxu0
      %v2740 = vadd.f32 %v2579, %v2739
      %v2741 = vpop.f32.mrf.mxu0
      %2742 = vmatprep.mubr.bf16.mxu0 0
      %2743 = vmatmul.mubr.bf16.gmra.mxu0 %v1198
      %v2744 = vpop.f32.mrf.mxu0
      %v2745 = vadd.f32 %v2584, %v2744
      %v2746 = vpop.f32.mrf.mxu0
      %v2747 = vpop.f32.mrf.mxu0
      %v2748 = vadd.f32 %v2587, %v2747
      %v2749 = vpop.f32.mrf.mxu0
      %2750 = vmatprep.mubr.bf16.mxu0 0
      %2751 = vmatmul.mubr.bf16.gmra.mxu0 %v1201
      %v2752 = vpop.f32.mrf.mxu0
      %v2753 = vadd.f32 %v2592, %v2752
      %v2754 = vpop.f32.mrf.mxu0
      %v2755 = vpop.f32.mrf.mxu0
      %v2756 = vadd.f32 %v2595, %v2755
      %v2757 = vpop.f32.mrf.mxu0
      %2758 = vmatprep.mubr.bf16.mxu0 0
      %2759 = vmatmul.mubr.bf16.gmra.mxu0 %v1204
      %v2760 = vpop.f32.mrf.mxu0
      %v2761 = vadd.f32 %v2600, %v2760
      %v2762 = vpop.f32.mrf.mxu0
      %v2763 = vpop.f32.mrf.mxu0
      %v2764 = vadd.f32 %v2603, %v2763
      %v2765 = vpop.f32.mrf.mxu0
      %2766 = vdwg.mxu0
      %v2767 = vadd.f32 %v2126, %v2641
      %v2768 = vadd.f32 %v2129, %v2644
      %v2769 = vadd.f32 %v2134, %v2649
      %v2770 = vadd.f32 %v2137, %v2652
      %v2771 = vadd.f32 %v2142, %v2657
      %v2772 = vadd.f32 %v2145, %v2660
      %v2773 = vadd.f32 %v2150, %v2665
      %v2774 = vadd.f32 %v2153, %v2668
      %v2775 = vadd.f32 %v2158, %v2673
      %v2776 = vadd.f32 %v2161, %v2676
      %v2777 = vadd.f32 %v2166, %v2681
      %v2778 = vadd.f32 %v2169, %v2684
      %v2779 = vadd.f32 %v2174, %v2689
      %v2780 = vadd.f32 %v2177, %v2692
      %v2781 = vadd.f32 %v2182, %v2697
      %v2782 = vadd.f32 %v2185, %v2700
      %v2783 = vadd.f32 %v2190, %v2705
      %v2784 = vadd.f32 %v2193, %v2708
      %v2785 = vadd.f32 %v2198, %v2713
      %v2786 = vadd.f32 %v2201, %v2716
      %v2787 = vadd.f32 %v2206, %v2721
      %v2788 = vadd.f32 %v2209, %v2724
      %v2789 = vadd.f32 %v2214, %v2729
      %v2790 = vadd.f32 %v2217, %v2732
      %v2791 = vadd.f32 %v2222, %v2737
      %v2792 = vadd.f32 %v2225, %v2740
      %v2793 = vadd.f32 %v2230, %v2745
      %v2794 = vadd.f32 %v2233, %v2748
      %v2795 = vadd.f32 %v2238, %v2753
      %v2796 = vadd.f32 %v2241, %v2756
      %v2797 = vadd.f32 %v2246, %v2761
      %v2798 = vadd.f32 %v2249, %v2764
      %v2799 = vld [vmem:[%s2] sm:$0x1]
      %v2801 = vlaneseq
      %v2802 = vshrl.u32 %v2801, 7
      %v2803 = vsub.s32 0, %v2802
      %v2804 = vrot.slane %v2799, %v2803
      %v2806 = vadd.f32 %v2767, %v2804
      %v2807 = vadd.f32 %v2768, %v2804
      %v2808 = vadd.f32 %v2769, %v2804
      %v2809 = vadd.f32 %v2770, %v2804
      %v2810 = vadd.f32 %v2771, %v2804
      %v2811 = vadd.f32 %v2772, %v2804
      %v2812 = vadd.f32 %v2773, %v2804
      %v2813 = vadd.f32 %v2774, %v2804
      %v2814 = vadd.f32 %v2775, %v2804
      %v2815 = vadd.f32 %v2776, %v2804
      %v2816 = vadd.f32 %v2777, %v2804
      %v2817 = vadd.f32 %v2778, %v2804
      %v2818 = vadd.f32 %v2779, %v2804
      %v2819 = vadd.f32 %v2780, %v2804
      %v2820 = vadd.f32 %v2781, %v2804
      %v2821 = vadd.f32 %v2782, %v2804
      %v2822 = vadd.f32 %v2783, %v2804
      %v2823 = vadd.f32 %v2784, %v2804
      %v2824 = vadd.f32 %v2785, %v2804
      %v2825 = vadd.f32 %v2786, %v2804
      %v2826 = vadd.f32 %v2787, %v2804
      %v2827 = vadd.f32 %v2788, %v2804
      %v2828 = vadd.f32 %v2789, %v2804
      %v2829 = vadd.f32 %v2790, %v2804
      %v2830 = vadd.f32 %v2791, %v2804
      %v2831 = vadd.f32 %v2792, %v2804
      %v2832 = vadd.f32 %v2793, %v2804
      %v2833 = vadd.f32 %v2794, %v2804
      %v2834 = vadd.f32 %v2795, %v2804
      %v2835 = vadd.f32 %v2796, %v2804
      %v2836 = vadd.f32 %v2797, %v2804
      %v2837 = vadd.f32 %v2798, %v2804
      %v2838 = vmax.f32 %v2806, 0.0
      %v2839 = vmax.f32 %v2807, 0.0
      %v2840 = vmax.f32 %v2808, 0.0
      %v2841 = vmax.f32 %v2809, 0.0
      %v2842 = vmax.f32 %v2810, 0.0
      %v2843 = vmax.f32 %v2811, 0.0
      %v2844 = vmax.f32 %v2812, 0.0
      %v2845 = vmax.f32 %v2813, 0.0
      %v2846 = vmax.f32 %v2814, 0.0
      %v2847 = vmax.f32 %v2815, 0.0
      %v2848 = vmax.f32 %v2816, 0.0
      %v2849 = vmax.f32 %v2817, 0.0
      %v2850 = vmax.f32 %v2818, 0.0
      %v2851 = vmax.f32 %v2819, 0.0
      %v2852 = vmax.f32 %v2820, 0.0
      %v2853 = vmax.f32 %v2821, 0.0
      %v2854 = vmax.f32 %v2822, 0.0
      %v2855 = vmax.f32 %v2823, 0.0
      %v2856 = vmax.f32 %v2824, 0.0
      %v2857 = vmax.f32 %v2825, 0.0
      %v2858 = vmax.f32 %v2826, 0.0
      %v2859 = vmax.f32 %v2827, 0.0
      %v2860 = vmax.f32 %v2828, 0.0
      %v2861 = vmax.f32 %v2829, 0.0
      %v2862 = vmax.f32 %v2830, 0.0
      %v2863 = vmax.f32 %v2831, 0.0
      %v2864 = vmax.f32 %v2832, 0.0
      %v2865 = vmax.f32 %v2833, 0.0
      %v2866 = vmax.f32 %v2834, 0.0
      %v2867 = vmax.f32 %v2835, 0.0
      %v2868 = vmax.f32 %v2836, 0.0
      %v2869 = vmax.f32 %v2837, 0.0
      %v2870 = vpack.c.bf16 %v2839, %v2838
      %v2871 = vpack.c.bf16 %v2841, %v2840
      %v2872 = vpack.c.bf16 %v2843, %v2842
      %v2873 = vpack.c.bf16 %v2845, %v2844
      %v2874 = vpack.c.bf16 %v2847, %v2846
      %v2875 = vpack.c.bf16 %v2849, %v2848
      %v2876 = vpack.c.bf16 %v2851, %v2850
      %v2877 = vpack.c.bf16 %v2853, %v2852
      %v2878 = vpack.c.bf16 %v2855, %v2854
      %v2879 = vpack.c.bf16 %v2857, %v2856
      %v2880 = vpack.c.bf16 %v2859, %v2858
      %v2881 = vpack.c.bf16 %v2861, %v2860
      %v2882 = vpack.c.bf16 %v2863, %v2862
      %v2883 = vpack.c.bf16 %v2865, %v2864
      %v2884 = vpack.c.bf16 %v2867, %v2866
      %v2885 = vpack.c.bf16 %v2869, %v2868
      %v2902 = vunpack.c.l.b16 %v2870
      %v2903 = vunpack.c.h.b16 %v2870
      %v2904 = vunpack.c.l.b16 %v2871
      %v2905 = vunpack.c.h.b16 %v2871
      %v2906 = vunpack.c.l.b16 %v2872
      %v2907 = vunpack.c.h.b16 %v2872
      %v2908 = vunpack.c.l.b16 %v2873
      %v2909 = vunpack.c.h.b16 %v2873
      %v2910 = vunpack.c.l.b16 %v2874
      %v2911 = vunpack.c.h.b16 %v2874
      %v2912 = vunpack.c.l.b16 %v2875
      %v2913 = vunpack.c.h.b16 %v2875
      %v2914 = vunpack.c.l.b16 %v2876
      %v2915 = vunpack.c.h.b16 %v2876
      %v2916 = vunpack.c.l.b16 %v2877
      %v2917 = vunpack.c.h.b16 %v2877
      %v2918 = vunpack.c.l.b16 %v2878
      %v2919 = vunpack.c.h.b16 %v2878
      %v2920 = vunpack.c.l.b16 %v2879
      %v2921 = vunpack.c.h.b16 %v2879
      %v2922 = vunpack.c.l.b16 %v2880
      %v2923 = vunpack.c.h.b16 %v2880
      %v2924 = vunpack.c.l.b16 %v2881
      %v2925 = vunpack.c.h.b16 %v2881
      %v2926 = vunpack.c.l.b16 %v2882
      %v2927 = vunpack.c.h.b16 %v2882
      %v2928 = vunpack.c.l.b16 %v2883
      %v2929 = vunpack.c.h.b16 %v2883
      %v2930 = vunpack.c.l.b16 %v2884
      %v2931 = vunpack.c.h.b16 %v2884
      %v2932 = vunpack.c.l.b16 %v2885
      %v2933 = vunpack.c.h.b16 %v2885
      %v2934 = vpack.c.b16 %v2902, %v2902
      %v2935 = vpack.c.b16 %v2903, %v2903
      %v2936 = vpack.c.b16 %v2904, %v2904
      %v2937 = vpack.c.b16 %v2905, %v2905
      %v2938 = vpack.c.b16 %v2906, %v2906
      %v2939 = vpack.c.b16 %v2907, %v2907
      %v2940 = vpack.c.b16 %v2908, %v2908
      %v2941 = vpack.c.b16 %v2909, %v2909
      %v2942 = vpack.c.b16 %v2910, %v2910
      %v2943 = vpack.c.b16 %v2911, %v2911
      %v2944 = vpack.c.b16 %v2912, %v2912
      %v2945 = vpack.c.b16 %v2913, %v2913
      %v2946 = vpack.c.b16 %v2914, %v2914
      %v2947 = vpack.c.b16 %v2915, %v2915
      %v2948 = vpack.c.b16 %v2916, %v2916
      %v2949 = vpack.c.b16 %v2917, %v2917
      %v2950 = vpack.c.b16 %v2918, %v2918
      %v2951 = vpack.c.b16 %v2919, %v2919
      %v2952 = vpack.c.b16 %v2920, %v2920
      %v2953 = vpack.c.b16 %v2921, %v2921
      %v2954 = vpack.c.b16 %v2922, %v2922
      %v2955 = vpack.c.b16 %v2923, %v2923
      %v2956 = vpack.c.b16 %v2924, %v2924
      %v2957 = vpack.c.b16 %v2925, %v2925
      %v2958 = vpack.c.b16 %v2926, %v2926
      %v2959 = vpack.c.b16 %v2927, %v2927
      %v2960 = vpack.c.b16 %v2928, %v2928
      %v2961 = vpack.c.b16 %v2929, %v2929
      %v2962 = vpack.c.b16 %v2930, %v2930
      %v2963 = vpack.c.b16 %v2931, %v2931
      %v2964 = vpack.c.b16 %v2932, %v2932
      %v2965 = vpack.c.b16 %v2933, %v2933
      %2998 = vst [vmem:[%s170] sm:$0xf] %v2934
      %2999 = vst [vmem:[%s170 + $0x4] sm:$0xf] %v2935
      %3000 = vst [vmem:[%s170 + $0x8] sm:$0xf] %v2936
      %3001 = vst [vmem:[%s170 + $0xc] sm:$0xf] %v2937
      %3002 = vst [vmem:[%s170 + $0x10] sm:$0xf] %v2938
      %3003 = vst [vmem:[%s170 + $0x14] sm:$0xf] %v2939
      %3004 = vst [vmem:[%s170 + $0x18] sm:$0xf] %v2940
      %3005 = vst [vmem:[%s170 + $0x1c] sm:$0xf] %v2941
      %3006 = vst [vmem:[%s170 + $0x20] sm:$0xf] %v2942
      %3007 = vst [vmem:[%s170 + $0x24] sm:$0xf] %v2943
      %3008 = vst [vmem:[%s170 + $0x28] sm:$0xf] %v2944
      %3009 = vst [vmem:[%s170 + $0x2c] sm:$0xf] %v2945
      %3010 = vst [vmem:[%s170 + $0x30] sm:$0xf] %v2946
      %3011 = vst [vmem:[%s170 + $0x34] sm:$0xf] %v2947
      %3012 = vst [vmem:[%s170 + $0x38] sm:$0xf] %v2948
      %3013 = vst [vmem:[%s170 + $0x3c] sm:$0xf] %v2949
      %3014 = vst [vmem:[%s170 + $0x40] sm:$0xf] %v2950
      %3015 = vst [vmem:[%s170 + $0x44] sm:$0xf] %v2951
      %3016 = vst [vmem:[%s170 + $0x48] sm:$0xf] %v2952
      %3017 = vst [vmem:[%s170 + $0x4c] sm:$0xf] %v2953
      %3018 = vst [vmem:[%s170 + $0x50] sm:$0xf] %v2954
      %3019 = vst [vmem:[%s170 + $0x54] sm:$0xf] %v2955
      %3020 = vst [vmem:[%s170 + $0x58] sm:$0xf] %v2956
      %3021 = vst [vmem:[%s170 + $0x5c] sm:$0xf] %v2957
      %3022 = vst [vmem:[%s170 + $0x60] sm:$0xf] %v2958
      %3023 = vst [vmem:[%s170 + $0x64] sm:$0xf] %v2959
      %3024 = vst [vmem:[%s170 + $0x68] sm:$0xf] %v2960
      %3025 = vst [vmem:[%s170 + $0x6c] sm:$0xf] %v2961
      %3026 = vst [vmem:[%s170 + $0x70] sm:$0xf] %v2962
      %3027 = vst [vmem:[%s170 + $0x74] sm:$0xf] %v2963
      %3028 = vst [vmem:[%s170 + $0x78] sm:$0xf] %v2964
      %3029 = vst [vmem:[%s170 + $0x7c] sm:$0xf] %v2965
      %p3030 = scmp.lt.s32.totalorder %s14, 1
      %s3031 = scalar_select %p3030, %s14, 1
      %s3032 = smul.addr %s3031, 32
      %s3033 = smul.addr %s3032, 4
      %s3034 = scalar_lea.vmem %s3, %s3033
      // Predicated region
      $region33: #{packed_basic_block_forward.3} parent=31 // pred_check
        %p3035 = pneg %p100
      $region34: #{packed_basic_block_forward.3} parent=31 // pred_check_branch
        %3037 = sbr.rel (%p3035) target = $region36
      $region35: #{packed_basic_block_forward.3} parent=31 // pred_region
        _
      $region36: #{packed_basic_block_forward.3} parent=31 // pred_fallthru
        _
    $region32: #{packed_basic_block_forward.3} parent=5 // pred_fallthru
      _
    %p3038 = scmp.le.s32.totalorder 2, %s9
    // Predicated region
    $region37: #{packed_basic_block_forward.3} parent=5 // pred_check
      %p3039 = pneg %p3038
    $region38: #{packed_basic_block_forward.3} parent=5 // pred_check_branch
      %3041 = sbr.rel (%p3039) target = $region40
    $region39: #{packed_basic_block_forward.3} parent=5 // pred_region
      %s3042 = ssub.s32 %s9, 2
      // Predicated region
      $region41: #{packed_basic_block_forward.3} parent=39 // pred_check
        %p3043 = pneg %p106
      $region42: #{packed_basic_block_forward.3} parent=39 // pred_check_branch
        %3045 = sbr.rel (%p3043) target = $region44
      $region43: #{packed_basic_block_forward.3} parent=39 // pred_region
        %p3046 = scmp.lt.s32.totalorder %s15, 1
        %s3047 = scalar_select %p3046, %s15, 1
        %s3048 = smul.addr %s3047, 32
        %s3049 = smul.addr %s3048, 4
        %s3050 = scalar_lea.vmem %s3, %s3049
      $region44: #{packed_basic_block_forward.3} parent=39 // pred_fallthru
        _
    $region40: #{packed_basic_block_forward.3} parent=5 // pred_fallthru
      _
  $region6: #{packed_basic_block_forward.3} parent=0 // loop_footer
    %s13 = sadd.s32 1, %s9
  $region7: #{packed_basic_block_forward.3} parent=0 // loop_footer_branch
    %8 = sbr.rel target = $region3
  $region8: #{packed_basic_block_forward.3} parent=0 // loop_exit
    _

// kernel: packed_basic_block_forward.5
$region0: #{packed_basic_block_forward.5}
  #allocation0 [shape = 'u32[]', space=smem, size = 0x4, offset = 0x4, fixed_abs, tag = 'smem constant byte address 0x4 - core index']
  #allocation1 [shape = 'u32[144,128]{1,0:T(1,128)}', space=vmem, size = 0x12000, scoped, tag = 'internal scratch']
  #allocation2 [shape = 'bf16[18,18,128]{2,1,0:T(8,128)(2,1)}', space=vmem, size = 0x1b000, scoped, tag = 'scratch operand']
  %s0 = inlined_call_operand.vmem [shape: bf16[2,16,16,128], index: 0, kind: input, shape index: {}]
  %s1 = inlined_call_operand.vmem [shape: bf16[3,384,128], index: 1, kind: input, shape index: {}]
  %s2 = inlined_call_operand.vmem [shape: f32[1,128], index: 2, kind: input, shape index: {}]
  %s3 = inlined_call_operand.vmem [shape: bf16[2,256,128], index: 3, kind: input, shape index: {}]
  %s4 = inlined_call_operand.vmem [shape: bf16[2,256,128], index: 4, kind: output, shape index: {}]
  %s5 = sld [smem:[#allocation0]]
  $region49: #{packed_basic_block_forward.5} parent=0
    _
  %s7 = ssub.s32 1, %s5
  %s8 = scalar_select 0, %s7, %s5
  loop: start=0, step=1, limit=4
  $region2: #{packed_basic_block_forward.5} parent=0 // loop_pre_header
    _
  $region3: #{packed_basic_block_forward.5} parent=0 // loop_header
    %s10 = sphi 0, %s14
    %p11 = scmp.ge.s32.totalorder %s10, 4
    %s20 = sphi 0, %s22
    %s23 = sphi 0, %s20
    %s24 = sphi 0, %s23
    %s40 = sphi 0, %s24
    %s44 = sphi 0, %s44
    %s46 = sphi 0, %s44
    %s47 = sphi 0, %s46
    %s61 = sphi 0, %s47
    %s65 = sphi 0, %s65
    %s67 = sphi 0, %s65
    %s68 = sphi 0, %s67
    %s82 = sphi 0, %s68
    %s88 = sphi 0, %s90
    %s91 = sphi 0, %s88
    %s92 = sphi 0, %s91
    %s108 = sphi 0, %s92
    %s114 = sphi 0, %s116
    %s117 = sphi 0, %s114
    %s118 = sphi 0, %s117
    %s134 = sphi 0, %s118
  $region4: #{packed_basic_block_forward.5} parent=0 // loop_header_branch
    %13 = sbr.rel (%p11) target = $region8
  $region5: #{packed_basic_block_forward.5} parent=0 // loop_body
    %s15 = ssub.s32 %s10, 1
    %s16 = ssub.s32 %s10, 2
    %s17 = sadd.s32 %s10, 1
    %s18 = ssub.s32 %s10, %s17
    %p19 = scmp.eq.s32.totalorder %s18, 0
    %s21 = sadd.s32 %s20, 1
    %s22 = scalar_select %p19, %s20, %s21
    %p25 = pneg %p19
    %p26 = scmp.eq.s32.totalorder %s10, 1
    %p27 = por %p25, %p26
    %p28 = scmp.ne.s32.totalorder %s20, %s23
    %p29 = scmp.eq.s32.totalorder %s10, 0
    %p30 = por %p28, %p29
    %p31 = scmp.ne.s32.totalorder %s20, %s23
    %p32 = scmp.eq.s32.totalorder %s15, 1
    %p33 = por %p31, %p32
    %p34 = scmp.ne.s32.totalorder %s23, %s24
    %p35 = scmp.eq.s32.totalorder %s15, 0
    %p36 = por %p34, %p35
    %p37 = scmp.ne.s32.totalorder %s23, %s24
    %p38 = scmp.eq.s32.totalorder %s16, 1
    %p39 = por %p37, %p38
    %p41 = scmp.ne.s32.totalorder %s24, %s40
    %p42 = scmp.eq.s32.totalorder %s16, 0
    %p43 = por %p41, %p42
    %s45 = sadd.s32 %s44, 1
    %p48 = scmp.eq.s32.totalorder %s10, 1
    %p49 = scmp.ne.s32.totalorder %s44, %s46
    %p50 = scmp.eq.s32.totalorder %s10, 0
    %p51 = por %p49, %p50
    %p52 = scmp.ne.s32.totalorder %s44, %s46
    %p53 = scmp.eq.s32.totalorder %s15, 1
    %p54 = por %p52, %p53
    %p55 = scmp.ne.s32.totalorder %s46, %s47
    %p56 = scmp.eq.s32.totalorder %s15, 0
    %p57 = por %p55, %p56
    %p58 = scmp.ne.s32.totalorder %s46, %s47
    %p59 = scmp.eq.s32.totalorder %s16, 1
    %p60 = por %p58, %p59
    %p62 = scmp.ne.s32.totalorder %s47, %s61
    %p63 = scmp.eq.s32.totalorder %s16, 0
    %p64 = por %p62, %p63
    %s66 = sadd.s32 %s65, 1
    %p69 = scmp.eq.s32.totalorder %s10, 1
    %p70 = scmp.ne.s32.totalorder %s65, %s67
    %p71 = scmp.eq.s32.totalorder %s10, 0
    %p72 = por %p70, %p71
    %p73 = scmp.ne.s32.totalorder %s65, %s67
    %p74 = scmp.eq.s32.totalorder %s15, 1
    %p75 = por %p73, %p74
    %p76 = scmp.ne.s32.totalorder %s67, %s68
    %p77 = scmp.eq.s32.totalorder %s15, 0
    %p78 = por %p76, %p77
    %p79 = scmp.ne.s32.totalorder %s67, %s68
    %p80 = scmp.eq.s32.totalorder %s16, 1
    %p81 = por %p79, %p80
    %p83 = scmp.ne.s32.totalorder %s68, %s82
    %p84 = scmp.eq.s32.totalorder %s16, 0
    %p85 = por %p83, %p84
    %s86 = ssub.s32 %s10, %s17
    %p87 = scmp.eq.s32.totalorder %s86, 0
    %s89 = sadd.s32 %s88, 1
    %s90 = scalar_select %p87, %s88, %s89
    %p93 = pneg %p87
    %p94 = scmp.eq.s32.totalorder %s10, 1
    %p95 = por %p93, %p94
    %p96 = scmp.ne.s32.totalorder %s88, %s91
    %p97 = scmp.eq.s32.totalorder %s10, 0
    %p98 = por %p96, %p97
    %p99 = scmp.ne.s32.totalorder %s88, %s91
    %p100 = scmp.eq.s32.totalorder %s15, 1
    %p101 = por %p99, %p100
    %p102 = scmp.ne.s32.totalorder %s91, %s92
    %p103 = scmp.eq.s32.totalorder %s15, 0
    %p104 = por %p102, %p103
    %p105 = scmp.ne.s32.totalorder %s91, %s92
    %p106 = scmp.eq.s32.totalorder %s16, 1
    %p107 = por %p105, %p106
    %p109 = scmp.ne.s32.totalorder %s92, %s108
    %p110 = scmp.eq.s32.totalorder %s16, 0
    %p111 = por %p109, %p110
    %s112 = ssub.s32 %s10, %s17
    %p113 = scmp.eq.s32.totalorder %s112, 0
    %s115 = sadd.s32 %s114, 1
    %s116 = scalar_select %p113, %s114, %s115
    %p119 = pneg %p113
    %p120 = scmp.eq.s32.totalorder %s10, 1
    %p121 = por %p119, %p120
    %p122 = scmp.ne.s32.totalorder %s114, %s117
    %p123 = scmp.eq.s32.totalorder %s10, 0
    %p124 = por %p122, %p123
    %p125 = scmp.ne.s32.totalorder %s114, %s117
    %p126 = scmp.eq.s32.totalorder %s15, 1
    %p127 = por %p125, %p126
    %p128 = scmp.ne.s32.totalorder %s117, %s118
    %p129 = scmp.eq.s32.totalorder %s15, 0
    %p130 = por %p128, %p129
    %p131 = scmp.ne.s32.totalorder %s117, %s118
    %p132 = scmp.eq.s32.totalorder %s16, 1
    %p133 = por %p131, %p132
    %p135 = scmp.ne.s32.totalorder %s118, %s134
    %p136 = scmp.eq.s32.totalorder %s16, 0
    %p137 = por %p135, %p136
    %p138 = scmp.le.s32.totalorder 1, %s10
    %p139 = scmp.lt.s32.totalorder %s10, 3
    %p140 = pnand %p138, %p139
    %p141 = pneg %p140
    // Predicated region
    $region9: #{packed_basic_block_forward.5} parent=5 // pred_check
      _
    $region10: #{packed_basic_block_forward.5} parent=5 // pred_check_branch
      %143 = sbr.rel (%p140) target = $region12
    $region11: #{packed_basic_block_forward.5} parent=5 // pred_region
      %s144 = ssub.s32 %s10, 1
      // Predicated region
      $region13: #{packed_basic_block_forward.5} parent=11 // pred_check
        %p145 = pneg %p57
      $region14: #{packed_basic_block_forward.5} parent=11 // pred_check_branch
        %147 = sbr.rel (%p145) target = $region16
      $region15: #{packed_basic_block_forward.5} parent=11 // pred_region
        _
      $region16: #{packed_basic_block_forward.5} parent=11 // pred_fallthru
        _
      // Predicated region
      $region17: #{packed_basic_block_forward.5} parent=11 // pred_check
        %p148 = pneg %p78
      $region18: #{packed_basic_block_forward.5} parent=11 // pred_check_branch
        %150 = sbr.rel (%p148) target = $region20
      $region19: #{packed_basic_block_forward.5} parent=11 // pred_region
        _
      $region20: #{packed_basic_block_forward.5} parent=11 // pred_fallthru
        _
    $region12: #{packed_basic_block_forward.5} parent=5 // pred_fallthru
      _
    %p151 = scmp.lt.s32.totalorder %s10, 2
    // Predicated region
    $region21: #{packed_basic_block_forward.5} parent=5 // pred_check
      %p152 = pneg %p151
    $region22: #{packed_basic_block_forward.5} parent=5 // pred_check_branch
      %154 = sbr.rel (%p152) target = $region24
    $region23: #{packed_basic_block_forward.5} parent=5 // pred_region
      // Predicated region
      $region25: #{packed_basic_block_forward.5} parent=23 // pred_check
        %p155 = pneg %p30
      $region26: #{packed_basic_block_forward.5} parent=23 // pred_check_branch
        %157 = sbr.rel (%p155) target = $region28
      $region27: #{packed_basic_block_forward.5} parent=23 // pred_region
        %p158 = scmp.lt.s32.totalorder %s10, 1
        %s159 = scalar_select %p158, %s10, 1
        %s160 = smul.addr %s159, 32
        %s161 = smul.addr %s160, 4
        %s162 = scalar_lea.vmem %s0, %s161
      $region28: #{packed_basic_block_forward.5} parent=23 // pred_fallthru
        _
      // Predicated region
      $region29: #{packed_basic_block_forward.5} parent=23 // pred_check
        %p163 = pneg %p98
      $region30: #{packed_basic_block_forward.5} parent=23 // pred_check_branch
        %165 = sbr.rel (%p163) target = $region32
      $region31: #{packed_basic_block_forward.5} parent=23 // pred_region
        %p166 = scmp.lt.s32.totalorder %s10, 1
        %s167 = scalar_select %p166, %s10, 1
        %s168 = smul.addr %s167, 32
        %s169 = smul.addr %s168, 4
        %s170 = scalar_lea.vmem %s3, %s169
      $region32: #{packed_basic_block_forward.5} parent=23 // pred_fallthru
        _
    $region24: #{packed_basic_block_forward.5} parent=5 // pred_fallthru
      _
    %p171 = scmp.le.s32.totalorder 1, %s10
    %p172 = scmp.lt.s32.totalorder %s10, 3
    %p173 = pnand %p171, %p172
    %p174 = pneg %p173
    // Predicated region
    $region33: #{packed_basic_block_forward.5} parent=5 // pred_check
      _
    $region34: #{packed_basic_block_forward.5} parent=5 // pred_check_branch
      %176 = sbr.rel (%p173) target = $region36
    $region35: #{packed_basic_block_forward.5} parent=5 // pred_region
      %s177 = ssub.s32 %s10, 1
      %p178 = scmp.lt.s32.totalorder %s15, 1
      %s179 = scalar_select %p178, %s15, 1
      %s180 = smul.addr %s179, 32
      %s181 = smul.addr %s180, 4
      %s182 = scalar_lea.vmem %s0, %s181
      %p183 = pneg %p36
      %p184 = pneg %p33
      %p185 = pneg %p57
      %p186 = pneg %p54
      %p187 = pneg %p78
      %p188 = pneg %p75
      %p189 = scmp.lt.s32.totalorder %s15, 1
      %s190 = scalar_select %p189, %s15, 1
      %s191 = smul.addr %s190, 32
      %s192 = smul.addr %s191, 4
      %s193 = scalar_lea.vmem %s3, %s192
      %p194 = pneg %p104
      %p195 = pneg %p101
      %p196 = pneg %p130
      %p197 = pneg %p127
      %p198 = scmp.lt.s32.totalorder %s15, 1
      %s199 = scalar_select %p198, %s15, 1
      %s200 = smul.addr %s199, 32
      %s201 = smul.addr %s200, 4
      %s202 = scalar_lea.vmem %s4, %s201
      %p203 = scmp.lt.s32.totalorder %s15, 1
      %s204 = scalar_select %p203, %s15, 1
      %s205 = smul.addr %s204, 32
      %s206 = smul.addr %s205, 4
      %s207 = scalar_lea.vmem %s0, %s206
      %p208 = scmp.lt.s32.totalorder %s15, 1
      %s209 = scalar_select %p208, %s15, 1
      %s210 = smul.addr %s209, 32
      %s211 = smul.addr %s210, 4
      %s212 = scalar_lea.vmem %s3, %s211
      %p213 = scmp.lt.s32.totalorder %s15, 1
      %s214 = scalar_select %p213, %s15, 1
      %s215 = smul.addr %s214, 32
      %s216 = smul.addr %s215, 4
      %s217 = scalar_lea.vmem %s4, %s216
      %219 = vst [vmem:[#allocation2] sm:$0xf] 0
      %220 = vst [vmem:[#allocation2 + $0x4] sm:$0xf] 0
      %221 = vst [vmem:[#allocation2 + $0x8] sm:$0x1] 0
      %222 = vst [vmem:[#allocation2 + $0xc] sm:$0xf] 0
      %223 = vst [vmem:[#allocation2 + $0x10] sm:$0xf] 0
      %224 = vst [vmem:[#allocation2 + $0x14] sm:$0x1] 0
      %225 = vst [vmem:[#allocation2 + $0x18] sm:$0xf] 0
      %226 = vst [vmem:[#allocation2 + $0x1c] sm:$0xf] 0
      %227 = vst [vmem:[#allocation2 + $0x20] sm:$0x1] 0
      %228 = vst [vmem:[#allocation2 + $0x24] sm:$0xf] 0
      %229 = vst [vmem:[#allocation2 + $0x28] sm:$0xf] 0
      %230 = vst [vmem:[#allocation2 + $0x2c] sm:$0x1] 0
      %231 = vst [vmem:[#allocation2 + $0x30] sm:$0xf] 0
      %232 = vst [vmem:[#allocation2 + $0x34] sm:$0xf] 0
      %233 = vst [vmem:[#allocation2 + $0x38] sm:$0x1] 0
      %234 = vst [vmem:[#allocation2 + $0x3c] sm:$0xf] 0
      %235 = vst [vmem:[#allocation2 + $0x40] sm:$0xf] 0
      %236 = vst [vmem:[#allocation2 + $0x44] sm:$0x1] 0
      %237 = vst [vmem:[#allocation2 + $0x48] sm:$0xf] 0
      %238 = vst [vmem:[#allocation2 + $0x4c] sm:$0xf] 0
      %239 = vst [vmem:[#allocation2 + $0x50] sm:$0x1] 0
      %240 = vst [vmem:[#allocation2 + $0x54] sm:$0xf] 0
      %241 = vst [vmem:[#allocation2 + $0x58] sm:$0xf] 0
      %242 = vst [vmem:[#allocation2 + $0x5c] sm:$0x1] 0
      %243 = vst [vmem:[#allocation2 + $0x60] sm:$0xf] 0
      %244 = vst [vmem:[#allocation2 + $0x64] sm:$0xf] 0
      %245 = vst [vmem:[#allocation2 + $0x68] sm:$0x1] 0
      %246 = vst [vmem:[#allocation2 + $0x6c] sm:$0xf] 0
      %247 = vst [vmem:[#allocation2 + $0x70] sm:$0xf] 0
      %248 = vst [vmem:[#allocation2 + $0x74] sm:$0x1] 0
      %249 = vst [vmem:[#allocation2 + $0x78] sm:$0xf] 0
      %250 = vst [vmem:[#allocation2 + $0x7c] sm:$0xf] 0
      %251 = vst [vmem:[#allocation2 + $0x80] sm:$0x1] 0
      %252 = vst [vmem:[#allocation2 + $0x84] sm:$0xf] 0
      %253 = vst [vmem:[#allocation2 + $0x88] sm:$0xf] 0
      %254 = vst [vmem:[#allocation2 + $0x8c] sm:$0x1] 0
      %255 = vst [vmem:[#allocation2 + $0x90] sm:$0xf] 0
      %256 = vst [vmem:[#allocation2 + $0x94] sm:$0xf] 0
      %257 = vst [vmem:[#allocation2 + $0x98] sm:$0x1] 0
      %258 = vst [vmem:[#allocation2 + $0x9c] sm:$0xf] 0
      %259 = vst [vmem:[#allocation2 + $0xa0] sm:$0xf] 0
      %260 = vst [vmem:[#allocation2 + $0xa4] sm:$0x1] 0
      %261 = vst [vmem:[#allocation2 + $0xa8] sm:$0xf] 0
      %262 = vst [vmem:[#allocation2 + $0xac] sm:$0xf] 0
      %263 = vst [vmem:[#allocation2 + $0xb0] sm:$0x1] 0
      %264 = vst [vmem:[#allocation2 + $0xb4] sm:$0xf] 0
      %265 = vst [vmem:[#allocation2 + $0xb8] sm:$0xf] 0
      %266 = vst [vmem:[#allocation2 + $0xbc] sm:$0x1] 0
      %267 = vst [vmem:[#allocation2 + $0xc0] sm:$0xf] 0
      %268 = vst [vmem:[#allocation2 + $0xc4] sm:$0xf] 0
      %269 = vst [vmem:[#allocation2 + $0xc8] sm:$0x1] 0
      %270 = vst [vmem:[#allocation2 + $0xcc] sm:$0xf] 0
      %271 = vst [vmem:[#allocation2 + $0xd0] sm:$0xf] 0
      %272 = vst [vmem:[#allocation2 + $0xd4] sm:$0x1] 0
      %v273 = vld [vmem:[%s207] sm:$0xf]
      %v274 = vld [vmem:[%s207 + $0x4] sm:$0xf]
      %v275 = vld [vmem:[%s207 + $0x8] sm:$0xf]
      %v276 = vld [vmem:[%s207 + $0xc] sm:$0xf]
      %v277 = vld [vmem:[%s207 + $0x10] sm:$0xf]
      %v278 = vld [vmem:[%s207 + $0x14] sm:$0xf]
      %v279 = vld [vmem:[%s207 + $0x18] sm:$0xf]
      %v280 = vld [vmem:[%s207 + $0x1c] sm:$0xf]
      %v281 = vld [vmem:[%s207 + $0x20] sm:$0xf]
      %v282 = vld [vmem:[%s207 + $0x24] sm:$0xf]
      %v283 = vld [vmem:[%s207 + $0x28] sm:$0xf]
      %v284 = vld [vmem:[%s207 + $0x2c] sm:$0xf]
      %v285 = vld [vmem:[%s207 + $0x30] sm:$0xf]
      %v286 = vld [vmem:[%s207 + $0x34] sm:$0xf]
      %v287 = vld [vmem:[%s207 + $0x38] sm:$0xf]
      %v288 = vld [vmem:[%s207 + $0x3c] sm:$0xf]
      %v289 = vld [vmem:[%s207 + $0x40] sm:$0xf]
      %v290 = vld [vmem:[%s207 + $0x44] sm:$0xf]
      %v291 = vld [vmem:[%s207 + $0x48] sm:$0xf]
      %v292 = vld [vmem:[%s207 + $0x4c] sm:$0xf]
      %v293 = vld [vmem:[%s207 + $0x50] sm:$0xf]
      %v294 = vld [vmem:[%s207 + $0x54] sm:$0xf]
      %v295 = vld [vmem:[%s207 + $0x58] sm:$0xf]
      %v296 = vld [vmem:[%s207 + $0x5c] sm:$0xf]
      %v297 = vld [vmem:[%s207 + $0x60] sm:$0xf]
      %v298 = vld [vmem:[%s207 + $0x64] sm:$0xf]
      %v299 = vld [vmem:[%s207 + $0x68] sm:$0xf]
      %v300 = vld [vmem:[%s207 + $0x6c] sm:$0xf]
      %v301 = vld [vmem:[%s207 + $0x70] sm:$0xf]
      %v302 = vld [vmem:[%s207 + $0x74] sm:$0xf]
      %v303 = vld [vmem:[%s207 + $0x78] sm:$0xf]
      %v304 = vld [vmem:[%s207 + $0x7c] sm:$0xf]
      %vm305 = vsmask.f32 256
      %vm306 = vsmask.f32 4368
      %vm307 = vmor %vm305, %vm306
      %v309 = vshrl.u32 %v273, 16
      %v311 = vrot.slane %v309, 7
      %v312 = vshll.u32 %v273, 16
      %v314 = vor.u32 %v311, %v312
      %v315 = vrot.slane %v311, 4
      %v317 = vshrl.u32 %v274, 16
      %v319 = vrot.slane %v317, 7
      %v320 = vshll.u32 %v274, 16
      %v322 = vor.u32 %v319, %v320
      %v323 = vsel %vm307, %v315, %v322
      %v324 = vrot.slane %v319, 4
      %v326 = vshrl.u32 %v275, 16
      %v328 = vrot.slane %v326, 7
      %v329 = vshll.u32 %v275, 16
      %v331 = vor.u32 %v328, %v329
      %v332 = vrot.slane %v328, 4
      %v334 = vshrl.u32 %v276, 16
      %v336 = vrot.slane %v334, 7
      %v337 = vshll.u32 %v276, 16
      %v339 = vor.u32 %v336, %v337
      %v340 = vsel %vm307, %v332, %v339
      %v341 = vrot.slane %v336, 4
      %v343 = vshrl.u32 %v277, 16
      %v345 = vrot.slane %v343, 7
      %v346 = vshll.u32 %v277, 16
      %v348 = vor.u32 %v345, %v346
      %v349 = vrot.slane %v345, 4
      %v351 = vshrl.u32 %v278, 16
      %v353 = vrot.slane %v351, 7
      %v354 = vshll.u32 %v278, 16
      %v356 = vor.u32 %v353, %v354
      %v357 = vsel %vm307, %v349, %v356
      %v358 = vrot.slane %v353, 4
      %v360 = vshrl.u32 %v279, 16
      %v362 = vrot.slane %v360, 7
      %v363 = vshll.u32 %v279, 16
      %v365 = vor.u32 %v362, %v363
      %v366 = vrot.slane %v362, 4
      %v368 = vshrl.u32 %v280, 16
      %v370 = vrot.slane %v368, 7
      %v371 = vshll.u32 %v280, 16
      %v373 = vor.u32 %v370, %v371
      %v374 = vsel %vm307, %v366, %v373
      %v375 = vrot.slane %v370, 4
      %v377 = vshrl.u32 %v281, 16
      %v379 = vrot.slane %v377, 7
      %v380 = vshll.u32 %v281, 16
      %v382 = vor.u32 %v379, %v380
      %v383 = vrot.slane %v379, 4
      %v385 = vshrl.u32 %v282, 16
      %v387 = vrot.slane %v385, 7
      %v388 = vshll.u32 %v282, 16
      %v390 = vor.u32 %v387, %v388
      %v391 = vsel %vm307, %v383, %v390
      %v392 = vrot.slane %v387, 4
      %v394 = vshrl.u32 %v283, 16
      %v396 = vrot.slane %v394, 7
      %v397 = vshll.u32 %v283, 16
      %v399 = vor.u32 %v396, %v397
      %v400 = vrot.slane %v396, 4
      %v402 = vshrl.u32 %v284, 16
      %v404 = vrot.slane %v402, 7
      %v405 = vshll.u32 %v284, 16
      %v407 = vor.u32 %v404, %v405
      %v408 = vsel %vm307, %v400, %v407
      %v409 = vrot.slane %v404, 4
      %v411 = vshrl.u32 %v285, 16
      %v413 = vrot.slane %v411, 7
      %v414 = vshll.u32 %v285, 16
      %v416 = vor.u32 %v413, %v414
      %v417 = vrot.slane %v413, 4
      %v419 = vshrl.u32 %v286, 16
      %v421 = vrot.slane %v419, 7
      %v422 = vshll.u32 %v286, 16
      %v424 = vor.u32 %v421, %v422
      %v425 = vsel %vm307, %v417, %v424
      %v426 = vrot.slane %v421, 4
      %v428 = vshrl.u32 %v287, 16
      %v430 = vrot.slane %v428, 7
      %v431 = vshll.u32 %v287, 16
      %v433 = vor.u32 %v430, %v431
      %v434 = vrot.slane %v430, 4
      %v436 = vshrl.u32 %v288, 16
      %v438 = vrot.slane %v436, 7
      %v439 = vshll.u32 %v288, 16
      %v441 = vor.u32 %v438, %v439
      %v442 = vsel %vm307, %v434, %v441
      %v443 = vrot.slane %v438, 4
      %v445 = vshrl.u32 %v289, 16
      %v447 = vrot.slane %v445, 7
      %v448 = vshll.u32 %v289, 16
      %v450 = vor.u32 %v447, %v448
      %v451 = vrot.slane %v447, 4
      %v453 = vshrl.u32 %v290, 16
      %v455 = vrot.slane %v453, 7
      %v456 = vshll.u32 %v290, 16
      %v458 = vor.u32 %v455, %v456
      %v459 = vsel %vm307, %v451, %v458
      %v460 = vrot.slane %v455, 4
      %v462 = vshrl.u32 %v291, 16
      %v464 = vrot.slane %v462, 7
      %v465 = vshll.u32 %v291, 16
      %v467 = vor.u32 %v464, %v465
      %v468 = vrot.slane %v464, 4
      %v470 = vshrl.u32 %v292, 16
      %v472 = vrot.slane %v470, 7
      %v473 = vshll.u32 %v292, 16
      %v475 = vor.u32 %v472, %v473
      %v476 = vsel %vm307, %v468, %v475
      %v477 = vrot.slane %v472, 4
      %v479 = vshrl.u32 %v293, 16
      %v481 = vrot.slane %v479, 7
      %v482 = vshll.u32 %v293, 16
      %v484 = vor.u32 %v481, %v482
      %v485 = vrot.slane %v481, 4
      %v487 = vshrl.u32 %v294, 16
      %v489 = vrot.slane %v487, 7
      %v490 = vshll.u32 %v294, 16
      %v492 = vor.u32 %v489, %v490
      %v493 = vsel %vm307, %v485, %v492
      %v494 = vrot.slane %v489, 4
      %v496 = vshrl.u32 %v295, 16
      %v498 = vrot.slane %v496, 7
      %v499 = vshll.u32 %v295, 16
      %v501 = vor.u32 %v498, %v499
      %v502 = vrot.slane %v498, 4
      %v504 = vshrl.u32 %v296, 16
      %v506 = vrot.slane %v504, 7
      %v507 = vshll.u32 %v296, 16
      %v509 = vor.u32 %v506, %v507
      %v510 = vsel %vm307, %v502, %v509
      %v511 = vrot.slane %v506, 4
      %v513 = vshrl.u32 %v297, 16
      %v515 = vrot.slane %v513, 7
      %v516 = vshll.u32 %v297, 16
      %v518 = vor.u32 %v515, %v516
      %v519 = vrot.slane %v515, 4
      %v521 = vshrl.u32 %v298, 16
      %v523 = vrot.slane %v521, 7
      %v524 = vshll.u32 %v298, 16
      %v526 = vor.u32 %v523, %v524
      %v527 = vsel %vm307, %v519, %v526
      %v528 = vrot.slane %v523, 4
      %v530 = vshrl.u32 %v299, 16
      %v532 = vrot.slane %v530, 7
      %v533 = vshll.u32 %v299, 16
      %v535 = vor.u32 %v532, %v533
      %v536 = vrot.slane %v532, 4
      %v538 = vshrl.u32 %v300, 16
      %v540 = vrot.slane %v538, 7
      %v541 = vshll.u32 %v300, 16
      %v543 = vor.u32 %v540, %v541
      %v544 = vsel %vm307, %v536, %v543
      %v545 = vrot.slane %v540, 4
      %v547 = vshrl.u32 %v301, 16
      %v549 = vrot.slane %v547, 7
      %v550 = vshll.u32 %v301, 16
      %v552 = vor.u32 %v549, %v550
      %v553 = vrot.slane %v549, 4
      %v555 = vshrl.u32 %v302, 16
      %v557 = vrot.slane %v555, 7
      %v558 = vshll.u32 %v302, 16
      %v560 = vor.u32 %v557, %v558
      %v561 = vsel %vm307, %v553, %v560
      %v562 = vrot.slane %v557, 4
      %v564 = vshrl.u32 %v303, 16
      %v566 = vrot.slane %v564, 7
      %v567 = vshll.u32 %v303, 16
      %v569 = vor.u32 %v566, %v567
      %v570 = vrot.slane %v566, 4
      %v572 = vshrl.u32 %v304, 16
      %v574 = vrot.slane %v572, 7
      %v575 = vshll.u32 %v304, 16
      %v577 = vor.u32 %v574, %v575
      %v578 = vsel %vm307, %v570, %v577
      %v579 = vrot.slane %v574, 4
      %s628 = scalar_lea.vmem [#allocation2], 12
      %vm629 = vcmask 1043456
      %vm630 = vsmask.f32 7938
      %vm631 = vmand %vm629, %vm630
      %v632 = vld [vmem:[%s628] sm:$0xf]
      %v633 = vsel %vm631, %v314, %v632
      %634 = vst [vmem:[%s628] sm:$0xf] %v633
      %635 = vst [vmem:[%s628 + $0x4] sm:$0xf] %v323
      %vm636 = vcmask 1040384
      %vm637 = vmand %vm636, %vm305
      %v638 = vld [vmem:[%s628 + $0x8] sm:$0x1]
      %v639 = vsel %vm637, %v324, %v638
      %640 = vst [vmem:[%s628 + $0x8] sm:$0x1] %v639
      %v641 = vld [vmem:[%s628 + $0xc] sm:$0xf]
      %v642 = vsel %vm631, %v331, %v641
      %643 = vst [vmem:[%s628 + $0xc] sm:$0xf] %v642
      %644 = vst [vmem:[%s628 + $0x10] sm:$0xf] %v340
      %v645 = vld [vmem:[%s628 + $0x14] sm:$0x1]
      %v646 = vsel %vm637, %v341, %v645
      %647 = vst [vmem:[%s628 + $0x14] sm:$0x1] %v646
      %v648 = vld [vmem:[%s628 + $0x18] sm:$0xf]
      %v649 = vsel %vm631, %v348, %v648
      %650 = vst [vmem:[%s628 + $0x18] sm:$0xf] %v649
      %651 = vst [vmem:[%s628 + $0x1c] sm:$0xf] %v357
      %v652 = vld [vmem:[%s628 + $0x20] sm:$0x1]
      %v653 = vsel %vm637, %v358, %v652
      %654 = vst [vmem:[%s628 + $0x20] sm:$0x1] %v653
      %v655 = vld [vmem:[%s628 + $0x24] sm:$0xf]
      %v656 = vsel %vm631, %v365, %v655
      %657 = vst [vmem:[%s628 + $0x24] sm:$0xf] %v656
      %658 = vst [vmem:[%s628 + $0x28] sm:$0xf] %v374
      %v659 = vld [vmem:[%s628 + $0x2c] sm:$0x1]
      %v660 = vsel %vm637, %v375, %v659
      %661 = vst [vmem:[%s628 + $0x2c] sm:$0x1] %v660
      %v662 = vld [vmem:[%s628 + $0x30] sm:$0xf]
      %v663 = vsel %vm631, %v382, %v662
      %664 = vst [vmem:[%s628 + $0x30] sm:$0xf] %v663
      %665 = vst [vmem:[%s628 + $0x34] sm:$0xf] %v391
      %v666 = vld [vmem:[%s628 + $0x38] sm:$0x1]
      %v667 = vsel %vm637, %v392, %v666
      %668 = vst [vmem:[%s628 + $0x38] sm:$0x1] %v667
      %v669 = vld [vmem:[%s628 + $0x3c] sm:$0xf]
      %v670 = vsel %vm631, %v399, %v669
      %671 = vst [vmem:[%s628 + $0x3c] sm:$0xf] %v670
      %672 = vst [vmem:[%s628 + $0x40] sm:$0xf] %v408
      %v673 = vld [vmem:[%s628 + $0x44] sm:$0x1]
      %v674 = vsel %vm637, %v409, %v673
      %675 = vst [vmem:[%s628 + $0x44] sm:$0x1] %v674
      %v676 = vld [vmem:[%s628 + $0x48] sm:$0xf]
      %v677 = vsel %vm631, %v416, %v676
      %678 = vst [vmem:[%s628 + $0x48] sm:$0xf] %v677
      %679 = vst [vmem:[%s628 + $0x4c] sm:$0xf] %v425
      %v680 = vld [vmem:[%s628 + $0x50] sm:$0x1]
      %v681 = vsel %vm637, %v426, %v680
      %682 = vst [vmem:[%s628 + $0x50] sm:$0x1] %v681
      %v683 = vld [vmem:[%s628 + $0x54] sm:$0xf]
      %v684 = vsel %vm631, %v433, %v683
      %685 = vst [vmem:[%s628 + $0x54] sm:$0xf] %v684
      %686 = vst [vmem:[%s628 + $0x58] sm:$0xf] %v442
      %v687 = vld [vmem:[%s628 + $0x5c] sm:$0x1]
      %v688 = vsel %vm637, %v443, %v687
      %689 = vst [vmem:[%s628 + $0x5c] sm:$0x1] %v688
      %v690 = vld [vmem:[%s628 + $0x60] sm:$0xf]
      %v691 = vsel %vm631, %v450, %v690
      %692 = vst [vmem:[%s628 + $0x60] sm:$0xf] %v691
      %693 = vst [vmem:[%s628 + $0x64] sm:$0xf] %v459
      %v694 = vld [vmem:[%s628 + $0x68] sm:$0x1]
      %v695 = vsel %vm637, %v460, %v694
      %696 = vst [vmem:[%s628 + $0x68] sm:$0x1] %v695
      %v697 = vld [vmem:[%s628 + $0x6c] sm:$0xf]
      %v698 = vsel %vm631, %v467, %v697
      %699 = vst [vmem:[%s628 + $0x6c] sm:$0xf] %v698
      %700 = vst [vmem:[%s628 + $0x70] sm:$0xf] %v476
      %v701 = vld [vmem:[%s628 + $0x74] sm:$0x1]
      %v702 = vsel %vm637, %v477, %v701
      %703 = vst [vmem:[%s628 + $0x74] sm:$0x1] %v702
      %v704 = vld [vmem:[%s628 + $0x78] sm:$0xf]
      %v705 = vsel %vm631, %v484, %v704
      %706 = vst [vmem:[%s628 + $0x78] sm:$0xf] %v705
      %707 = vst [vmem:[%s628 + $0x7c] sm:$0xf] %v493
      %v708 = vld [vmem:[%s628 + $0x80] sm:$0x1]
      %v709 = vsel %vm637, %v494, %v708
      %710 = vst [vmem:[%s628 + $0x80] sm:$0x1] %v709
      %v711 = vld [vmem:[%s628 + $0x84] sm:$0xf]
      %v712 = vsel %vm631, %v501, %v711
      %713 = vst [vmem:[%s628 + $0x84] sm:$0xf] %v712
      %714 = vst [vmem:[%s628 + $0x88] sm:$0xf] %v510
      %v715 = vld [vmem:[%s628 + $0x8c] sm:$0x1]
      %v716 = vsel %vm637, %v511, %v715
      %717 = vst [vmem:[%s628 + $0x8c] sm:$0x1] %v716
      %v718 = vld [vmem:[%s628 + $0x90] sm:$0xf]
      %v719 = vsel %vm631, %v518, %v718
      %720 = vst [vmem:[%s628 + $0x90] sm:$0xf] %v719
      %721 = vst [vmem:[%s628 + $0x94] sm:$0xf] %v527
      %v722 = vld [vmem:[%s628 + $0x98] sm:$0x1]
      %v723 = vsel %vm637, %v528, %v722
      %724 = vst [vmem:[%s628 + $0x98] sm:$0x1] %v723
      %v725 = vld [vmem:[%s628 + $0x9c] sm:$0xf]
      %v726 = vsel %vm631, %v535, %v725
      %727 = vst [vmem:[%s628 + $0x9c] sm:$0xf] %v726
      %728 = vst [vmem:[%s628 + $0xa0] sm:$0xf] %v544
      %v729 = vld [vmem:[%s628 + $0xa4] sm:$0x1]
      %v730 = vsel %vm637, %v545, %v729
      %731 = vst [vmem:[%s628 + $0xa4] sm:$0x1] %v730
      %v732 = vld [vmem:[%s628 + $0xa8] sm:$0xf]
      %v733 = vsel %vm631, %v552, %v732
      %734 = vst [vmem:[%s628 + $0xa8] sm:$0xf] %v733
      %735 = vst [vmem:[%s628 + $0xac] sm:$0xf] %v561
      %v736 = vld [vmem:[%s628 + $0xb0] sm:$0x1]
      %v737 = vsel %vm637, %v562, %v736
      %738 = vst [vmem:[%s628 + $0xb0] sm:$0x1] %v737
      %v739 = vld [vmem:[%s628 + $0xb4] sm:$0xf]
      %v740 = vsel %vm631, %v569, %v739
      %741 = vst [vmem:[%s628 + $0xb4] sm:$0xf] %v740
      %742 = vst [vmem:[%s628 + $0xb8] sm:$0xf] %v578
      %v743 = vld [vmem:[%s628 + $0xbc] sm:$0x1]
      %v744 = vsel %vm637, %v579, %v743
      %745 = vst [vmem:[%s628 + $0xbc] sm:$0x1] %v744
      %v746 = vld [vmem:[#allocation2] sm:$0xf]
      %v747 = vld [vmem:[#allocation2 + $0x4] sm:$0xf]
      %v748 = vld [vmem:[#allocation2 + $0x8] sm:$0x1]
      %v749 = vld [vmem:[#allocation2 + $0xc] sm:$0xf]
      %v750 = vld [vmem:[#allocation2 + $0x10] sm:$0xf]
      %v751 = vld [vmem:[#allocation2 + $0x14] sm:$0x1]
      %v752 = vld [vmem:[#allocation2 + $0x18] sm:$0xf]
      %v753 = vld [vmem:[#allocation2 + $0x1c] sm:$0xf]
      %v754 = vld [vmem:[#allocation2 + $0x20] sm:$0x1]
      %v755 = vld [vmem:[#allocation2 + $0x24] sm:$0xf]
      %v756 = vld [vmem:[#allocation2 + $0x28] sm:$0xf]
      %v757 = vld [vmem:[#allocation2 + $0x2c] sm:$0x1]
      %v758 = vld [vmem:[#allocation2 + $0x30] sm:$0xf]
      %v759 = vld [vmem:[#allocation2 + $0x34] sm:$0xf]
      %v760 = vld [vmem:[#allocation2 + $0x38] sm:$0x1]
      %v761 = vld [vmem:[#allocation2 + $0x3c] sm:$0xf]
      %v762 = vld [vmem:[#allocation2 + $0x40] sm:$0xf]
      %v763 = vld [vmem:[#allocation2 + $0x44] sm:$0x1]
      %v764 = vld [vmem:[#allocation2 + $0x48] sm:$0xf]
      %v765 = vld [vmem:[#allocation2 + $0x4c] sm:$0xf]
      %v766 = vld [vmem:[#allocation2 + $0x50] sm:$0x1]
      %v767 = vld [vmem:[#allocation2 + $0x54] sm:$0xf]
      %v768 = vld [vmem:[#allocation2 + $0x58] sm:$0xf]
      %v769 = vld [vmem:[#allocation2 + $0x5c] sm:$0x1]
      %v770 = vld [vmem:[#allocation2 + $0x60] sm:$0xf]
      %v771 = vld [vmem:[#allocation2 + $0x64] sm:$0xf]
      %v772 = vld [vmem:[#allocation2 + $0x68] sm:$0x1]
      %v773 = vld [vmem:[#allocation2 + $0x6c] sm:$0xf]
      %v774 = vld [vmem:[#allocation2 + $0x70] sm:$0xf]
      %v775 = vld [vmem:[#allocation2 + $0x74] sm:$0x1]
      %v776 = vld [vmem:[#allocation2 + $0x78] sm:$0xf]
      %v777 = vld [vmem:[#allocation2 + $0x7c] sm:$0xf]
      %v778 = vld [vmem:[#allocation2 + $0x80] sm:$0x1]
      %v779 = vld [vmem:[#allocation2 + $0x84] sm:$0xf]
      %v780 = vld [vmem:[#allocation2 + $0x88] sm:$0xf]
      %v781 = vld [vmem:[#allocation2 + $0x8c] sm:$0x1]
      %v782 = vld [vmem:[#allocation2 + $0x90] sm:$0xf]
      %v783 = vld [vmem:[#allocation2 + $0x94] sm:$0xf]
      %v784 = vld [vmem:[#allocation2 + $0x98] sm:$0x1]
      %v785 = vld [vmem:[#allocation2 + $0x9c] sm:$0xf]
      %v786 = vld [vmem:[#allocation2 + $0xa0] sm:$0xf]
      %v787 = vld [vmem:[#allocation2 + $0xa4] sm:$0x1]
      %v788 = vld [vmem:[#allocation2 + $0xa8] sm:$0xf]
      %v789 = vld [vmem:[#allocation2 + $0xac] sm:$0xf]
      %v790 = vld [vmem:[#allocation2 + $0xb0] sm:$0x1]
      %v791 = vld [vmem:[#allocation2 + $0xb4] sm:$0xf]
      %v792 = vld [vmem:[#allocation2 + $0xb8] sm:$0xf]
      %v793 = vld [vmem:[#allocation2 + $0xbc] sm:$0x1]
      %v794 = vld [vmem:[#allocation2 + $0xc0] sm:$0xf]
      %v795 = vld [vmem:[#allocation2 + $0xc4] sm:$0xf]
      %v796 = vld [vmem:[#allocation2 + $0xc8] sm:$0x1]
      %v797 = vld [vmem:[#allocation2 + $0xcc] sm:$0xf]
      %v798 = vld [vmem:[#allocation2 + $0xd0] sm:$0xf]
      %v799 = vld [vmem:[#allocation2 + $0xd4] sm:$0x1]
      %v836 = vunpack.c.l.b16 %v746
      %v837 = vunpack.c.l.b16 %v747
      %v838 = vunpack.c.l.b16 %v749
      %v839 = vunpack.c.l.b16 %v750
      %v840 = vunpack.c.l.b16 %v752
      %v841 = vunpack.c.l.b16 %v753
      %v842 = vunpack.c.l.b16 %v755
      %v843 = vunpack.c.l.b16 %v756
      %v844 = vunpack.c.l.b16 %v758
      %v845 = vunpack.c.l.b16 %v759
      %v846 = vunpack.c.l.b16 %v761
      %v847 = vunpack.c.l.b16 %v762
      %v848 = vunpack.c.l.b16 %v764
      %v849 = vunpack.c.l.b16 %v765
      %v850 = vunpack.c.l.b16 %v767
      %v851 = vunpack.c.l.b16 %v768
      %v852 = vunpack.c.l.b16 %v770
      %v853 = vunpack.c.l.b16 %v771
      %v854 = vunpack.c.l.b16 %v773
      %v855 = vunpack.c.l.b16 %v774
      %v856 = vunpack.c.l.b16 %v776
      %v857 = vunpack.c.l.b16 %v777
      %v858 = vunpack.c.l.b16 %v779
      %v859 = vunpack.c.l.b16 %v780
      %v860 = vunpack.c.l.b16 %v782
      %v861 = vunpack.c.l.b16 %v783
      %v862 = vunpack.c.l.b16 %v785
      %v863 = vunpack.c.l.b16 %v786
      %v864 = vunpack.c.l.b16 %v788
      %v865 = vunpack.c.l.b16 %v789
      %v866 = vunpack.c.l.b16 %v791
      %v867 = vunpack.c.l.b16 %v792
      %v868 = vunpack.c.l.b16 %v794
      %v869 = vunpack.c.l.b16 %v795
      %v870 = vunpack.c.l.b16 %v797
      %v871 = vunpack.c.l.b16 %v798
      %v872 = vpack.c.b16 %v837, %v836
      %v873 = vpack.c.b16 %v839, %v838
      %v874 = vpack.c.b16 %v841, %v840
      %v875 = vpack.c.b16 %v843, %v842
      %v876 = vpack.c.b16 %v845, %v844
      %v877 = vpack.c.b16 %v847, %v846
      %v878 = vpack.c.b16 %v849, %v848
      %v879 = vpack.c.b16 %v851, %v850
      %v880 = vpack.c.b16 %v853, %v852
      %v881 = vpack.c.b16 %v855, %v854
      %v882 = vpack.c.b16 %v857, %v856
      %v883 = vpack.c.b16 %v859, %v858
      %v884 = vpack.c.b16 %v861, %v860
      %v885 = vpack.c.b16 %v863, %v862
      %v886 = vpack.c.b16 %v865, %v864
      %v887 = vpack.c.b16 %v867, %v866
      %v888 = vpack.c.b16 %v869, %v868
      %v889 = vpack.c.b16 %v871, %v870
      %v926 = vunpack.c.l.b16 %v748
      %v927 = vunpack.c.l.b16 %v751
      %v928 = vunpack.c.l.b16 %v754
      %v929 = vunpack.c.l.b16 %v757
      %v930 = vunpack.c.l.b16 %v760
      %v931 = vunpack.c.l.b16 %v763
      %v932 = vunpack.c.l.b16 %v766
      %v933 = vunpack.c.l.b16 %v769
      %v934 = vunpack.c.l.b16 %v772
      %v935 = vunpack.c.l.b16 %v775
      %v936 = vunpack.c.l.b16 %v778
      %v937 = vunpack.c.l.b16 %v781
      %v938 = vunpack.c.l.b16 %v784
      %v939 = vunpack.c.l.b16 %v787
      %v940 = vunpack.c.l.b16 %v790
      %v941 = vunpack.c.l.b16 %v793
      %v942 = vunpack.c.l.b16 %v796
      %v943 = vunpack.c.l.b16 %v799
      %v944 = vpack.c.b16 %v926, %v926
      %v945 = vpack.c.b16 %v927, %v927
      %v946 = vpack.c.b16 %v928, %v928
      %v947 = vpack.c.b16 %v929, %v929
      %v948 = vpack.c.b16 %v930, %v930
      %v949 = vpack.c.b16 %v931, %v931
      %v950 = vpack.c.b16 %v932, %v932
      %v951 = vpack.c.b16 %v933, %v933
      %v952 = vpack.c.b16 %v934, %v934
      %v953 = vpack.c.b16 %v935, %v935
      %v954 = vpack.c.b16 %v936, %v936
      %v955 = vpack.c.b16 %v937, %v937
      %v956 = vpack.c.b16 %v938, %v938
      %v957 = vpack.c.b16 %v939, %v939
      %v958 = vpack.c.b16 %v940, %v940
      %v959 = vpack.c.b16 %v941, %v941
      %v960 = vpack.c.b16 %v942, %v942
      %v961 = vpack.c.b16 %v943, %v943
      %vm962 = vsmask.f32 7424
      %v964 = vshrl.u32 %v872, 16
      %v966 = vshll.u32 %v872, 16
      %v968 = vrot.slane %v966, 1
      %v969 = vor.u32 %v964, %v968
      %v971 = vshll.u32 %v944, 16
      %v973 = vrot.slane %v971, 1
      %v974 = vsel %vm962, %v969, %v973
      %v976 = vshrl.u32 %v873, 16
      %v978 = vshll.u32 %v873, 16
      %v980 = vrot.slane %v978, 1
      %v981 = vor.u32 %v976, %v980
      %v983 = vshll.u32 %v945, 16
      %v985 = vrot.slane %v983, 1
      %v986 = vsel %vm962, %v981, %v985
      %v988 = vshrl.u32 %v874, 16
      %v990 = vshll.u32 %v874, 16
      %v992 = vrot.slane %v990, 1
      %v993 = vor.u32 %v988, %v992
      %v995 = vshll.u32 %v946, 16
      %v997 = vrot.slane %v995, 1
      %v998 = vsel %vm962, %v993, %v997
      %v1000 = vshrl.u32 %v875, 16
      %v1002 = vshll.u32 %v875, 16
      %v1004 = vrot.slane %v1002, 1
      %v1005 = vor.u32 %v1000, %v1004
      %v1007 = vshll.u32 %v947, 16
      %v1009 = vrot.slane %v1007, 1
      %v1010 = vsel %vm962, %v1005, %v1009
      %v1012 = vshrl.u32 %v876, 16
      %v1014 = vshll.u32 %v876, 16
      %v1016 = vrot.slane %v1014, 1
      %v1017 = vor.u32 %v1012, %v1016
      %v1019 = vshll.u32 %v948, 16
      %v1021 = vrot.slane %v1019, 1
      %v1022 = vsel %vm962, %v1017, %v1021
      %v1024 = vshrl.u32 %v877, 16
      %v1026 = vshll.u32 %v877, 16
      %v1028 = vrot.slane %v1026, 1
      %v1029 = vor.u32 %v1024, %v1028
      %v1031 = vshll.u32 %v949, 16
      %v1033 = vrot.slane %v1031, 1
      %v1034 = vsel %vm962, %v1029, %v1033
      %v1036 = vshrl.u32 %v878, 16
      %v1038 = vshll.u32 %v878, 16
      %v1040 = vrot.slane %v1038, 1
      %v1041 = vor.u32 %v1036, %v1040
      %v1043 = vshll.u32 %v950, 16
      %v1045 = vrot.slane %v1043, 1
      %v1046 = vsel %vm962, %v1041, %v1045
      %v1048 = vshrl.u32 %v879, 16
      %v1050 = vshll.u32 %v879, 16
      %v1052 = vrot.slane %v1050, 1
      %v1053 = vor.u32 %v1048, %v1052
      %v1055 = vshll.u32 %v951, 16
      %v1057 = vrot.slane %v1055, 1
      %v1058 = vsel %vm962, %v1053, %v1057
      %v1060 = vshrl.u32 %v880, 16
      %v1062 = vshll.u32 %v880, 16
      %v1064 = vrot.slane %v1062, 1
      %v1065 = vor.u32 %v1060, %v1064
      %v1067 = vshll.u32 %v952, 16
      %v1069 = vrot.slane %v1067, 1
      %v1070 = vsel %vm962, %v1065, %v1069
      %v1072 = vshrl.u32 %v881, 16
      %v1074 = vshll.u32 %v881, 16
      %v1076 = vrot.slane %v1074, 1
      %v1077 = vor.u32 %v1072, %v1076
      %v1079 = vshll.u32 %v953, 16
      %v1081 = vrot.slane %v1079, 1
      %v1082 = vsel %vm962, %v1077, %v1081
      %v1084 = vshrl.u32 %v882, 16
      %v1086 = vshll.u32 %v882, 16
      %v1088 = vrot.slane %v1086, 1
      %v1089 = vor.u32 %v1084, %v1088
      %v1091 = vshll.u32 %v954, 16
      %v1093 = vrot.slane %v1091, 1
      %v1094 = vsel %vm962, %v1089, %v1093
      %v1096 = vshrl.u32 %v883, 16
      %v1098 = vshll.u32 %v883, 16
      %v1100 = vrot.slane %v1098, 1
      %v1101 = vor.u32 %v1096, %v1100
      %v1103 = vshll.u32 %v955, 16
      %v1105 = vrot.slane %v1103, 1
      %v1106 = vsel %vm962, %v1101, %v1105
      %v1108 = vshrl.u32 %v884, 16
      %v1110 = vshll.u32 %v884, 16
      %v1112 = vrot.slane %v1110, 1
      %v1113 = vor.u32 %v1108, %v1112
      %v1115 = vshll.u32 %v956, 16
      %v1117 = vrot.slane %v1115, 1
      %v1118 = vsel %vm962, %v1113, %v1117
      %v1120 = vshrl.u32 %v885, 16
      %v1122 = vshll.u32 %v885, 16
      %v1124 = vrot.slane %v1122, 1
      %v1125 = vor.u32 %v1120, %v1124
      %v1127 = vshll.u32 %v957, 16
      %v1129 = vrot.slane %v1127, 1
      %v1130 = vsel %vm962, %v1125, %v1129
      %v1132 = vshrl.u32 %v886, 16
      %v1134 = vshll.u32 %v886, 16
      %v1136 = vrot.slane %v1134, 1
      %v1137 = vor.u32 %v1132, %v1136
      %v1139 = vshll.u32 %v958, 16
      %v1141 = vrot.slane %v1139, 1
      %v1142 = vsel %vm962, %v1137, %v1141
      %v1144 = vshrl.u32 %v887, 16
      %v1146 = vshll.u32 %v887, 16
      %v1148 = vrot.slane %v1146, 1
      %v1149 = vor.u32 %v1144, %v1148
      %v1151 = vshll.u32 %v959, 16
      %v1153 = vrot.slane %v1151, 1
      %v1154 = vsel %vm962, %v1149, %v1153
      %v1156 = vshrl.u32 %v888, 16
      %v1158 = vshll.u32 %v888, 16
      %v1160 = vrot.slane %v1158, 1
      %v1161 = vor.u32 %v1156, %v1160
      %v1163 = vshll.u32 %v960, 16
      %v1165 = vrot.slane %v1163, 1
      %v1166 = vsel %vm962, %v1161, %v1165
      %v1168 = vshrl.u32 %v889, 16
      %v1170 = vshll.u32 %v889, 16
      %v1172 = vrot.slane %v1170, 1
      %v1173 = vor.u32 %v1168, %v1172
      %v1175 = vshll.u32 %v961, 16
      %v1177 = vrot.slane %v1175, 1
      %v1178 = vsel %vm962, %v1173, %v1177
      %vm1197 = vcmask 1046528
      %v1198 = vrot.slane %v872, 1
      %v1199 = vrot.slane %v944, 1
      %v1200 = vsel %vm1197, %v1198, %v1199
      %v1201 = vrot.slane %v873, 1
      %v1202 = vrot.slane %v945, 1
      %v1203 = vsel %vm1197, %v1201, %v1202
      %v1204 = vrot.slane %v874, 1
      %v1205 = vrot.slane %v946, 1
      %v1206 = vsel %vm1197, %v1204, %v1205
      %v1207 = vrot.slane %v875, 1
      %v1208 = vrot.slane %v947, 1
      %v1209 = vsel %vm1197, %v1207, %v1208
      %v1210 = vrot.slane %v876, 1
      %v1211 = vrot.slane %v948, 1
      %v1212 = vsel %vm1197, %v1210, %v1211
      %v1213 = vrot.slane %v877, 1
      %v1214 = vrot.slane %v949, 1
      %v1215 = vsel %vm1197, %v1213, %v1214
      %v1216 = vrot.slane %v878, 1
      %v1217 = vrot.slane %v950, 1
      %v1218 = vsel %vm1197, %v1216, %v1217
      %v1219 = vrot.slane %v879, 1
      %v1220 = vrot.slane %v951, 1
      %v1221 = vsel %vm1197, %v1219, %v1220
      %v1222 = vrot.slane %v880, 1
      %v1223 = vrot.slane %v952, 1
      %v1224 = vsel %vm1197, %v1222, %v1223
      %v1225 = vrot.slane %v881, 1
      %v1226 = vrot.slane %v953, 1
      %v1227 = vsel %vm1197, %v1225, %v1226
      %v1228 = vrot.slane %v882, 1
      %v1229 = vrot.slane %v954, 1
      %v1230 = vsel %vm1197, %v1228, %v1229
      %v1231 = vrot.slane %v883, 1
      %v1232 = vrot.slane %v955, 1
      %v1233 = vsel %vm1197, %v1231, %v1232
      %v1234 = vrot.slane %v884, 1
      %v1235 = vrot.slane %v956, 1
      %v1236 = vsel %vm1197, %v1234, %v1235
      %v1237 = vrot.slane %v885, 1
      %v1238 = vrot.slane %v957, 1
      %v1239 = vsel %vm1197, %v1237, %v1238
      %v1240 = vrot.slane %v886, 1
      %v1241 = vrot.slane %v958, 1
      %v1242 = vsel %vm1197, %v1240, %v1241
      %v1243 = vrot.slane %v887, 1
      %v1244 = vrot.slane %v959, 1
      %v1245 = vsel %vm1197, %v1243, %v1244
      %v1246 = vrot.slane %v888, 1
      %v1247 = vrot.slane %v960, 1
      %v1248 = vsel %vm1197, %v1246, %v1247
      %v1249 = vrot.slane %v889, 1
      %v1250 = vrot.slane %v961, 1
      %v1251 = vsel %vm1197, %v1249, %v1250
      %v1270 = vld [vmem:[%s1] sm:$0xf]
      %v1271 = vld [vmem:[%s1 + $0x4] sm:$0xf]
      %v1272 = vld [vmem:[%s1 + $0x8] sm:$0xf]
      %v1273 = vld [vmem:[%s1 + $0xc] sm:$0xf]
      %v1274 = vld [vmem:[%s1 + $0x10] sm:$0xf]
      %v1275 = vld [vmem:[%s1 + $0x14] sm:$0xf]
      %v1276 = vld [vmem:[%s1 + $0x18] sm:$0xf]
      %v1277 = vld [vmem:[%s1 + $0x1c] sm:$0xf]
      %v1278 = vld [vmem:[%s1 + $0x20] sm:$0xf]
      %v1279 = vld [vmem:[%s1 + $0x24] sm:$0xf]
      %v1280 = vld [vmem:[%s1 + $0x28] sm:$0xf]
      %v1281 = vld [vmem:[%s1 + $0x2c] sm:$0xf]
      %v1282 = vld [vmem:[%s1 + $0x30] sm:$0xf]
      %v1283 = vld [vmem:[%s1 + $0x34] sm:$0xf]
      %v1284 = vld [vmem:[%s1 + $0x38] sm:$0xf]
      %v1285 = vld [vmem:[%s1 + $0x3c] sm:$0xf]
      %v1286 = vld [vmem:[%s1 + $0x40] sm:$0xf]
      %v1287 = vld [vmem:[%s1 + $0x44] sm:$0xf]
      %v1288 = vld [vmem:[%s1 + $0x48] sm:$0xf]
      %v1289 = vld [vmem:[%s1 + $0x4c] sm:$0xf]
      %v1290 = vld [vmem:[%s1 + $0x50] sm:$0xf]
      %v1291 = vld [vmem:[%s1 + $0x54] sm:$0xf]
      %v1292 = vld [vmem:[%s1 + $0x58] sm:$0xf]
      %v1293 = vld [vmem:[%s1 + $0x5c] sm:$0xf]
      %v1294 = vld [vmem:[%s1 + $0x60] sm:$0xf]
      %v1295 = vld [vmem:[%s1 + $0x64] sm:$0xf]
      %v1296 = vld [vmem:[%s1 + $0x68] sm:$0xf]
      %v1297 = vld [vmem:[%s1 + $0x6c] sm:$0xf]
      %v1298 = vld [vmem:[%s1 + $0x70] sm:$0xf]
      %v1299 = vld [vmem:[%s1 + $0x74] sm:$0xf]
      %v1300 = vld [vmem:[%s1 + $0x78] sm:$0xf]
      %v1301 = vld [vmem:[%s1 + $0x7c] sm:$0xf]
      %v1302 = vld [vmem:[%s1 + $0x80] sm:$0xf]
      %v1303 = vld [vmem:[%s1 + $0x84] sm:$0xf]
      %v1304 = vld [vmem:[%s1 + $0x88] sm:$0xf]
      %v1305 = vld [vmem:[%s1 + $0x8c] sm:$0xf]
      %v1306 = vld [vmem:[%s1 + $0x90] sm:$0xf]
      %v1307 = vld [vmem:[%s1 + $0x94] sm:$0xf]
      %v1308 = vld [vmem:[%s1 + $0x98] sm:$0xf]
      %v1309 = vld [vmem:[%s1 + $0x9c] sm:$0xf]
      %v1310 = vld [vmem:[%s1 + $0xa0] sm:$0xf]
      %v1311 = vld [vmem:[%s1 + $0xa4] sm:$0xf]
      %v1312 = vld [vmem:[%s1 + $0xa8] sm:$0xf]
      %v1313 = vld [vmem:[%s1 + $0xac] sm:$0xf]
      %v1314 = vld [vmem:[%s1 + $0xb0] sm:$0xf]
      %v1315 = vld [vmem:[%s1 + $0xb4] sm:$0xf]
      %v1316 = vld [vmem:[%s1 + $0xb8] sm:$0xf]
      %v1317 = vld [vmem:[%s1 + $0xbc] sm:$0xf]
      %s1318 = scalar_lea.vmem %s1, 192
      %v1319 = vld [vmem:[%s1318] sm:$0xf]
      %v1320 = vld [vmem:[%s1318 + $0x4] sm:$0xf]
      %v1321 = vld [vmem:[%s1318 + $0x8] sm:$0xf]
      %v1322 = vld [vmem:[%s1318 + $0xc] sm:$0xf]
      %v1323 = vld [vmem:[%s1318 + $0x10] sm:$0xf]
      %v1324 = vld [vmem:[%s1318 + $0x14] sm:$0xf]
      %v1325 = vld [vmem:[%s1318 + $0x18] sm:$0xf]
      %v1326 = vld [vmem:[%s1318 + $0x1c] sm:$0xf]
      %v1327 = vld [vmem:[%s1318 + $0x20] sm:$0xf]
      %v1328 = vld [vmem:[%s1318 + $0x24] sm:$0xf]
      %v1329 = vld [vmem:[%s1318 + $0x28] sm:$0xf]
      %v1330 = vld [vmem:[%s1318 + $0x2c] sm:$0xf]
      %v1331 = vld [vmem:[%s1318 + $0x30] sm:$0xf]
      %v1332 = vld [vmem:[%s1318 + $0x34] sm:$0xf]
      %v1333 = vld [vmem:[%s1318 + $0x38] sm:$0xf]
      %v1334 = vld [vmem:[%s1318 + $0x3c] sm:$0xf]
      %v1335 = vld [vmem:[%s1318 + $0x40] sm:$0xf]
      %v1336 = vld [vmem:[%s1318 + $0x44] sm:$0xf]
      %v1337 = vld [vmem:[%s1318 + $0x48] sm:$0xf]
      %v1338 = vld [vmem:[%s1318 + $0x4c] sm:$0xf]
      %v1339 = vld [vmem:[%s1318 + $0x50] sm:$0xf]
      %v1340 = vld [vmem:[%s1318 + $0x54] sm:$0xf]
      %v1341 = vld [vmem:[%s1318 + $0x58] sm:$0xf]
      %v1342 = vld [vmem:[%s1318 + $0x5c] sm:$0xf]
      %v1343 = vld [vmem:[%s1318 + $0x60] sm:$0xf]
      %v1344 = vld [vmem:[%s1318 + $0x64] sm:$0xf]
      %v1345 = vld [vmem:[%s1318 + $0x68] sm:$0xf]
      %v1346 = vld [vmem:[%s1318 + $0x6c] sm:$0xf]
      %v1347 = vld [vmem:[%s1318 + $0x70] sm:$0xf]
      %v1348 = vld [vmem:[%s1318 + $0x74] sm:$0xf]
      %v1349 = vld [vmem:[%s1318 + $0x78] sm:$0xf]
      %v1350 = vld [vmem:[%s1318 + $0x7c] sm:$0xf]
      %v1351 = vld [vmem:[%s1318 + $0x80] sm:$0xf]
      %v1352 = vld [vmem:[%s1318 + $0x84] sm:$0xf]
      %v1353 = vld [vmem:[%s1318 + $0x88] sm:$0xf]
      %v1354 = vld [vmem:[%s1318 + $0x8c] sm:$0xf]
      %v1355 = vld [vmem:[%s1318 + $0x90] sm:$0xf]
      %v1356 = vld [vmem:[%s1318 + $0x94] sm:$0xf]
      %v1357 = vld [vmem:[%s1318 + $0x98] sm:$0xf]
      %v1358 = vld [vmem:[%s1318 + $0x9c] sm:$0xf]
      %v1359 = vld [vmem:[%s1318 + $0xa0] sm:$0xf]
      %v1360 = vld [vmem:[%s1318 + $0xa4] sm:$0xf]
      %v1361 = vld [vmem:[%s1318 + $0xa8] sm:$0xf]
      %v1362 = vld [vmem:[%s1318 + $0xac] sm:$0xf]
      %v1363 = vld [vmem:[%s1318 + $0xb0] sm:$0xf]
      %v1364 = vld [vmem:[%s1318 + $0xb4] sm:$0xf]
      %v1365 = vld [vmem:[%s1318 + $0xb8] sm:$0xf]
      %v1366 = vld [vmem:[%s1318 + $0xbc] sm:$0xf]
      %v1415 = vunpack.c.l.b16 %v1319
      %v1416 = vunpack.c.l.b16 %v1320
      %v1417 = vunpack.c.l.b16 %v1321
      %v1418 = vunpack.c.l.b16 %v1322
      %v1419 = vunpack.c.l.b16 %v1323
      %v1420 = vunpack.c.l.b16 %v1324
      %v1421 = vunpack.c.l.b16 %v1325
      %v1422 = vunpack.c.l.b16 %v1326
      %v1423 = vunpack.c.l.b16 %v1327
      %v1424 = vunpack.c.l.b16 %v1328
      %v1425 = vunpack.c.l.b16 %v1329
      %v1426 = vunpack.c.l.b16 %v1330
      %v1427 = vunpack.c.l.b16 %v1331
      %v1428 = vunpack.c.l.b16 %v1332
      %v1429 = vunpack.c.l.b16 %v1333
      %v1430 = vunpack.c.l.b16 %v1334
      %v1431 = vunpack.c.l.b16 %v1335
      %v1432 = vunpack.c.l.b16 %v1336
      %v1433 = vunpack.c.l.b16 %v1337
      %v1434 = vunpack.c.l.b16 %v1338
      %v1435 = vunpack.c.l.b16 %v1339
      %v1436 = vunpack.c.l.b16 %v1340
      %v1437 = vunpack.c.l.b16 %v1341
      %v1438 = vunpack.c.l.b16 %v1342
      %v1439 = vunpack.c.l.b16 %v1343
      %v1440 = vunpack.c.l.b16 %v1344
      %v1441 = vunpack.c.l.b16 %v1345
      %v1442 = vunpack.c.l.b16 %v1346
      %v1443 = vunpack.c.l.b16 %v1347
      %v1444 = vunpack.c.l.b16 %v1348
      %v1445 = vunpack.c.l.b16 %v1349
      %v1446 = vunpack.c.l.b16 %v1350
      %v1447 = vunpack.c.l.b16 %v1351
      %v1448 = vunpack.c.l.b16 %v1352
      %v1449 = vunpack.c.l.b16 %v1353
      %v1450 = vunpack.c.l.b16 %v1354
      %v1451 = vunpack.c.l.b16 %v1355
      %v1452 = vunpack.c.l.b16 %v1356
      %v1453 = vunpack.c.l.b16 %v1357
      %v1454 = vunpack.c.l.b16 %v1358
      %v1455 = vunpack.c.l.b16 %v1359
      %v1456 = vunpack.c.l.b16 %v1360
      %v1457 = vunpack.c.l.b16 %v1361
      %v1458 = vunpack.c.l.b16 %v1362
      %v1459 = vunpack.c.l.b16 %v1363
      %v1460 = vunpack.c.l.b16 %v1364
      %v1461 = vunpack.c.l.b16 %v1365
      %v1462 = vunpack.c.l.b16 %v1366
      %v1463 = vpack.c.b16 %v1416, %v1415
      %v1464 = vpack.c.b16 %v1418, %v1417
      %v1465 = vpack.c.b16 %v1420, %v1419
      %v1466 = vpack.c.b16 %v1422, %v1421
      %v1467 = vpack.c.b16 %v1424, %v1423
      %v1468 = vpack.c.b16 %v1426, %v1425
      %v1469 = vpack.c.b16 %v1428, %v1427
      %v1470 = vpack.c.b16 %v1430, %v1429
      %v1471 = vpack.c.b16 %v1432, %v1431
      %v1472 = vpack.c.b16 %v1434, %v1433
      %v1473 = vpack.c.b16 %v1436, %v1435
      %v1474 = vpack.c.b16 %v1438, %v1437
      %v1475 = vpack.c.b16 %v1440, %v1439
      %v1476 = vpack.c.b16 %v1442, %v1441
      %v1477 = vpack.c.b16 %v1444, %v1443
      %v1478 = vpack.c.b16 %v1446, %v1445
      %v1479 = vpack.c.b16 %v1448, %v1447
      %v1480 = vpack.c.b16 %v1450, %v1449
      %v1481 = vpack.c.b16 %v1452, %v1451
      %v1482 = vpack.c.b16 %v1454, %v1453
      %v1483 = vpack.c.b16 %v1456, %v1455
      %v1484 = vpack.c.b16 %v1458, %v1457
      %v1485 = vpack.c.b16 %v1460, %v1459
      %v1486 = vpack.c.b16 %v1462, %v1461
      %1511 = vmatprep.subr.bf16.mxu0 0
      %1512 = vmatpush1.bf16.msra.mxu0 %v1470
      %1513 = vmatprep.subr.bf16.mxu0 0
      %1514 = vmatpush1.bf16.msra.mxu0 %v1469
      %1515 = vmatprep.subr.bf16.mxu0 0
      %1516 = vmatpush1.bf16.msra.mxu0 %v1468
      %1517 = vmatprep.subr.bf16.mxu0 0
      %1518 = vmatpush1.bf16.msra.mxu0 %v1467
      %1519 = vmatprep.subr.bf16.mxu0 0
      %1520 = vmatpush1.bf16.msra.mxu0 %v1466
      %1521 = vmatprep.subr.bf16.mxu0 0
      %1522 = vmatpush1.bf16.msra.mxu0 %v1465
      %1523 = vmatprep.subr.bf16.mxu0 0
      %1524 = vmatpush1.bf16.msra.mxu0 %v1464
      %1525 = vmatprep.subr.bf16.mxu0 0
      %1526 = vmatpush1.bf16.msra.mxu0 %v1463
      %1527 = vmatprep.subr.bf16.mxu0 0
      %1528 = vmatpush2.bf16.msra.mxu0 %v1478
      %1529 = vmatprep.subr.bf16.mxu0 0
      %1530 = vmatpush2.bf16.msra.mxu0 %v1477
      %1531 = vmatprep.subr.bf16.mxu0 0
      %1532 = vmatpush2.bf16.msra.mxu0 %v1476
      %1533 = vmatprep.subr.bf16.mxu0 0
      %1534 = vmatpush2.bf16.msra.mxu0 %v1475
      %1535 = vmatprep.subr.bf16.mxu0 0
      %1536 = vmatpush2.bf16.msra.mxu0 %v1474
      %1537 = vmatprep.subr.bf16.mxu0 0
      %1538 = vmatpush2.bf16.msra.mxu0 %v1473
      %1539 = vmatprep.subr.bf16.mxu0 0
      %1540 = vmatpush2.bf16.msra.mxu0 %v1472
      %1541 = vmatprep.subr.bf16.mxu0 0
      %1542 = vmatpush2.bf16.msra.mxu0 %v1471
      %1543 = vmatprep.mubr.bf16.mxu0 %v986
      %1544 = vmatmul.mubr.bf16.gmra.mxu0 %v873
      %v1545 = vpop.f32.mrf.mxu0
      %v1546 = vadd.f32 0.0, %v1545
      %v1547 = vpop.f32.mrf.mxu0
      %v1548 = vpop.f32.mrf.mxu0
      %v1549 = vadd.f32 0.0, %v1548
      %v1550 = vpop.f32.mrf.mxu0
      %1551 = vmatprep.mubr.bf16.mxu0 %v998
      %1552 = vmatmul.mubr.bf16.gmra.mxu0 %v874
      %v1553 = vpop.f32.mrf.mxu0
      %v1554 = vadd.f32 0.0, %v1553
      %v1555 = vpop.f32.mrf.mxu0
      %v1556 = vpop.f32.mrf.mxu0
      %v1557 = vadd.f32 0.0, %v1556
      %v1558 = vpop.f32.mrf.mxu0
      %1559 = vmatprep.mubr.bf16.mxu0 %v1010
      %1560 = vmatmul.mubr.bf16.gmra.mxu0 %v875
      %v1561 = vpop.f32.mrf.mxu0
      %v1562 = vadd.f32 0.0, %v1561
      %v1563 = vpop.f32.mrf.mxu0
      %v1564 = vpop.f32.mrf.mxu0
      %v1565 = vadd.f32 0.0, %v1564
      %v1566 = vpop.f32.mrf.mxu0
      %1567 = vmatprep.mubr.bf16.mxu0 %v1022
      %1568 = vmatmul.mubr.bf16.gmra.mxu0 %v876
      %v1569 = vpop.f32.mrf.mxu0
      %v1570 = vadd.f32 0.0, %v1569
      %v1571 = vpop.f32.mrf.mxu0
      %v1572 = vpop.f32.mrf.mxu0
      %v1573 = vadd.f32 0.0, %v1572
      %v1574 = vpop.f32.mrf.mxu0
      %1575 = vmatprep.mubr.bf16.mxu0 %v1034
      %1576 = vmatmul.mubr.bf16.gmra.mxu0 %v877
      %v1577 = vpop.f32.mrf.mxu0
      %v1578 = vadd.f32 0.0, %v1577
      %v1579 = vpop.f32.mrf.mxu0
      %v1580 = vpop.f32.mrf.mxu0
      %v1581 = vadd.f32 0.0, %v1580
      %v1582 = vpop.f32.mrf.mxu0
      %1583 = vmatprep.mubr.bf16.mxu0 %v1046
      %1584 = vmatmul.mubr.bf16.gmra.mxu0 %v878
      %v1585 = vpop.f32.mrf.mxu0
      %v1586 = vadd.f32 0.0, %v1585
      %v1587 = vpop.f32.mrf.mxu0
      %v1588 = vpop.f32.mrf.mxu0
      %v1589 = vadd.f32 0.0, %v1588
      %v1590 = vpop.f32.mrf.mxu0
      %1591 = vmatprep.mubr.bf16.mxu0 %v1058
      %1592 = vmatmul.mubr.bf16.gmra.mxu0 %v879
      %v1593 = vpop.f32.mrf.mxu0
      %v1594 = vadd.f32 0.0, %v1593
      %v1595 = vpop.f32.mrf.mxu0
      %v1596 = vpop.f32.mrf.mxu0
      %v1597 = vadd.f32 0.0, %v1596
      %v1598 = vpop.f32.mrf.mxu0
      %1599 = vmatprep.mubr.bf16.mxu0 %v1070
      %1600 = vmatmul.mubr.bf16.gmra.mxu0 %v880
      %v1601 = vpop.f32.mrf.mxu0
      %v1602 = vadd.f32 0.0, %v1601
      %v1603 = vpop.f32.mrf.mxu0
      %v1604 = vpop.f32.mrf.mxu0
      %v1605 = vadd.f32 0.0, %v1604
      %v1606 = vpop.f32.mrf.mxu0
      %1607 = vmatprep.mubr.bf16.mxu0 %v1082
      %1608 = vmatmul.mubr.bf16.gmra.mxu0 %v881
      %v1609 = vpop.f32.mrf.mxu0
      %v1610 = vadd.f32 0.0, %v1609
      %v1611 = vpop.f32.mrf.mxu0
      %v1612 = vpop.f32.mrf.mxu0
      %v1613 = vadd.f32 0.0, %v1612
      %v1614 = vpop.f32.mrf.mxu0
      %1615 = vmatprep.mubr.bf16.mxu0 %v1094
      %1616 = vmatmul.mubr.bf16.gmra.mxu0 %v882
      %v1617 = vpop.f32.mrf.mxu0
      %v1618 = vadd.f32 0.0, %v1617
      %v1619 = vpop.f32.mrf.mxu0
      %v1620 = vpop.f32.mrf.mxu0
      %v1621 = vadd.f32 0.0, %v1620
      %v1622 = vpop.f32.mrf.mxu0
      %1623 = vmatprep.mubr.bf16.mxu0 %v1106
      %1624 = vmatmul.mubr.bf16.gmra.mxu0 %v883
      %v1625 = vpop.f32.mrf.mxu0
      %v1626 = vadd.f32 0.0, %v1625
      %v1627 = vpop.f32.mrf.mxu0
      %v1628 = vpop.f32.mrf.mxu0
      %v1629 = vadd.f32 0.0, %v1628
      %v1630 = vpop.f32.mrf.mxu0
      %1631 = vmatprep.mubr.bf16.mxu0 %v1118
      %1632 = vmatmul.mubr.bf16.gmra.mxu0 %v884
      %v1633 = vpop.f32.mrf.mxu0
      %v1634 = vadd.f32 0.0, %v1633
      %v1635 = vpop.f32.mrf.mxu0
      %v1636 = vpop.f32.mrf.mxu0
      %v1637 = vadd.f32 0.0, %v1636
      %v1638 = vpop.f32.mrf.mxu0
      %1639 = vmatprep.mubr.bf16.mxu0 %v1130
      %1640 = vmatmul.mubr.bf16.gmra.mxu0 %v885
      %v1641 = vpop.f32.mrf.mxu0
      %v1642 = vadd.f32 0.0, %v1641
      %v1643 = vpop.f32.mrf.mxu0
      %v1644 = vpop.f32.mrf.mxu0
      %v1645 = vadd.f32 0.0, %v1644
      %v1646 = vpop.f32.mrf.mxu0
      %1647 = vmatprep.mubr.bf16.mxu0 %v1142
      %1648 = vmatmul.mubr.bf16.gmra.mxu0 %v886
      %v1649 = vpop.f32.mrf.mxu0
      %v1650 = vadd.f32 0.0, %v1649
      %v1651 = vpop.f32.mrf.mxu0
      %v1652 = vpop.f32.mrf.mxu0
      %v1653 = vadd.f32 0.0, %v1652
      %v1654 = vpop.f32.mrf.mxu0
      %1655 = vmatprep.mubr.bf16.mxu0 %v1154
      %1656 = vmatmul.mubr.bf16.gmra.mxu0 %v887
      %v1657 = vpop.f32.mrf.mxu0
      %v1658 = vadd.f32 0.0, %v1657
      %v1659 = vpop.f32.mrf.mxu0
      %v1660 = vpop.f32.mrf.mxu0
      %v1661 = vadd.f32 0.0, %v1660
      %v1662 = vpop.f32.mrf.mxu0
      %1663 = vmatprep.mubr.bf16.mxu0 %v1166
      %1664 = vmatmul.mubr.bf16.gmra.mxu0 %v888
      %v1665 = vpop.f32.mrf.mxu0
      %v1666 = vadd.f32 0.0, %v1665
      %v1667 = vpop.f32.mrf.mxu0
      %v1668 = vpop.f32.mrf.mxu0
      %v1669 = vadd.f32 0.0, %v1668
      %v1670 = vpop.f32.mrf.mxu0
      %1671 = vdwg.mxu0
      %1672 = vmatprep.subr.bf16.mxu0 0
      %1673 = vmatpush1.bf16.msra.mxu0 %v1486
      %1674 = vmatprep.subr.bf16.mxu0 0
      %1675 = vmatpush1.bf16.msra.mxu0 %v1485
      %1676 = vmatprep.subr.bf16.mxu0 0
      %1677 = vmatpush1.bf16.msra.mxu0 %v1484
      %1678 = vmatprep.subr.bf16.mxu0 0
      %1679 = vmatpush1.bf16.msra.mxu0 %v1483
      %1680 = vmatprep.subr.bf16.mxu0 0
      %1681 = vmatpush1.bf16.msra.mxu0 %v1482
      %1682 = vmatprep.subr.bf16.mxu0 0
      %1683 = vmatpush1.bf16.msra.mxu0 %v1481
      %1684 = vmatprep.subr.bf16.mxu0 0
      %1685 = vmatpush1.bf16.msra.mxu0 %v1480
      %1686 = vmatprep.subr.bf16.mxu0 0
      %1687 = vmatpush1.bf16.msra.mxu0 %v1479
      %1688 = vmatprep.subr.bf16.mxu0 0
      %1689 = vmatpush2.bf16.msra.mxu0 0
      %1690 = vmatprep.subr.bf16.mxu0 0
      %1691 = vmatpush2.bf16.msra.mxu0 0
      %1692 = vmatprep.subr.bf16.mxu0 0
      %1693 = vmatpush2.bf16.msra.mxu0 0
      %1694 = vmatprep.subr.bf16.mxu0 0
      %1695 = vmatpush2.bf16.msra.mxu0 0
      %1696 = vmatprep.subr.bf16.mxu0 0
      %1697 = vmatpush2.bf16.msra.mxu0 0
      %1698 = vmatprep.subr.bf16.mxu0 0
      %1699 = vmatpush2.bf16.msra.mxu0 0
      %1700 = vmatprep.subr.bf16.mxu0 0
      %1701 = vmatpush2.bf16.msra.mxu0 0
      %1702 = vmatprep.subr.bf16.mxu0 0
      %1703 = vmatpush2.bf16.msra.mxu0 0
      %1704 = vmatprep.mubr.bf16.mxu0 0
      %1705 = vmatmul.mubr.bf16.gmra.mxu0 %v1203
      %v1706 = vpop.f32.mrf.mxu0
      %v1707 = vadd.f32 %v1546, %v1706
      %v1708 = vpop.f32.mrf.mxu0
      %v1709 = vpop.f32.mrf.mxu0
      %v1710 = vadd.f32 %v1549, %v1709
      %v1711 = vpop.f32.mrf.mxu0
      %1712 = vmatprep.mubr.bf16.mxu0 0
      %1713 = vmatmul.mubr.bf16.gmra.mxu0 %v1206
      %v1714 = vpop.f32.mrf.mxu0
      %v1715 = vadd.f32 %v1554, %v1714
      %v1716 = vpop.f32.mrf.mxu0
      %v1717 = vpop.f32.mrf.mxu0
      %v1718 = vadd.f32 %v1557, %v1717
      %v1719 = vpop.f32.mrf.mxu0
      %1720 = vmatprep.mubr.bf16.mxu0 0
      %1721 = vmatmul.mubr.bf16.gmra.mxu0 %v1209
      %v1722 = vpop.f32.mrf.mxu0
      %v1723 = vadd.f32 %v1562, %v1722
      %v1724 = vpop.f32.mrf.mxu0
      %v1725 = vpop.f32.mrf.mxu0
      %v1726 = vadd.f32 %v1565, %v1725
      %v1727 = vpop.f32.mrf.mxu0
      %1728 = vmatprep.mubr.bf16.mxu0 0
      %1729 = vmatmul.mubr.bf16.gmra.mxu0 %v1212
      %v1730 = vpop.f32.mrf.mxu0
      %v1731 = vadd.f32 %v1570, %v1730
      %v1732 = vpop.f32.mrf.mxu0
      %v1733 = vpop.f32.mrf.mxu0
      %v1734 = vadd.f32 %v1573, %v1733
      %v1735 = vpop.f32.mrf.mxu0
      %1736 = vmatprep.mubr.bf16.mxu0 0
      %1737 = vmatmul.mubr.bf16.gmra.mxu0 %v1215
      %v1738 = vpop.f32.mrf.mxu0
      %v1739 = vadd.f32 %v1578, %v1738
      %v1740 = vpop.f32.mrf.mxu0
      %v1741 = vpop.f32.mrf.mxu0
      %v1742 = vadd.f32 %v1581, %v1741
      %v1743 = vpop.f32.mrf.mxu0
      %1744 = vmatprep.mubr.bf16.mxu0 0
      %1745 = vmatmul.mubr.bf16.gmra.mxu0 %v1218
      %v1746 = vpop.f32.mrf.mxu0
      %v1747 = vadd.f32 %v1586, %v1746
      %v1748 = vpop.f32.mrf.mxu0
      %v1749 = vpop.f32.mrf.mxu0
      %v1750 = vadd.f32 %v1589, %v1749
      %v1751 = vpop.f32.mrf.mxu0
      %1752 = vmatprep.mubr.bf16.mxu0 0
      %1753 = vmatmul.mubr.bf16.gmra.mxu0 %v1221
      %v1754 = vpop.f32.mrf.mxu0
      %v1755 = vadd.f32 %v1594, %v1754
      %v1756 = vpop.f32.mrf.mxu0
      %v1757 = vpop.f32.mrf.mxu0
      %v1758 = vadd.f32 %v1597, %v1757
      %v1759 = vpop.f32.mrf.mxu0
      %1760 = vmatprep.mubr.bf16.mxu0 0
      %1761 = vmatmul.mubr.bf16.gmra.mxu0 %v1224
      %v1762 = vpop.f32.mrf.mxu0
      %v1763 = vadd.f32 %v1602, %v1762
      %v1764 = vpop.f32.mrf.mxu0
      %v1765 = vpop.f32.mrf.mxu0
      %v1766 = vadd.f32 %v1605, %v1765
      %v1767 = vpop.f32.mrf.mxu0
      %1768 = vmatprep.mubr.bf16.mxu0 0
      %1769 = vmatmul.mubr.bf16.gmra.mxu0 %v1227
      %v1770 = vpop.f32.mrf.mxu0
      %v1771 = vadd.f32 %v1610, %v1770
      %v1772 = vpop.f32.mrf.mxu0
      %v1773 = vpop.f32.mrf.mxu0
      %v1774 = vadd.f32 %v1613, %v1773
      %v1775 = vpop.f32.mrf.mxu0
      %1776 = vmatprep.mubr.bf16.mxu0 0
      %1777 = vmatmul.mubr.bf16.gmra.mxu0 %v1230
      %v1778 = vpop.f32.mrf.mxu0
      %v1779 = vadd.f32 %v1618, %v1778
      %v1780 = vpop.f32.mrf.mxu0
      %v1781 = vpop.f32.mrf.mxu0
      %v1782 = vadd.f32 %v1621, %v1781
      %v1783 = vpop.f32.mrf.mxu0
      %1784 = vmatprep.mubr.bf16.mxu0 0
      %1785 = vmatmul.mubr.bf16.gmra.mxu0 %v1233
      %v1786 = vpop.f32.mrf.mxu0
      %v1787 = vadd.f32 %v1626, %v1786
      %v1788 = vpop.f32.mrf.mxu0
      %v1789 = vpop.f32.mrf.mxu0
      %v1790 = vadd.f32 %v1629, %v1789
      %v1791 = vpop.f32.mrf.mxu0
      %1792 = vmatprep.mubr.bf16.mxu0 0
      %1793 = vmatmul.mubr.bf16.gmra.mxu0 %v1236
      %v1794 = vpop.f32.mrf.mxu0
      %v1795 = vadd.f32 %v1634, %v1794
      %v1796 = vpop.f32.mrf.mxu0
      %v1797 = vpop.f32.mrf.mxu0
      %v1798 = vadd.f32 %v1637, %v1797
      %v1799 = vpop.f32.mrf.mxu0
      %1800 = vmatprep.mubr.bf16.mxu0 0
      %1801 = vmatmul.mubr.bf16.gmra.mxu0 %v1239
      %v1802 = vpop.f32.mrf.mxu0
      %v1803 = vadd.f32 %v1642, %v1802
      %v1804 = vpop.f32.mrf.mxu0
      %v1805 = vpop.f32.mrf.mxu0
      %v1806 = vadd.f32 %v1645, %v1805
      %v1807 = vpop.f32.mrf.mxu0
      %1808 = vmatprep.mubr.bf16.mxu0 0
      %1809 = vmatmul.mubr.bf16.gmra.mxu0 %v1242
      %v1810 = vpop.f32.mrf.mxu0
      %v1811 = vadd.f32 %v1650, %v1810
      %v1812 = vpop.f32.mrf.mxu0
      %v1813 = vpop.f32.mrf.mxu0
      %v1814 = vadd.f32 %v1653, %v1813
      %v1815 = vpop.f32.mrf.mxu0
      %1816 = vmatprep.mubr.bf16.mxu0 0
      %1817 = vmatmul.mubr.bf16.gmra.mxu0 %v1245
      %v1818 = vpop.f32.mrf.mxu0
      %v1819 = vadd.f32 %v1658, %v1818
      %v1820 = vpop.f32.mrf.mxu0
      %v1821 = vpop.f32.mrf.mxu0
      %v1822 = vadd.f32 %v1661, %v1821
      %v1823 = vpop.f32.mrf.mxu0
      %1824 = vmatprep.mubr.bf16.mxu0 0
      %1825 = vmatmul.mubr.bf16.gmra.mxu0 %v1248
      %v1826 = vpop.f32.mrf.mxu0
      %v1827 = vadd.f32 %v1666, %v1826
      %v1828 = vpop.f32.mrf.mxu0
      %v1829 = vpop.f32.mrf.mxu0
      %v1830 = vadd.f32 %v1669, %v1829
      %v1831 = vpop.f32.mrf.mxu0
      %1832 = vdwg.mxu0
      %v1881 = vunpack.c.l.b16 %v1270
      %v1882 = vunpack.c.l.b16 %v1271
      %v1883 = vunpack.c.l.b16 %v1272
      %v1884 = vunpack.c.l.b16 %v1273
      %v1885 = vunpack.c.l.b16 %v1274
      %v1886 = vunpack.c.l.b16 %v1275
      %v1887 = vunpack.c.l.b16 %v1276
      %v1888 = vunpack.c.l.b16 %v1277
      %v1889 = vunpack.c.l.b16 %v1278
      %v1890 = vunpack.c.l.b16 %v1279
      %v1891 = vunpack.c.l.b16 %v1280
      %v1892 = vunpack.c.l.b16 %v1281
      %v1893 = vunpack.c.l.b16 %v1282
      %v1894 = vunpack.c.l.b16 %v1283
      %v1895 = vunpack.c.l.b16 %v1284
      %v1896 = vunpack.c.l.b16 %v1285
      %v1897 = vunpack.c.l.b16 %v1286
      %v1898 = vunpack.c.l.b16 %v1287
      %v1899 = vunpack.c.l.b16 %v1288
      %v1900 = vunpack.c.l.b16 %v1289
      %v1901 = vunpack.c.l.b16 %v1290
      %v1902 = vunpack.c.l.b16 %v1291
      %v1903 = vunpack.c.l.b16 %v1292
      %v1904 = vunpack.c.l.b16 %v1293
      %v1905 = vunpack.c.l.b16 %v1294
      %v1906 = vunpack.c.l.b16 %v1295
      %v1907 = vunpack.c.l.b16 %v1296
      %v1908 = vunpack.c.l.b16 %v1297
      %v1909 = vunpack.c.l.b16 %v1298
      %v1910 = vunpack.c.l.b16 %v1299
      %v1911 = vunpack.c.l.b16 %v1300
      %v1912 = vunpack.c.l.b16 %v1301
      %v1913 = vunpack.c.l.b16 %v1302
      %v1914 = vunpack.c.l.b16 %v1303
      %v1915 = vunpack.c.l.b16 %v1304
      %v1916 = vunpack.c.l.b16 %v1305
      %v1917 = vunpack.c.l.b16 %v1306
      %v1918 = vunpack.c.l.b16 %v1307
      %v1919 = vunpack.c.l.b16 %v1308
      %v1920 = vunpack.c.l.b16 %v1309
      %v1921 = vunpack.c.l.b16 %v1310
      %v1922 = vunpack.c.l.b16 %v1311
      %v1923 = vunpack.c.l.b16 %v1312
      %v1924 = vunpack.c.l.b16 %v1313
      %v1925 = vunpack.c.l.b16 %v1314
      %v1926 = vunpack.c.l.b16 %v1315
      %v1927 = vunpack.c.l.b16 %v1316
      %v1928 = vunpack.c.l.b16 %v1317
      %v1929 = vpack.c.b16 %v1882, %v1881
      %v1930 = vpack.c.b16 %v1884, %v1883
      %v1931 = vpack.c.b16 %v1886, %v1885
      %v1932 = vpack.c.b16 %v1888, %v1887
      %v1933 = vpack.c.b16 %v1890, %v1889
      %v1934 = vpack.c.b16 %v1892, %v1891
      %v1935 = vpack.c.b16 %v1894, %v1893
      %v1936 = vpack.c.b16 %v1896, %v1895
      %v1937 = vpack.c.b16 %v1898, %v1897
      %v1938 = vpack.c.b16 %v1900, %v1899
      %v1939 = vpack.c.b16 %v1902, %v1901
      %v1940 = vpack.c.b16 %v1904, %v1903
      %v1941 = vpack.c.b16 %v1906, %v1905
      %v1942 = vpack.c.b16 %v1908, %v1907
      %v1943 = vpack.c.b16 %v1910, %v1909
      %v1944 = vpack.c.b16 %v1912, %v1911
      %v1945 = vpack.c.b16 %v1914, %v1913
      %v1946 = vpack.c.b16 %v1916, %v1915
      %v1947 = vpack.c.b16 %v1918, %v1917
      %v1948 = vpack.c.b16 %v1920, %v1919
      %v1949 = vpack.c.b16 %v1922, %v1921
      %v1950 = vpack.c.b16 %v1924, %v1923
      %v1951 = vpack.c.b16 %v1926, %v1925
      %v1952 = vpack.c.b16 %v1928, %v1927
      %1977 = vmatprep.subr.bf16.mxu0 0
      %1978 = vmatpush1.bf16.msra.mxu0 %v1936
      %1979 = vmatprep.subr.bf16.mxu0 0
      %1980 = vmatpush1.bf16.msra.mxu0 %v1935
      %1981 = vmatprep.subr.bf16.mxu0 0
      %1982 = vmatpush1.bf16.msra.mxu0 %v1934
      %1983 = vmatprep.subr.bf16.mxu0 0
      %1984 = vmatpush1.bf16.msra.mxu0 %v1933
      %1985 = vmatprep.subr.bf16.mxu0 0
      %1986 = vmatpush1.bf16.msra.mxu0 %v1932
      %1987 = vmatprep.subr.bf16.mxu0 0
      %1988 = vmatpush1.bf16.msra.mxu0 %v1931
      %1989 = vmatprep.subr.bf16.mxu0 0
      %1990 = vmatpush1.bf16.msra.mxu0 %v1930
      %1991 = vmatprep.subr.bf16.mxu0 0
      %1992 = vmatpush1.bf16.msra.mxu0 %v1929
      %1993 = vmatprep.subr.bf16.mxu0 0
      %1994 = vmatpush2.bf16.msra.mxu0 %v1944
      %1995 = vmatprep.subr.bf16.mxu0 0
      %1996 = vmatpush2.bf16.msra.mxu0 %v1943
      %1997 = vmatprep.subr.bf16.mxu0 0
      %1998 = vmatpush2.bf16.msra.mxu0 %v1942
      %1999 = vmatprep.subr.bf16.mxu0 0
      %2000 = vmatpush2.bf16.msra.mxu0 %v1941
      %2001 = vmatprep.subr.bf16.mxu0 0
      %2002 = vmatpush2.bf16.msra.mxu0 %v1940
      %2003 = vmatprep.subr.bf16.mxu0 0
      %2004 = vmatpush2.bf16.msra.mxu0 %v1939
      %2005 = vmatprep.subr.bf16.mxu0 0
      %2006 = vmatpush2.bf16.msra.mxu0 %v1938
      %2007 = vmatprep.subr.bf16.mxu0 0
      %2008 = vmatpush2.bf16.msra.mxu0 %v1937
      %2009 = vmatprep.mubr.bf16.mxu0 %v974
      %2010 = vmatmul.mubr.bf16.gmra.mxu0 %v872
      %v2011 = vpop.f32.mrf.mxu0
      %v2012 = vadd.f32 %v1707, %v2011
      %v2013 = vpop.f32.mrf.mxu0
      %v2014 = vpop.f32.mrf.mxu0
      %v2015 = vadd.f32 %v1710, %v2014
      %v2016 = vpop.f32.mrf.mxu0
      %2017 = vmatprep.mubr.bf16.mxu0 %v986
      %2018 = vmatmul.mubr.bf16.gmra.mxu0 %v873
      %v2019 = vpop.f32.mrf.mxu0
      %v2020 = vadd.f32 %v1715, %v2019
      %v2021 = vpop.f32.mrf.mxu0
      %v2022 = vpop.f32.mrf.mxu0
      %v2023 = vadd.f32 %v1718, %v2022
      %v2024 = vpop.f32.mrf.mxu0
      %2025 = vmatprep.mubr.bf16.mxu0 %v998
      %2026 = vmatmul.mubr.bf16.gmra.mxu0 %v874
      %v2027 = vpop.f32.mrf.mxu0
      %v2028 = vadd.f32 %v1723, %v2027
      %v2029 = vpop.f32.mrf.mxu0
      %v2030 = vpop.f32.mrf.mxu0
      %v2031 = vadd.f32 %v1726, %v2030
      %v2032 = vpop.f32.mrf.mxu0
      %2033 = vmatprep.mubr.bf16.mxu0 %v1010
      %2034 = vmatmul.mubr.bf16.gmra.mxu0 %v875
      %v2035 = vpop.f32.mrf.mxu0
      %v2036 = vadd.f32 %v1731, %v2035
      %v2037 = vpop.f32.mrf.mxu0
      %v2038 = vpop.f32.mrf.mxu0
      %v2039 = vadd.f32 %v1734, %v2038
      %v2040 = vpop.f32.mrf.mxu0
      %2041 = vmatprep.mubr.bf16.mxu0 %v1022
      %2042 = vmatmul.mubr.bf16.gmra.mxu0 %v876
      %v2043 = vpop.f32.mrf.mxu0
      %v2044 = vadd.f32 %v1739, %v2043
      %v2045 = vpop.f32.mrf.mxu0
      %v2046 = vpop.f32.mrf.mxu0
      %v2047 = vadd.f32 %v1742, %v2046
      %v2048 = vpop.f32.mrf.mxu0
      %2049 = vmatprep.mubr.bf16.mxu0 %v1034
      %2050 = vmatmul.mubr.bf16.gmra.mxu0 %v877
      %v2051 = vpop.f32.mrf.mxu0
      %v2052 = vadd.f32 %v1747, %v2051
      %v2053 = vpop.f32.mrf.mxu0
      %v2054 = vpop.f32.mrf.mxu0
      %v2055 = vadd.f32 %v1750, %v2054
      %v2056 = vpop.f32.mrf.mxu0
      %2057 = vmatprep.mubr.bf16.mxu0 %v1046
      %2058 = vmatmul.mubr.bf16.gmra.mxu0 %v878
      %v2059 = vpop.f32.mrf.mxu0
      %v2060 = vadd.f32 %v1755, %v2059
      %v2061 = vpop.f32.mrf.mxu0
      %v2062 = vpop.f32.mrf.mxu0
      %v2063 = vadd.f32 %v1758, %v2062
      %v2064 = vpop.f32.mrf.mxu0
      %2065 = vmatprep.mubr.bf16.mxu0 %v1058
      %2066 = vmatmul.mubr.bf16.gmra.mxu0 %v879
      %v2067 = vpop.f32.mrf.mxu0
      %v2068 = vadd.f32 %v1763, %v2067
      %v2069 = vpop.f32.mrf.mxu0
      %v2070 = vpop.f32.mrf.mxu0
      %v2071 = vadd.f32 %v1766, %v2070
      %v2072 = vpop.f32.mrf.mxu0
      %2073 = vmatprep.mubr.bf16.mxu0 %v1070
      %2074 = vmatmul.mubr.bf16.gmra.mxu0 %v880
      %v2075 = vpop.f32.mrf.mxu0
      %v2076 = vadd.f32 %v1771, %v2075
      %v2077 = vpop.f32.mrf.mxu0
      %v2078 = vpop.f32.mrf.mxu0
      %v2079 = vadd.f32 %v1774, %v2078
      %v2080 = vpop.f32.mrf.mxu0
      %2081 = vmatprep.mubr.bf16.mxu0 %v1082
      %2082 = vmatmul.mubr.bf16.gmra.mxu0 %v881
      %v2083 = vpop.f32.mrf.mxu0
      %v2084 = vadd.f32 %v1779, %v2083
      %v2085 = vpop.f32.mrf.mxu0
      %v2086 = vpop.f32.mrf.mxu0
      %v2087 = vadd.f32 %v1782, %v2086
      %v2088 = vpop.f32.mrf.mxu0
      %2089 = vmatprep.mubr.bf16.mxu0 %v1094
      %2090 = vmatmul.mubr.bf16.gmra.mxu0 %v882
      %v2091 = vpop.f32.mrf.mxu0
      %v2092 = vadd.f32 %v1787, %v2091
      %v2093 = vpop.f32.mrf.mxu0
      %v2094 = vpop.f32.mrf.mxu0
      %v2095 = vadd.f32 %v1790, %v2094
      %v2096 = vpop.f32.mrf.mxu0
      %2097 = vmatprep.mubr.bf16.mxu0 %v1106
      %2098 = vmatmul.mubr.bf16.gmra.mxu0 %v883
      %v2099 = vpop.f32.mrf.mxu0
      %v2100 = vadd.f32 %v1795, %v2099
      %v2101 = vpop.f32.mrf.mxu0
      %v2102 = vpop.f32.mrf.mxu0
      %v2103 = vadd.f32 %v1798, %v2102
      %v2104 = vpop.f32.mrf.mxu0
      %2105 = vmatprep.mubr.bf16.mxu0 %v1118
      %2106 = vmatmul.mubr.bf16.gmra.mxu0 %v884
      %v2107 = vpop.f32.mrf.mxu0
      %v2108 = vadd.f32 %v1803, %v2107
      %v2109 = vpop.f32.mrf.mxu0
      %v2110 = vpop.f32.mrf.mxu0
      %v2111 = vadd.f32 %v1806, %v2110
      %v2112 = vpop.f32.mrf.mxu0
      %2113 = vmatprep.mubr.bf16.mxu0 %v1130
      %2114 = vmatmul.mubr.bf16.gmra.mxu0 %v885
      %v2115 = vpop.f32.mrf.mxu0
      %v2116 = vadd.f32 %v1811, %v2115
      %v2117 = vpop.f32.mrf.mxu0
      %v2118 = vpop.f32.mrf.mxu0
      %v2119 = vadd.f32 %v1814, %v2118
      %v2120 = vpop.f32.mrf.mxu0
      %2121 = vmatprep.mubr.bf16.mxu0 %v1142
      %2122 = vmatmul.mubr.bf16.gmra.mxu0 %v886
      %v2123 = vpop.f32.mrf.mxu0
      %v2124 = vadd.f32 %v1819, %v2123
      %v2125 = vpop.f32.mrf.mxu0
      %v2126 = vpop.f32.mrf.mxu0
      %v2127 = vadd.f32 %v1822, %v2126
      %v2128 = vpop.f32.mrf.mxu0
      %2129 = vmatprep.mubr.bf16.mxu0 %v1154
      %2130 = vmatmul.mubr.bf16.gmra.mxu0 %v887
      %v2131 = vpop.f32.mrf.mxu0
      %v2132 = vadd.f32 %v1827, %v2131
      %v2133 = vpop.f32.mrf.mxu0
      %v2134 = vpop.f32.mrf.mxu0
      %v2135 = vadd.f32 %v1830, %v2134
      %v2136 = vpop.f32.mrf.mxu0
      %2137 = vdwg.mxu0
      %2138 = vmatprep.subr.bf16.mxu0 0
      %2139 = vmatpush1.bf16.msra.mxu0 %v1952
      %2140 = vmatprep.subr.bf16.mxu0 0
      %2141 = vmatpush1.bf16.msra.mxu0 %v1951
      %2142 = vmatprep.subr.bf16.mxu0 0
      %2143 = vmatpush1.bf16.msra.mxu0 %v1950
      %2144 = vmatprep.subr.bf16.mxu0 0
      %2145 = vmatpush1.bf16.msra.mxu0 %v1949
      %2146 = vmatprep.subr.bf16.mxu0 0
      %2147 = vmatpush1.bf16.msra.mxu0 %v1948
      %2148 = vmatprep.subr.bf16.mxu0 0
      %2149 = vmatpush1.bf16.msra.mxu0 %v1947
      %2150 = vmatprep.subr.bf16.mxu0 0
      %2151 = vmatpush1.bf16.msra.mxu0 %v1946
      %2152 = vmatprep.subr.bf16.mxu0 0
      %2153 = vmatpush1.bf16.msra.mxu0 %v1945
      %2154 = vmatprep.subr.bf16.mxu0 0
      %2155 = vmatpush2.bf16.msra.mxu0 0
      %2156 = vmatprep.subr.bf16.mxu0 0
      %2157 = vmatpush2.bf16.msra.mxu0 0
      %2158 = vmatprep.subr.bf16.mxu0 0
      %2159 = vmatpush2.bf16.msra.mxu0 0
      %2160 = vmatprep.subr.bf16.mxu0 0
      %2161 = vmatpush2.bf16.msra.mxu0 0
      %2162 = vmatprep.subr.bf16.mxu0 0
      %2163 = vmatpush2.bf16.msra.mxu0 0
      %2164 = vmatprep.subr.bf16.mxu0 0
      %2165 = vmatpush2.bf16.msra.mxu0 0
      %2166 = vmatprep.subr.bf16.mxu0 0
      %2167 = vmatpush2.bf16.msra.mxu0 0
      %2168 = vmatprep.subr.bf16.mxu0 0
      %2169 = vmatpush2.bf16.msra.mxu0 0
      %2170 = vmatprep.mubr.bf16.mxu0 0
      %2171 = vmatmul.mubr.bf16.gmra.mxu0 %v1200
      %v2172 = vpop.f32.mrf.mxu0
      %v2173 = vadd.f32 %v2012, %v2172
      %v2174 = vpop.f32.mrf.mxu0
      %v2175 = vpop.f32.mrf.mxu0
      %v2176 = vadd.f32 %v2015, %v2175
      %v2177 = vpop.f32.mrf.mxu0
      %2178 = vmatprep.mubr.bf16.mxu0 0
      %2179 = vmatmul.mubr.bf16.gmra.mxu0 %v1203
      %v2180 = vpop.f32.mrf.mxu0
      %v2181 = vadd.f32 %v2020, %v2180
      %v2182 = vpop.f32.mrf.mxu0
      %v2183 = vpop.f32.mrf.mxu0
      %v2184 = vadd.f32 %v2023, %v2183
      %v2185 = vpop.f32.mrf.mxu0
      %2186 = vmatprep.mubr.bf16.mxu0 0
      %2187 = vmatmul.mubr.bf16.gmra.mxu0 %v1206
      %v2188 = vpop.f32.mrf.mxu0
      %v2189 = vadd.f32 %v2028, %v2188
      %v2190 = vpop.f32.mrf.mxu0
      %v2191 = vpop.f32.mrf.mxu0
      %v2192 = vadd.f32 %v2031, %v2191
      %v2193 = vpop.f32.mrf.mxu0
      %2194 = vmatprep.mubr.bf16.mxu0 0
      %2195 = vmatmul.mubr.bf16.gmra.mxu0 %v1209
      %v2196 = vpop.f32.mrf.mxu0
      %v2197 = vadd.f32 %v2036, %v2196
      %v2198 = vpop.f32.mrf.mxu0
      %v2199 = vpop.f32.mrf.mxu0
      %v2200 = vadd.f32 %v2039, %v2199
      %v2201 = vpop.f32.mrf.mxu0
      %2202 = vmatprep.mubr.bf16.mxu0 0
      %2203 = vmatmul.mubr.bf16.gmra.mxu0 %v1212
      %v2204 = vpop.f32.mrf.mxu0
      %v2205 = vadd.f32 %v2044, %v2204
      %v2206 = vpop.f32.mrf.mxu0
      %v2207 = vpop.f32.mrf.mxu0
      %v2208 = vadd.f32 %v2047, %v2207
      %v2209 = vpop.f32.mrf.mxu0
      %2210 = vmatprep.mubr.bf16.mxu0 0
      %2211 = vmatmul.mubr.bf16.gmra.mxu0 %v1215
      %v2212 = vpop.f32.mrf.mxu0
      %v2213 = vadd.f32 %v2052, %v2212
      %v2214 = vpop.f32.mrf.mxu0
      %v2215 = vpop.f32.mrf.mxu0
      %v2216 = vadd.f32 %v2055, %v2215
      %v2217 = vpop.f32.mrf.mxu0
      %2218 = vmatprep.mubr.bf16.mxu0 0
      %2219 = vmatmul.mubr.bf16.gmra.mxu0 %v1218
      %v2220 = vpop.f32.mrf.mxu0
      %v2221 = vadd.f32 %v2060, %v2220
      %v2222 = vpop.f32.mrf.mxu0
      %v2223 = vpop.f32.mrf.mxu0
      %v2224 = vadd.f32 %v2063, %v2223
      %v2225 = vpop.f32.mrf.mxu0
      %2226 = vmatprep.mubr.bf16.mxu0 0
      %2227 = vmatmul.mubr.bf16.gmra.mxu0 %v1221
      %v2228 = vpop.f32.mrf.mxu0
      %v2229 = vadd.f32 %v2068, %v2228
      %v2230 = vpop.f32.mrf.mxu0
      %v2231 = vpop.f32.mrf.mxu0
      %v2232 = vadd.f32 %v2071, %v2231
      %v2233 = vpop.f32.mrf.mxu0
      %2234 = vmatprep.mubr.bf16.mxu0 0
      %2235 = vmatmul.mubr.bf16.gmra.mxu0 %v1224
      %v2236 = vpop.f32.mrf.mxu0
      %v2237 = vadd.f32 %v2076, %v2236
      %v2238 = vpop.f32.mrf.mxu0
      %v2239 = vpop.f32.mrf.mxu0
      %v2240 = vadd.f32 %v2079, %v2239
      %v2241 = vpop.f32.mrf.mxu0
      %2242 = vmatprep.mubr.bf16.mxu0 0
      %2243 = vmatmul.mubr.bf16.gmra.mxu0 %v1227
      %v2244 = vpop.f32.mrf.mxu0
      %v2245 = vadd.f32 %v2084, %v2244
      %v2246 = vpop.f32.mrf.mxu0
      %v2247 = vpop.f32.mrf.mxu0
      %v2248 = vadd.f32 %v2087, %v2247
      %v2249 = vpop.f32.mrf.mxu0
      %2250 = vmatprep.mubr.bf16.mxu0 0
      %2251 = vmatmul.mubr.bf16.gmra.mxu0 %v1230
      %v2252 = vpop.f32.mrf.mxu0
      %v2253 = vadd.f32 %v2092, %v2252
      %v2254 = vpop.f32.mrf.mxu0
      %v2255 = vpop.f32.mrf.mxu0
      %v2256 = vadd.f32 %v2095, %v2255
      %v2257 = vpop.f32.mrf.mxu0
      %2258 = vmatprep.mubr.bf16.mxu0 0
      %2259 = vmatmul.mubr.bf16.gmra.mxu0 %v1233
      %v2260 = vpop.f32.mrf.mxu0
      %v2261 = vadd.f32 %v2100, %v2260
      %v2262 = vpop.f32.mrf.mxu0
      %v2263 = vpop.f32.mrf.mxu0
      %v2264 = vadd.f32 %v2103, %v2263
      %v2265 = vpop.f32.mrf.mxu0
      %2266 = vmatprep.mubr.bf16.mxu0 0
      %2267 = vmatmul.mubr.bf16.gmra.mxu0 %v1236
      %v2268 = vpop.f32.mrf.mxu0
      %v2269 = vadd.f32 %v2108, %v2268
      %v2270 = vpop.f32.mrf.mxu0
      %v2271 = vpop.f32.mrf.mxu0
      %v2272 = vadd.f32 %v2111, %v2271
      %v2273 = vpop.f32.mrf.mxu0
      %2274 = vmatprep.mubr.bf16.mxu0 0
      %2275 = vmatmul.mubr.bf16.gmra.mxu0 %v1239
      %v2276 = vpop.f32.mrf.mxu0
      %v2277 = vadd.f32 %v2116, %v2276
      %v2278 = vpop.f32.mrf.mxu0
      %v2279 = vpop.f32.mrf.mxu0
      %v2280 = vadd.f32 %v2119, %v2279
      %v2281 = vpop.f32.mrf.mxu0
      %2282 = vmatprep.mubr.bf16.mxu0 0
      %2283 = vmatmul.mubr.bf16.gmra.mxu0 %v1242
      %v2284 = vpop.f32.mrf.mxu0
      %v2285 = vadd.f32 %v2124, %v2284
      %v2286 = vpop.f32.mrf.mxu0
      %v2287 = vpop.f32.mrf.mxu0
      %v2288 = vadd.f32 %v2127, %v2287
      %v2289 = vpop.f32.mrf.mxu0
      %2290 = vmatprep.mubr.bf16.mxu0 0
      %2291 = vmatmul.mubr.bf16.gmra.mxu0 %v1245
      %v2292 = vpop.f32.mrf.mxu0
      %v2293 = vadd.f32 %v2132, %v2292
      %v2294 = vpop.f32.mrf.mxu0
      %v2295 = vpop.f32.mrf.mxu0
      %v2296 = vadd.f32 %v2135, %v2295
      %v2297 = vpop.f32.mrf.mxu0
      %2298 = vdwg.mxu0
      %s2299 = scalar_lea.vmem %s1, 384
      %v2300 = vld [vmem:[%s2299] sm:$0xf]
      %v2301 = vld [vmem:[%s2299 + $0x4] sm:$0xf]
      %v2302 = vld [vmem:[%s2299 + $0x8] sm:$0xf]
      %v2303 = vld [vmem:[%s2299 + $0xc] sm:$0xf]
      %v2304 = vld [vmem:[%s2299 + $0x10] sm:$0xf]
      %v2305 = vld [vmem:[%s2299 + $0x14] sm:$0xf]
      %v2306 = vld [vmem:[%s2299 + $0x18] sm:$0xf]
      %v2307 = vld [vmem:[%s2299 + $0x1c] sm:$0xf]
      %v2308 = vld [vmem:[%s2299 + $0x20] sm:$0xf]
      %v2309 = vld [vmem:[%s2299 + $0x24] sm:$0xf]
      %v2310 = vld [vmem:[%s2299 + $0x28] sm:$0xf]
      %v2311 = vld [vmem:[%s2299 + $0x2c] sm:$0xf]
      %v2312 = vld [vmem:[%s2299 + $0x30] sm:$0xf]
      %v2313 = vld [vmem:[%s2299 + $0x34] sm:$0xf]
      %v2314 = vld [vmem:[%s2299 + $0x38] sm:$0xf]
      %v2315 = vld [vmem:[%s2299 + $0x3c] sm:$0xf]
      %v2316 = vld [vmem:[%s2299 + $0x40] sm:$0xf]
      %v2317 = vld [vmem:[%s2299 + $0x44] sm:$0xf]
      %v2318 = vld [vmem:[%s2299 + $0x48] sm:$0xf]
      %v2319 = vld [vmem:[%s2299 + $0x4c] sm:$0xf]
      %v2320 = vld [vmem:[%s2299 + $0x50] sm:$0xf]
      %v2321 = vld [vmem:[%s2299 + $0x54] sm:$0xf]
      %v2322 = vld [vmem:[%s2299 + $0x58] sm:$0xf]
      %v2323 = vld [vmem:[%s2299 + $0x5c] sm:$0xf]
      %v2324 = vld [vmem:[%s2299 + $0x60] sm:$0xf]
      %v2325 = vld [vmem:[%s2299 + $0x64] sm:$0xf]
      %v2326 = vld [vmem:[%s2299 + $0x68] sm:$0xf]
      %v2327 = vld [vmem:[%s2299 + $0x6c] sm:$0xf]
      %v2328 = vld [vmem:[%s2299 + $0x70] sm:$0xf]
      %v2329 = vld [vmem:[%s2299 + $0x74] sm:$0xf]
      %v2330 = vld [vmem:[%s2299 + $0x78] sm:$0xf]
      %v2331 = vld [vmem:[%s2299 + $0x7c] sm:$0xf]
      %v2332 = vld [vmem:[%s2299 + $0x80] sm:$0xf]
      %v2333 = vld [vmem:[%s2299 + $0x84] sm:$0xf]
      %v2334 = vld [vmem:[%s2299 + $0x88] sm:$0xf]
      %v2335 = vld [vmem:[%s2299 + $0x8c] sm:$0xf]
      %v2336 = vld [vmem:[%s2299 + $0x90] sm:$0xf]
      %v2337 = vld [vmem:[%s2299 + $0x94] sm:$0xf]
      %v2338 = vld [vmem:[%s2299 + $0x98] sm:$0xf]
      %v2339 = vld [vmem:[%s2299 + $0x9c] sm:$0xf]
      %v2340 = vld [vmem:[%s2299 + $0xa0] sm:$0xf]
      %v2341 = vld [vmem:[%s2299 + $0xa4] sm:$0xf]
      %v2342 = vld [vmem:[%s2299 + $0xa8] sm:$0xf]
      %v2343 = vld [vmem:[%s2299 + $0xac] sm:$0xf]
      %v2344 = vld [vmem:[%s2299 + $0xb0] sm:$0xf]
      %v2345 = vld [vmem:[%s2299 + $0xb4] sm:$0xf]
      %v2346 = vld [vmem:[%s2299 + $0xb8] sm:$0xf]
      %v2347 = vld [vmem:[%s2299 + $0xbc] sm:$0xf]
      %v2396 = vunpack.c.l.b16 %v2300
      %v2397 = vunpack.c.l.b16 %v2301
      %v2398 = vunpack.c.l.b16 %v2302
      %v2399 = vunpack.c.l.b16 %v2303
      %v2400 = vunpack.c.l.b16 %v2304
      %v2401 = vunpack.c.l.b16 %v2305
      %v2402 = vunpack.c.l.b16 %v2306
      %v2403 = vunpack.c.l.b16 %v2307
      %v2404 = vunpack.c.l.b16 %v2308
      %v2405 = vunpack.c.l.b16 %v2309
      %v2406 = vunpack.c.l.b16 %v2310
      %v2407 = vunpack.c.l.b16 %v2311
      %v2408 = vunpack.c.l.b16 %v2312
      %v2409 = vunpack.c.l.b16 %v2313
      %v2410 = vunpack.c.l.b16 %v2314
      %v2411 = vunpack.c.l.b16 %v2315
      %v2412 = vunpack.c.l.b16 %v2316
      %v2413 = vunpack.c.l.b16 %v2317
      %v2414 = vunpack.c.l.b16 %v2318
      %v2415 = vunpack.c.l.b16 %v2319
      %v2416 = vunpack.c.l.b16 %v2320
      %v2417 = vunpack.c.l.b16 %v2321
      %v2418 = vunpack.c.l.b16 %v2322
      %v2419 = vunpack.c.l.b16 %v2323
      %v2420 = vunpack.c.l.b16 %v2324
      %v2421 = vunpack.c.l.b16 %v2325
      %v2422 = vunpack.c.l.b16 %v2326
      %v2423 = vunpack.c.l.b16 %v2327
      %v2424 = vunpack.c.l.b16 %v2328
      %v2425 = vunpack.c.l.b16 %v2329
      %v2426 = vunpack.c.l.b16 %v2330
      %v2427 = vunpack.c.l.b16 %v2331
      %v2428 = vunpack.c.l.b16 %v2332
      %v2429 = vunpack.c.l.b16 %v2333
      %v2430 = vunpack.c.l.b16 %v2334
      %v2431 = vunpack.c.l.b16 %v2335
      %v2432 = vunpack.c.l.b16 %v2336
      %v2433 = vunpack.c.l.b16 %v2337
      %v2434 = vunpack.c.l.b16 %v2338
      %v2435 = vunpack.c.l.b16 %v2339
      %v2436 = vunpack.c.l.b16 %v2340
      %v2437 = vunpack.c.l.b16 %v2341
      %v2438 = vunpack.c.l.b16 %v2342
      %v2439 = vunpack.c.l.b16 %v2343
      %v2440 = vunpack.c.l.b16 %v2344
      %v2441 = vunpack.c.l.b16 %v2345
      %v2442 = vunpack.c.l.b16 %v2346
      %v2443 = vunpack.c.l.b16 %v2347
      %v2444 = vpack.c.b16 %v2397, %v2396
      %v2445 = vpack.c.b16 %v2399, %v2398
      %v2446 = vpack.c.b16 %v2401, %v2400
      %v2447 = vpack.c.b16 %v2403, %v2402
      %v2448 = vpack.c.b16 %v2405, %v2404
      %v2449 = vpack.c.b16 %v2407, %v2406
      %v2450 = vpack.c.b16 %v2409, %v2408
      %v2451 = vpack.c.b16 %v2411, %v2410
      %v2452 = vpack.c.b16 %v2413, %v2412
      %v2453 = vpack.c.b16 %v2415, %v2414
      %v2454 = vpack.c.b16 %v2417, %v2416
      %v2455 = vpack.c.b16 %v2419, %v2418
      %v2456 = vpack.c.b16 %v2421, %v2420
      %v2457 = vpack.c.b16 %v2423, %v2422
      %v2458 = vpack.c.b16 %v2425, %v2424
      %v2459 = vpack.c.b16 %v2427, %v2426
      %v2460 = vpack.c.b16 %v2429, %v2428
      %v2461 = vpack.c.b16 %v2431, %v2430
      %v2462 = vpack.c.b16 %v2433, %v2432
      %v2463 = vpack.c.b16 %v2435, %v2434
      %v2464 = vpack.c.b16 %v2437, %v2436
      %v2465 = vpack.c.b16 %v2439, %v2438
      %v2466 = vpack.c.b16 %v2441, %v2440
      %v2467 = vpack.c.b16 %v2443, %v2442
      %2492 = vmatprep.subr.bf16.mxu0 0
      %2493 = vmatpush1.bf16.msra.mxu0 %v2451
      %2494 = vmatprep.subr.bf16.mxu0 0
      %2495 = vmatpush1.bf16.msra.mxu0 %v2450
      %2496 = vmatprep.subr.bf16.mxu0 0
      %2497 = vmatpush1.bf16.msra.mxu0 %v2449
      %2498 = vmatprep.subr.bf16.mxu0 0
      %2499 = vmatpush1.bf16.msra.mxu0 %v2448
      %2500 = vmatprep.subr.bf16.mxu0 0
      %2501 = vmatpush1.bf16.msra.mxu0 %v2447
      %2502 = vmatprep.subr.bf16.mxu0 0
      %2503 = vmatpush1.bf16.msra.mxu0 %v2446
      %2504 = vmatprep.subr.bf16.mxu0 0
      %2505 = vmatpush1.bf16.msra.mxu0 %v2445
      %2506 = vmatprep.subr.bf16.mxu0 0
      %2507 = vmatpush1.bf16.msra.mxu0 %v2444
      %2508 = vmatprep.subr.bf16.mxu0 0
      %2509 = vmatpush2.bf16.msra.mxu0 %v2459
      %2510 = vmatprep.subr.bf16.mxu0 0
      %2511 = vmatpush2.bf16.msra.mxu0 %v2458
      %2512 = vmatprep.subr.bf16.mxu0 0
      %2513 = vmatpush2.bf16.msra.mxu0 %v2457
      %2514 = vmatprep.subr.bf16.mxu0 0
      %2515 = vmatpush2.bf16.msra.mxu0 %v2456
      %2516 = vmatprep.subr.bf16.mxu0 0
      %2517 = vmatpush2.bf16.msra.mxu0 %v2455
      %2518 = vmatprep.subr.bf16.mxu0 0
      %2519 = vmatpush2.bf16.msra.mxu0 %v2454
      %2520 = vmatprep.subr.bf16.mxu0 0
      %2521 = vmatpush2.bf16.msra.mxu0 %v2453
      %2522 = vmatprep.subr.bf16.mxu0 0
      %2523 = vmatpush2.bf16.msra.mxu0 %v2452
      %2524 = vmatprep.mubr.bf16.mxu0 %v998
      %2525 = vmatmul.mubr.bf16.gmra.mxu0 %v874
      %v2526 = vpop.f32.mrf.mxu0
      %v2527 = vadd.f32 0.0, %v2526
      %v2528 = vpop.f32.mrf.mxu0
      %v2529 = vpop.f32.mrf.mxu0
      %v2530 = vadd.f32 0.0, %v2529
      %v2531 = vpop.f32.mrf.mxu0
      %2532 = vmatprep.mubr.bf16.mxu0 %v1010
      %2533 = vmatmul.mubr.bf16.gmra.mxu0 %v875
      %v2534 = vpop.f32.mrf.mxu0
      %v2535 = vadd.f32 0.0, %v2534
      %v2536 = vpop.f32.mrf.mxu0
      %v2537 = vpop.f32.mrf.mxu0
      %v2538 = vadd.f32 0.0, %v2537
      %v2539 = vpop.f32.mrf.mxu0
      %2540 = vmatprep.mubr.bf16.mxu0 %v1022
      %2541 = vmatmul.mubr.bf16.gmra.mxu0 %v876
      %v2542 = vpop.f32.mrf.mxu0
      %v2543 = vadd.f32 0.0, %v2542
      %v2544 = vpop.f32.mrf.mxu0
      %v2545 = vpop.f32.mrf.mxu0
      %v2546 = vadd.f32 0.0, %v2545
      %v2547 = vpop.f32.mrf.mxu0
      %2548 = vmatprep.mubr.bf16.mxu0 %v1034
      %2549 = vmatmul.mubr.bf16.gmra.mxu0 %v877
      %v2550 = vpop.f32.mrf.mxu0
      %v2551 = vadd.f32 0.0, %v2550
      %v2552 = vpop.f32.mrf.mxu0
      %v2553 = vpop.f32.mrf.mxu0
      %v2554 = vadd.f32 0.0, %v2553
      %v2555 = vpop.f32.mrf.mxu0
      %2556 = vmatprep.mubr.bf16.mxu0 %v1046
      %2557 = vmatmul.mubr.bf16.gmra.mxu0 %v878
      %v2558 = vpop.f32.mrf.mxu0
      %v2559 = vadd.f32 0.0, %v2558
      %v2560 = vpop.f32.mrf.mxu0
      %v2561 = vpop.f32.mrf.mxu0
      %v2562 = vadd.f32 0.0, %v2561
      %v2563 = vpop.f32.mrf.mxu0
      %2564 = vmatprep.mubr.bf16.mxu0 %v1058
      %2565 = vmatmul.mubr.bf16.gmra.mxu0 %v879
      %v2566 = vpop.f32.mrf.mxu0
      %v2567 = vadd.f32 0.0, %v2566
      %v2568 = vpop.f32.mrf.mxu0
      %v2569 = vpop.f32.mrf.mxu0
      %v2570 = vadd.f32 0.0, %v2569
      %v2571 = vpop.f32.mrf.mxu0
      %2572 = vmatprep.mubr.bf16.mxu0 %v1070
      %2573 = vmatmul.mubr.bf16.gmra.mxu0 %v880
      %v2574 = vpop.f32.mrf.mxu0
      %v2575 = vadd.f32 0.0, %v2574
      %v2576 = vpop.f32.mrf.mxu0
      %v2577 = vpop.f32.mrf.mxu0
      %v2578 = vadd.f32 0.0, %v2577
      %v2579 = vpop.f32.mrf.mxu0
      %2580 = vmatprep.mubr.bf16.mxu0 %v1082
      %2581 = vmatmul.mubr.bf16.gmra.mxu0 %v881
      %v2582 = vpop.f32.mrf.mxu0
      %v2583 = vadd.f32 0.0, %v2582
      %v2584 = vpop.f32.mrf.mxu0
      %v2585 = vpop.f32.mrf.mxu0
      %v2586 = vadd.f32 0.0, %v2585
      %v2587 = vpop.f32.mrf.mxu0
      %2588 = vmatprep.mubr.bf16.mxu0 %v1094
      %2589 = vmatmul.mubr.bf16.gmra.mxu0 %v882
      %v2590 = vpop.f32.mrf.mxu0
      %v2591 = vadd.f32 0.0, %v2590
      %v2592 = vpop.f32.mrf.mxu0
      %v2593 = vpop.f32.mrf.mxu0
      %v2594 = vadd.f32 0.0, %v2593
      %v2595 = vpop.f32.mrf.mxu0
      %2596 = vmatprep.mubr.bf16.mxu0 %v1106
      %2597 = vmatmul.mubr.bf16.gmra.mxu0 %v883
      %v2598 = vpop.f32.mrf.mxu0
      %v2599 = vadd.f32 0.0, %v2598
      %v2600 = vpop.f32.mrf.mxu0
      %v2601 = vpop.f32.mrf.mxu0
      %v2602 = vadd.f32 0.0, %v2601
      %v2603 = vpop.f32.mrf.mxu0
      %2604 = vmatprep.mubr.bf16.mxu0 %v1118
      %2605 = vmatmul.mubr.bf16.gmra.mxu0 %v884
      %v2606 = vpop.f32.mrf.mxu0
      %v2607 = vadd.f32 0.0, %v2606
      %v2608 = vpop.f32.mrf.mxu0
      %v2609 = vpop.f32.mrf.mxu0
      %v2610 = vadd.f32 0.0, %v2609
      %v2611 = vpop.f32.mrf.mxu0
      %2612 = vmatprep.mubr.bf16.mxu0 %v1130
      %2613 = vmatmul.mubr.bf16.gmra.mxu0 %v885
      %v2614 = vpop.f32.mrf.mxu0
      %v2615 = vadd.f32 0.0, %v2614
      %v2616 = vpop.f32.mrf.mxu0
      %v2617 = vpop.f32.mrf.mxu0
      %v2618 = vadd.f32 0.0, %v2617
      %v2619 = vpop.f32.mrf.mxu0
      %2620 = vmatprep.mubr.bf16.mxu0 %v1142
      %2621 = vmatmul.mubr.bf16.gmra.mxu0 %v886
      %v2622 = vpop.f32.mrf.mxu0
      %v2623 = vadd.f32 0.0, %v2622
      %v2624 = vpop.f32.mrf.mxu0
      %v2625 = vpop.f32.mrf.mxu0
      %v2626 = vadd.f32 0.0, %v2625
      %v2627 = vpop.f32.mrf.mxu0
      %2628 = vmatprep.mubr.bf16.mxu0 %v1154
      %2629 = vmatmul.mubr.bf16.gmra.mxu0 %v887
      %v2630 = vpop.f32.mrf.mxu0
      %v2631 = vadd.f32 0.0, %v2630
      %v2632 = vpop.f32.mrf.mxu0
      %v2633 = vpop.f32.mrf.mxu0
      %v2634 = vadd.f32 0.0, %v2633
      %v2635 = vpop.f32.mrf.mxu0
      %2636 = vmatprep.mubr.bf16.mxu0 %v1166
      %2637 = vmatmul.mubr.bf16.gmra.mxu0 %v888
      %v2638 = vpop.f32.mrf.mxu0
      %v2639 = vadd.f32 0.0, %v2638
      %v2640 = vpop.f32.mrf.mxu0
      %v2641 = vpop.f32.mrf.mxu0
      %v2642 = vadd.f32 0.0, %v2641
      %v2643 = vpop.f32.mrf.mxu0
      %2644 = vmatprep.mubr.bf16.mxu0 %v1178
      %2645 = vmatmul.mubr.bf16.gmra.mxu0 %v889
      %v2646 = vpop.f32.mrf.mxu0
      %v2647 = vadd.f32 0.0, %v2646
      %v2648 = vpop.f32.mrf.mxu0
      %v2649 = vpop.f32.mrf.mxu0
      %v2650 = vadd.f32 0.0, %v2649
      %v2651 = vpop.f32.mrf.mxu0
      %2652 = vdwg.mxu0
      %2653 = vmatprep.subr.bf16.mxu0 0
      %2654 = vmatpush1.bf16.msra.mxu0 %v2467
      %2655 = vmatprep.subr.bf16.mxu0 0
      %2656 = vmatpush1.bf16.msra.mxu0 %v2466
      %2657 = vmatprep.subr.bf16.mxu0 0
      %2658 = vmatpush1.bf16.msra.mxu0 %v2465
      %2659 = vmatprep.subr.bf16.mxu0 0
      %2660 = vmatpush1.bf16.msra.mxu0 %v2464
      %2661 = vmatprep.subr.bf16.mxu0 0
      %2662 = vmatpush1.bf16.msra.mxu0 %v2463
      %2663 = vmatprep.subr.bf16.mxu0 0
      %2664 = vmatpush1.bf16.msra.mxu0 %v2462
      %2665 = vmatprep.subr.bf16.mxu0 0
      %2666 = vmatpush1.bf16.msra.mxu0 %v2461
      %2667 = vmatprep.subr.bf16.mxu0 0
      %2668 = vmatpush1.bf16.msra.mxu0 %v2460
      %2669 = vmatprep.subr.bf16.mxu0 0
      %2670 = vmatpush2.bf16.msra.mxu0 0
      %2671 = vmatprep.subr.bf16.mxu0 0
      %2672 = vmatpush2.bf16.msra.mxu0 0
      %2673 = vmatprep.subr.bf16.mxu0 0
      %2674 = vmatpush2.bf16.msra.mxu0 0
      %2675 = vmatprep.subr.bf16.mxu0 0
      %2676 = vmatpush2.bf16.msra.mxu0 0
      %2677 = vmatprep.subr.bf16.mxu0 0
      %2678 = vmatpush2.bf16.msra.mxu0 0
      %2679 = vmatprep.subr.bf16.mxu0 0
      %2680 = vmatpush2.bf16.msra.mxu0 0
      %2681 = vmatprep.subr.bf16.mxu0 0
      %2682 = vmatpush2.bf16.msra.mxu0 0
      %2683 = vmatprep.subr.bf16.mxu0 0
      %2684 = vmatpush2.bf16.msra.mxu0 0
      %2685 = vmatprep.mubr.bf16.mxu0 0
      %2686 = vmatmul.mubr.bf16.gmra.mxu0 %v1206
      %v2687 = vpop.f32.mrf.mxu0
      %v2688 = vadd.f32 %v2527, %v2687
      %v2689 = vpop.f32.mrf.mxu0
      %v2690 = vpop.f32.mrf.mxu0
      %v2691 = vadd.f32 %v2530, %v2690
      %v2692 = vpop.f32.mrf.mxu0
      %2693 = vmatprep.mubr.bf16.mxu0 0
      %2694 = vmatmul.mubr.bf16.gmra.mxu0 %v1209
      %v2695 = vpop.f32.mrf.mxu0
      %v2696 = vadd.f32 %v2535, %v2695
      %v2697 = vpop.f32.mrf.mxu0
      %v2698 = vpop.f32.mrf.mxu0
      %v2699 = vadd.f32 %v2538, %v2698
      %v2700 = vpop.f32.mrf.mxu0
      %2701 = vmatprep.mubr.bf16.mxu0 0
      %2702 = vmatmul.mubr.bf16.gmra.mxu0 %v1212
      %v2703 = vpop.f32.mrf.mxu0
      %v2704 = vadd.f32 %v2543, %v2703
      %v2705 = vpop.f32.mrf.mxu0
      %v2706 = vpop.f32.mrf.mxu0
      %v2707 = vadd.f32 %v2546, %v2706
      %v2708 = vpop.f32.mrf.mxu0
      %2709 = vmatprep.mubr.bf16.mxu0 0
      %2710 = vmatmul.mubr.bf16.gmra.mxu0 %v1215
      %v2711 = vpop.f32.mrf.mxu0
      %v2712 = vadd.f32 %v2551, %v2711
      %v2713 = vpop.f32.mrf.mxu0
      %v2714 = vpop.f32.mrf.mxu0
      %v2715 = vadd.f32 %v2554, %v2714
      %v2716 = vpop.f32.mrf.mxu0
      %2717 = vmatprep.mubr.bf16.mxu0 0
      %2718 = vmatmul.mubr.bf16.gmra.mxu0 %v1218
      %v2719 = vpop.f32.mrf.mxu0
      %v2720 = vadd.f32 %v2559, %v2719
      %v2721 = vpop.f32.mrf.mxu0
      %v2722 = vpop.f32.mrf.mxu0
      %v2723 = vadd.f32 %v2562, %v2722
      %v2724 = vpop.f32.mrf.mxu0
      %2725 = vmatprep.mubr.bf16.mxu0 0
      %2726 = vmatmul.mubr.bf16.gmra.mxu0 %v1221
      %v2727 = vpop.f32.mrf.mxu0
      %v2728 = vadd.f32 %v2567, %v2727
      %v2729 = vpop.f32.mrf.mxu0
      %v2730 = vpop.f32.mrf.mxu0
      %v2731 = vadd.f32 %v2570, %v2730
      %v2732 = vpop.f32.mrf.mxu0
      %2733 = vmatprep.mubr.bf16.mxu0 0
      %2734 = vmatmul.mubr.bf16.gmra.mxu0 %v1224
      %v2735 = vpop.f32.mrf.mxu0
      %v2736 = vadd.f32 %v2575, %v2735
      %v2737 = vpop.f32.mrf.mxu0
      %v2738 = vpop.f32.mrf.mxu0
      %v2739 = vadd.f32 %v2578, %v2738
      %v2740 = vpop.f32.mrf.mxu0
      %2741 = vmatprep.mubr.bf16.mxu0 0
      %2742 = vmatmul.mubr.bf16.gmra.mxu0 %v1227
      %v2743 = vpop.f32.mrf.mxu0
      %v2744 = vadd.f32 %v2583, %v2743
      %v2745 = vpop.f32.mrf.mxu0
      %v2746 = vpop.f32.mrf.mxu0
      %v2747 = vadd.f32 %v2586, %v2746
      %v2748 = vpop.f32.mrf.mxu0
      %2749 = vmatprep.mubr.bf16.mxu0 0
      %2750 = vmatmul.mubr.bf16.gmra.mxu0 %v1230
      %v2751 = vpop.f32.mrf.mxu0
      %v2752 = vadd.f32 %v2591, %v2751
      %v2753 = vpop.f32.mrf.mxu0
      %v2754 = vpop.f32.mrf.mxu0
      %v2755 = vadd.f32 %v2594, %v2754
      %v2756 = vpop.f32.mrf.mxu0
      %2757 = vmatprep.mubr.bf16.mxu0 0
      %2758 = vmatmul.mubr.bf16.gmra.mxu0 %v1233
      %v2759 = vpop.f32.mrf.mxu0
      %v2760 = vadd.f32 %v2599, %v2759
      %v2761 = vpop.f32.mrf.mxu0
      %v2762 = vpop.f32.mrf.mxu0
      %v2763 = vadd.f32 %v2602, %v2762
      %v2764 = vpop.f32.mrf.mxu0
      %2765 = vmatprep.mubr.bf16.mxu0 0
      %2766 = vmatmul.mubr.bf16.gmra.mxu0 %v1236
      %v2767 = vpop.f32.mrf.mxu0
      %v2768 = vadd.f32 %v2607, %v2767
      %v2769 = vpop.f32.mrf.mxu0
      %v2770 = vpop.f32.mrf.mxu0
      %v2771 = vadd.f32 %v2610, %v2770
      %v2772 = vpop.f32.mrf.mxu0
      %2773 = vmatprep.mubr.bf16.mxu0 0
      %2774 = vmatmul.mubr.bf16.gmra.mxu0 %v1239
      %v2775 = vpop.f32.mrf.mxu0
      %v2776 = vadd.f32 %v2615, %v2775
      %v2777 = vpop.f32.mrf.mxu0
      %v2778 = vpop.f32.mrf.mxu0
      %v2779 = vadd.f32 %v2618, %v2778
      %v2780 = vpop.f32.mrf.mxu0
      %2781 = vmatprep.mubr.bf16.mxu0 0
      %2782 = vmatmul.mubr.bf16.gmra.mxu0 %v1242
      %v2783 = vpop.f32.mrf.mxu0
      %v2784 = vadd.f32 %v2623, %v2783
      %v2785 = vpop.f32.mrf.mxu0
      %v2786 = vpop.f32.mrf.mxu0
      %v2787 = vadd.f32 %v2626, %v2786
      %v2788 = vpop.f32.mrf.mxu0
      %2789 = vmatprep.mubr.bf16.mxu0 0
      %2790 = vmatmul.mubr.bf16.gmra.mxu0 %v1245
      %v2791 = vpop.f32.mrf.mxu0
      %v2792 = vadd.f32 %v2631, %v2791
      %v2793 = vpop.f32.mrf.mxu0
      %v2794 = vpop.f32.mrf.mxu0
      %v2795 = vadd.f32 %v2634, %v2794
      %v2796 = vpop.f32.mrf.mxu0
      %2797 = vmatprep.mubr.bf16.mxu0 0
      %2798 = vmatmul.mubr.bf16.gmra.mxu0 %v1248
      %v2799 = vpop.f32.mrf.mxu0
      %v2800 = vadd.f32 %v2639, %v2799
      %v2801 = vpop.f32.mrf.mxu0
      %v2802 = vpop.f32.mrf.mxu0
      %v2803 = vadd.f32 %v2642, %v2802
      %v2804 = vpop.f32.mrf.mxu0
      %2805 = vmatprep.mubr.bf16.mxu0 0
      %2806 = vmatmul.mubr.bf16.gmra.mxu0 %v1251
      %v2807 = vpop.f32.mrf.mxu0
      %v2808 = vadd.f32 %v2647, %v2807
      %v2809 = vpop.f32.mrf.mxu0
      %v2810 = vpop.f32.mrf.mxu0
      %v2811 = vadd.f32 %v2650, %v2810
      %v2812 = vpop.f32.mrf.mxu0
      %2813 = vdwg.mxu0
      %v2814 = vadd.f32 %v2173, %v2688
      %v2815 = vadd.f32 %v2176, %v2691
      %v2816 = vadd.f32 %v2181, %v2696
      %v2817 = vadd.f32 %v2184, %v2699
      %v2818 = vadd.f32 %v2189, %v2704
      %v2819 = vadd.f32 %v2192, %v2707
      %v2820 = vadd.f32 %v2197, %v2712
      %v2821 = vadd.f32 %v2200, %v2715
      %v2822 = vadd.f32 %v2205, %v2720
      %v2823 = vadd.f32 %v2208, %v2723
      %v2824 = vadd.f32 %v2213, %v2728
      %v2825 = vadd.f32 %v2216, %v2731
      %v2826 = vadd.f32 %v2221, %v2736
      %v2827 = vadd.f32 %v2224, %v2739
      %v2828 = vadd.f32 %v2229, %v2744
      %v2829 = vadd.f32 %v2232, %v2747
      %v2830 = vadd.f32 %v2237, %v2752
      %v2831 = vadd.f32 %v2240, %v2755
      %v2832 = vadd.f32 %v2245, %v2760
      %v2833 = vadd.f32 %v2248, %v2763
      %v2834 = vadd.f32 %v2253, %v2768
      %v2835 = vadd.f32 %v2256, %v2771
      %v2836 = vadd.f32 %v2261, %v2776
      %v2837 = vadd.f32 %v2264, %v2779
      %v2838 = vadd.f32 %v2269, %v2784
      %v2839 = vadd.f32 %v2272, %v2787
      %v2840 = vadd.f32 %v2277, %v2792
      %v2841 = vadd.f32 %v2280, %v2795
      %v2842 = vadd.f32 %v2285, %v2800
      %v2843 = vadd.f32 %v2288, %v2803
      %v2844 = vadd.f32 %v2293, %v2808
      %v2845 = vadd.f32 %v2296, %v2811
      %v2846 = vld [vmem:[%s2] sm:$0x1]
      %v2848 = vlaneseq
      %v2849 = vshrl.u32 %v2848, 7
      %v2850 = vsub.s32 0, %v2849
      %v2851 = vrot.slane %v2846, %v2850
      %v2853 = vadd.f32 %v2814, %v2851
      %v2854 = vadd.f32 %v2815, %v2851
      %v2855 = vadd.f32 %v2816, %v2851
      %v2856 = vadd.f32 %v2817, %v2851
      %v2857 = vadd.f32 %v2818, %v2851
      %v2858 = vadd.f32 %v2819, %v2851
      %v2859 = vadd.f32 %v2820, %v2851
      %v2860 = vadd.f32 %v2821, %v2851
      %v2861 = vadd.f32 %v2822, %v2851
      %v2862 = vadd.f32 %v2823, %v2851
      %v2863 = vadd.f32 %v2824, %v2851
      %v2864 = vadd.f32 %v2825, %v2851
      %v2865 = vadd.f32 %v2826, %v2851
      %v2866 = vadd.f32 %v2827, %v2851
      %v2867 = vadd.f32 %v2828, %v2851
      %v2868 = vadd.f32 %v2829, %v2851
      %v2869 = vadd.f32 %v2830, %v2851
      %v2870 = vadd.f32 %v2831, %v2851
      %v2871 = vadd.f32 %v2832, %v2851
      %v2872 = vadd.f32 %v2833, %v2851
      %v2873 = vadd.f32 %v2834, %v2851
      %v2874 = vadd.f32 %v2835, %v2851
      %v2875 = vadd.f32 %v2836, %v2851
      %v2876 = vadd.f32 %v2837, %v2851
      %v2877 = vadd.f32 %v2838, %v2851
      %v2878 = vadd.f32 %v2839, %v2851
      %v2879 = vadd.f32 %v2840, %v2851
      %v2880 = vadd.f32 %v2841, %v2851
      %v2881 = vadd.f32 %v2842, %v2851
      %v2882 = vadd.f32 %v2843, %v2851
      %v2883 = vadd.f32 %v2844, %v2851
      %v2884 = vadd.f32 %v2845, %v2851
      %v2885 = vld [vmem:[%s212] sm:$0xf]
      %v2886 = vld [vmem:[%s212 + $0x4] sm:$0xf]
      %v2887 = vld [vmem:[%s212 + $0x8] sm:$0xf]
      %v2888 = vld [vmem:[%s212 + $0xc] sm:$0xf]
      %v2889 = vld [vmem:[%s212 + $0x10] sm:$0xf]
      %v2890 = vld [vmem:[%s212 + $0x14] sm:$0xf]
      %v2891 = vld [vmem:[%s212 + $0x18] sm:$0xf]
      %v2892 = vld [vmem:[%s212 + $0x1c] sm:$0xf]
      %v2893 = vld [vmem:[%s212 + $0x20] sm:$0xf]
      %v2894 = vld [vmem:[%s212 + $0x24] sm:$0xf]
      %v2895 = vld [vmem:[%s212 + $0x28] sm:$0xf]
      %v2896 = vld [vmem:[%s212 + $0x2c] sm:$0xf]
      %v2897 = vld [vmem:[%s212 + $0x30] sm:$0xf]
      %v2898 = vld [vmem:[%s212 + $0x34] sm:$0xf]
      %v2899 = vld [vmem:[%s212 + $0x38] sm:$0xf]
      %v2900 = vld [vmem:[%s212 + $0x3c] sm:$0xf]
      %v2901 = vld [vmem:[%s212 + $0x40] sm:$0xf]
      %v2902 = vld [vmem:[%s212 + $0x44] sm:$0xf]
      %v2903 = vld [vmem:[%s212 + $0x48] sm:$0xf]
      %v2904 = vld [vmem:[%s212 + $0x4c] sm:$0xf]
      %v2905 = vld [vmem:[%s212 + $0x50] sm:$0xf]
      %v2906 = vld [vmem:[%s212 + $0x54] sm:$0xf]
      %v2907 = vld [vmem:[%s212 + $0x58] sm:$0xf]
      %v2908 = vld [vmem:[%s212 + $0x5c] sm:$0xf]
      %v2909 = vld [vmem:[%s212 + $0x60] sm:$0xf]
      %v2910 = vld [vmem:[%s212 + $0x64] sm:$0xf]
      %v2911 = vld [vmem:[%s212 + $0x68] sm:$0xf]
      %v2912 = vld [vmem:[%s212 + $0x6c] sm:$0xf]
      %v2913 = vld [vmem:[%s212 + $0x70] sm:$0xf]
      %v2914 = vld [vmem:[%s212 + $0x74] sm:$0xf]
      %v2915 = vld [vmem:[%s212 + $0x78] sm:$0xf]
      %v2916 = vld [vmem:[%s212 + $0x7c] sm:$0xf]
      %v2917 = vunpack.c.l.bf16 %v2885
      %v2918 = vunpack.c.l.bf16 %v2886
      %v2919 = vunpack.c.l.bf16 %v2887
      %v2920 = vunpack.c.l.bf16 %v2888
      %v2921 = vunpack.c.l.bf16 %v2889
      %v2922 = vunpack.c.l.bf16 %v2890
      %v2923 = vunpack.c.l.bf16 %v2891
      %v2924 = vunpack.c.l.bf16 %v2892
      %v2925 = vunpack.c.l.bf16 %v2893
      %v2926 = vunpack.c.l.bf16 %v2894
      %v2927 = vunpack.c.l.bf16 %v2895
      %v2928 = vunpack.c.l.bf16 %v2896
      %v2929 = vunpack.c.l.bf16 %v2897
      %v2930 = vunpack.c.l.bf16 %v2898
      %v2931 = vunpack.c.l.bf16 %v2899
      %v2932 = vunpack.c.l.bf16 %v2900
      %v2933 = vunpack.c.l.bf16 %v2901
      %v2934 = vunpack.c.l.bf16 %v2902
      %v2935 = vunpack.c.l.bf16 %v2903
      %v2936 = vunpack.c.l.bf16 %v2904
      %v2937 = vunpack.c.l.bf16 %v2905
      %v2938 = vunpack.c.l.bf16 %v2906
      %v2939 = vunpack.c.l.bf16 %v2907
      %v2940 = vunpack.c.l.bf16 %v2908
      %v2941 = vunpack.c.l.bf16 %v2909
      %v2942 = vunpack.c.l.bf16 %v2910
      %v2943 = vunpack.c.l.bf16 %v2911
      %v2944 = vunpack.c.l.bf16 %v2912
      %v2945 = vunpack.c.l.bf16 %v2913
      %v2946 = vunpack.c.l.bf16 %v2914
      %v2947 = vunpack.c.l.bf16 %v2915
      %v2948 = vunpack.c.l.bf16 %v2916
      %v2949 = vadd.f32 %v2853, %v2917
      %v2950 = vadd.f32 %v2854, %v2918
      %v2951 = vadd.f32 %v2855, %v2919
      %v2952 = vadd.f32 %v2856, %v2920
      %v2953 = vadd.f32 %v2857, %v2921
      %v2954 = vadd.f32 %v2858, %v2922
      %v2955 = vadd.f32 %v2859, %v2923
      %v2956 = vadd.f32 %v2860, %v2924
      %v2957 = vadd.f32 %v2861, %v2925
      %v2958 = vadd.f32 %v2862, %v2926
      %v2959 = vadd.f32 %v2863, %v2927
      %v2960 = vadd.f32 %v2864, %v2928
      %v2961 = vadd.f32 %v2865, %v2929
      %v2962 = vadd.f32 %v2866, %v2930
      %v2963 = vadd.f32 %v2867, %v2931
      %v2964 = vadd.f32 %v2868, %v2932
      %v2965 = vadd.f32 %v2869, %v2933
      %v2966 = vadd.f32 %v2870, %v2934
      %v2967 = vadd.f32 %v2871, %v2935
      %v2968 = vadd.f32 %v2872, %v2936
      %v2969 = vadd.f32 %v2873, %v2937
      %v2970 = vadd.f32 %v2874, %v2938
      %v2971 = vadd.f32 %v2875, %v2939
      %v2972 = vadd.f32 %v2876, %v2940
      %v2973 = vadd.f32 %v2877, %v2941
      %v2974 = vadd.f32 %v2878, %v2942
      %v2975 = vadd.f32 %v2879, %v2943
      %v2976 = vadd.f32 %v2880, %v2944
      %v2977 = vadd.f32 %v2881, %v2945
      %v2978 = vadd.f32 %v2882, %v2946
      %v2979 = vadd.f32 %v2883, %v2947
      %v2980 = vadd.f32 %v2884, %v2948
      %v2981 = vmax.f32 %v2949, 0.0
      %v2982 = vmax.f32 %v2950, 0.0
      %v2983 = vmax.f32 %v2951, 0.0
      %v2984 = vmax.f32 %v2952, 0.0
      %v2985 = vmax.f32 %v2953, 0.0
      %v2986 = vmax.f32 %v2954, 0.0
      %v2987 = vmax.f32 %v2955, 0.0
      %v2988 = vmax.f32 %v2956, 0.0
      %v2989 = vmax.f32 %v2957, 0.0
      %v2990 = vmax.f32 %v2958, 0.0
      %v2991 = vmax.f32 %v2959, 0.0
      %v2992 = vmax.f32 %v2960, 0.0
      %v2993 = vmax.f32 %v2961, 0.0
      %v2994 = vmax.f32 %v2962, 0.0
      %v2995 = vmax.f32 %v2963, 0.0
      %v2996 = vmax.f32 %v2964, 0.0
      %v2997 = vmax.f32 %v2965, 0.0
      %v2998 = vmax.f32 %v2966, 0.0
      %v2999 = vmax.f32 %v2967, 0.0
      %v3000 = vmax.f32 %v2968, 0.0
      %v3001 = vmax.f32 %v2969, 0.0
      %v3002 = vmax.f32 %v2970, 0.0
      %v3003 = vmax.f32 %v2971, 0.0
      %v3004 = vmax.f32 %v2972, 0.0
      %v3005 = vmax.f32 %v2973, 0.0
      %v3006 = vmax.f32 %v2974, 0.0
      %v3007 = vmax.f32 %v2975, 0.0
      %v3008 = vmax.f32 %v2976, 0.0
      %v3009 = vmax.f32 %v2977, 0.0
      %v3010 = vmax.f32 %v2978, 0.0
      %v3011 = vmax.f32 %v2979, 0.0
      %v3012 = vmax.f32 %v2980, 0.0
      %v3013 = vpack.c.bf16 %v2982, %v2981
      %v3014 = vpack.c.bf16 %v2984, %v2983
      %v3015 = vpack.c.bf16 %v2986, %v2985
      %v3016 = vpack.c.bf16 %v2988, %v2987
      %v3017 = vpack.c.bf16 %v2990, %v2989
      %v3018 = vpack.c.bf16 %v2992, %v2991
      %v3019 = vpack.c.bf16 %v2994, %v2993
      %v3020 = vpack.c.bf16 %v2996, %v2995
      %v3021 = vpack.c.bf16 %v2998, %v2997
      %v3022 = vpack.c.bf16 %v3000, %v2999
      %v3023 = vpack.c.bf16 %v3002, %v3001
      %v3024 = vpack.c.bf16 %v3004, %v3003
      %v3025 = vpack.c.bf16 %v3006, %v3005
      %v3026 = vpack.c.bf16 %v3008, %v3007
      %v3027 = vpack.c.bf16 %v3010, %v3009
      %v3028 = vpack.c.bf16 %v3012, %v3011
      %v3045 = vunpack.c.l.b16 %v3013
      %v3046 = vunpack.c.h.b16 %v3013
      %v3047 = vunpack.c.l.b16 %v3014
      %v3048 = vunpack.c.h.b16 %v3014
      %v3049 = vunpack.c.l.b16 %v3015
      %v3050 = vunpack.c.h.b16 %v3015
      %v3051 = vunpack.c.l.b16 %v3016
      %v3052 = vunpack.c.h.b16 %v3016
      %v3053 = vunpack.c.l.b16 %v3017
      %v3054 = vunpack.c.h.b16 %v3017
      %v3055 = vunpack.c.l.b16 %v3018
      %v3056 = vunpack.c.h.b16 %v3018
      %v3057 = vunpack.c.l.b16 %v3019
      %v3058 = vunpack.c.h.b16 %v3019
      %v3059 = vunpack.c.l.b16 %v3020
      %v3060 = vunpack.c.h.b16 %v3020
      %v3061 = vunpack.c.l.b16 %v3021
      %v3062 = vunpack.c.h.b16 %v3021
      %v3063 = vunpack.c.l.b16 %v3022
      %v3064 = vunpack.c.h.b16 %v3022
      %v3065 = vunpack.c.l.b16 %v3023
      %v3066 = vunpack.c.h.b16 %v3023
      %v3067 = vunpack.c.l.b16 %v3024
      %v3068 = vunpack.c.h.b16 %v3024
      %v3069 = vunpack.c.l.b16 %v3025
      %v3070 = vunpack.c.h.b16 %v3025
      %v3071 = vunpack.c.l.b16 %v3026
      %v3072 = vunpack.c.h.b16 %v3026
      %v3073 = vunpack.c.l.b16 %v3027
      %v3074 = vunpack.c.h.b16 %v3027
      %v3075 = vunpack.c.l.b16 %v3028
      %v3076 = vunpack.c.h.b16 %v3028
      %v3077 = vpack.c.b16 %v3045, %v3045
      %v3078 = vpack.c.b16 %v3046, %v3046
      %v3079 = vpack.c.b16 %v3047, %v3047
      %v3080 = vpack.c.b16 %v3048, %v3048
      %v3081 = vpack.c.b16 %v3049, %v3049
      %v3082 = vpack.c.b16 %v3050, %v3050
      %v3083 = vpack.c.b16 %v3051, %v3051
      %v3084 = vpack.c.b16 %v3052, %v3052
      %v3085 = vpack.c.b16 %v3053, %v3053
      %v3086 = vpack.c.b16 %v3054, %v3054
      %v3087 = vpack.c.b16 %v3055, %v3055
      %v3088 = vpack.c.b16 %v3056, %v3056
      %v3089 = vpack.c.b16 %v3057, %v3057
      %v3090 = vpack.c.b16 %v3058, %v3058
      %v3091 = vpack.c.b16 %v3059, %v3059
      %v3092 = vpack.c.b16 %v3060, %v3060
      %v3093 = vpack.c.b16 %v3061, %v3061
      %v3094 = vpack.c.b16 %v3062, %v3062
      %v3095 = vpack.c.b16 %v3063, %v3063
      %v3096 = vpack.c.b16 %v3064, %v3064
      %v3097 = vpack.c.b16 %v3065, %v3065
      %v3098 = vpack.c.b16 %v3066, %v3066
      %v3099 = vpack.c.b16 %v3067, %v3067
      %v3100 = vpack.c.b16 %v3068, %v3068
      %v3101 = vpack.c.b16 %v3069, %v3069
      %v3102 = vpack.c.b16 %v3070, %v3070
      %v3103 = vpack.c.b16 %v3071, %v3071
      %v3104 = vpack.c.b16 %v3072, %v3072
      %v3105 = vpack.c.b16 %v3073, %v3073
      %v3106 = vpack.c.b16 %v3074, %v3074
      %v3107 = vpack.c.b16 %v3075, %v3075
      %v3108 = vpack.c.b16 %v3076, %v3076
      %3141 = vst [vmem:[%s217] sm:$0xf] %v3077
      %3142 = vst [vmem:[%s217 + $0x4] sm:$0xf] %v3078
      %3143 = vst [vmem:[%s217 + $0x8] sm:$0xf] %v3079
      %3144 = vst [vmem:[%s217 + $0xc] sm:$0xf] %v3080
      %3145 = vst [vmem:[%s217 + $0x10] sm:$0xf] %v3081
      %3146 = vst [vmem:[%s217 + $0x14] sm:$0xf] %v3082
      %3147 = vst [vmem:[%s217 + $0x18] sm:$0xf] %v3083
      %3148 = vst [vmem:[%s217 + $0x1c] sm:$0xf] %v3084
      %3149 = vst [vmem:[%s217 + $0x20] sm:$0xf] %v3085
      %3150 = vst [vmem:[%s217 + $0x24] sm:$0xf] %v3086
      %3151 = vst [vmem:[%s217 + $0x28] sm:$0xf] %v3087
      %3152 = vst [vmem:[%s217 + $0x2c] sm:$0xf] %v3088
      %3153 = vst [vmem:[%s217 + $0x30] sm:$0xf] %v3089
      %3154 = vst [vmem:[%s217 + $0x34] sm:$0xf] %v3090
      %3155 = vst [vmem:[%s217 + $0x38] sm:$0xf] %v3091
      %3156 = vst [vmem:[%s217 + $0x3c] sm:$0xf] %v3092
      %3157 = vst [vmem:[%s217 + $0x40] sm:$0xf] %v3093
      %3158 = vst [vmem:[%s217 + $0x44] sm:$0xf] %v3094
      %3159 = vst [vmem:[%s217 + $0x48] sm:$0xf] %v3095
      %3160 = vst [vmem:[%s217 + $0x4c] sm:$0xf] %v3096
      %3161 = vst [vmem:[%s217 + $0x50] sm:$0xf] %v3097
      %3162 = vst [vmem:[%s217 + $0x54] sm:$0xf] %v3098
      %3163 = vst [vmem:[%s217 + $0x58] sm:$0xf] %v3099
      %3164 = vst [vmem:[%s217 + $0x5c] sm:$0xf] %v3100
      %3165 = vst [vmem:[%s217 + $0x60] sm:$0xf] %v3101
      %3166 = vst [vmem:[%s217 + $0x64] sm:$0xf] %v3102
      %3167 = vst [vmem:[%s217 + $0x68] sm:$0xf] %v3103
      %3168 = vst [vmem:[%s217 + $0x6c] sm:$0xf] %v3104
      %3169 = vst [vmem:[%s217 + $0x70] sm:$0xf] %v3105
      %3170 = vst [vmem:[%s217 + $0x74] sm:$0xf] %v3106
      %3171 = vst [vmem:[%s217 + $0x78] sm:$0xf] %v3107
      %3172 = vst [vmem:[%s217 + $0x7c] sm:$0xf] %v3108
      %p3173 = scmp.lt.s32.totalorder %s15, 1
      %s3174 = scalar_select %p3173, %s15, 1
      %s3175 = smul.addr %s3174, 32
      %s3176 = smul.addr %s3175, 4
      %s3177 = scalar_lea.vmem %s4, %s3176
      // Predicated region
      $region37: #{packed_basic_block_forward.5} parent=35 // pred_check
        %p3178 = pneg %p127
      $region38: #{packed_basic_block_forward.5} parent=35 // pred_check_branch
        %3180 = sbr.rel (%p3178) target = $region40
      $region39: #{packed_basic_block_forward.5} parent=35 // pred_region
        _
      $region40: #{packed_basic_block_forward.5} parent=35 // pred_fallthru
        _
    $region36: #{packed_basic_block_forward.5} parent=5 // pred_fallthru
      _
    %p3181 = scmp.le.s32.totalorder 2, %s10
    // Predicated region
    $region41: #{packed_basic_block_forward.5} parent=5 // pred_check
      %p3182 = pneg %p3181
    $region42: #{packed_basic_block_forward.5} parent=5 // pred_check_branch
      %3184 = sbr.rel (%p3182) target = $region44
    $region43: #{packed_basic_block_forward.5} parent=5 // pred_region
      %s3185 = ssub.s32 %s10, 2
      // Predicated region
      $region45: #{packed_basic_block_forward.5} parent=43 // pred_check
        %p3186 = pneg %p133
      $region46: #{packed_basic_block_forward.5} parent=43 // pred_check_branch
        %3188 = sbr.rel (%p3186) target = $region48
      $region47: #{packed_basic_block_forward.5} parent=43 // pred_region
        %p3189 = scmp.lt.s32.totalorder %s16, 1
        %s3190 = scalar_select %p3189, %s16, 1
        %s3191 = smul.addr %s3190, 32
        %s3192 = smul.addr %s3191, 4
        %s3193 = scalar_lea.vmem %s4, %s3192
      $region48: #{packed_basic_block_forward.5} parent=43 // pred_fallthru
        _
    $region44: #{packed_basic_block_forward.5} parent=5 // pred_fallthru
      _
  $region6: #{packed_basic_block_forward.5} parent=0 // loop_footer
    %s14 = sadd.s32 1, %s10
  $region7: #{packed_basic_block_forward.5} parent=0 // loop_footer_branch
    %9 = sbr.rel target = $region3
  $region8: #{packed_basic_block_forward.5} parent=0 // loop_exit
    _

</llo_original>
